<compile_context>
chip_gen: v6e
topology: v6e:2x2x1
jax: 0.10.0
libtpu: 0.0.40
codegen_flags: <defaults>
</compile_context>

<pallas_src>
import functools

import jax
import jax.numpy as jnp
from jax.experimental import pallas as pl
from jax.experimental.pallas import tpu as pltpu


# ----------------------------------------------------------------------------
# Fused kernel: conv_first + LeakyReLU + num_block residual blocks, all in VMEM.
# ----------------------------------------------------------------------------
def _fused_kernel(x_ref, w_ref, b_ref, out_ref, act_ref, tmp_ref, *,
                  H, W, C, num_block):
    # x_ref:   (1, H, W, C)       input image (channels zero-padded up to C)
    # w_ref:   (L, 9*C, C)        flattened conv weights, L = 1 + 2*num_block
    # b_ref:   (L, 1, C)          biases
    # out_ref: (1, H, W, C)       output image
    # act_ref/tmp_ref: (H+2, W+2, C) padded VMEM activation scratches

    # Zero the padded scratches once per image.  Only their (H, W) interiors
    # are ever written below, so the 1-pixel halo stays zero == SAME padding.
    act_ref[...] = jnp.zeros_like(act_ref)
    tmp_ref[...] = jnp.zeros_like(tmp_ref)

    # Place the input in the interior of the padded activation scratch.
    act_ref[pl.ds(1, H), pl.ds(1, W), :] = x_ref[0]

    def conv(src_ref, layer):
        # im2col: build the (H*W, 9*C) patch matrix once and do a single MXU
        # matmul per conv (K = 9*C), instead of 9 under-sized per-tap matmuls.
        a = src_ref[...]                                          # (H+2, W+2, C)
        rows = jnp.concatenate([a[:, dx:dx + W, :] for dx in range(3)],
                               axis=-1)                           # (H+2, W, 3C)
        pat = jnp.concatenate([rows[dy:dy + H] for dy in range(3)],
                              axis=-1)                            # (H, W, 9C)
        p = pat.reshape(H * W, 9 * C)
        r = jnp.dot(p, w_ref[layer], preferred_element_type=jnp.float32)
        return r + b_ref[layer]                                   # (H*W, C)

    # conv_first + LeakyReLU(negative_slope=0.1)
    r = conv(act_ref, 0)
    r = jnp.where(r >= 0, r, 0.1 * r)
    act_ref[pl.ds(1, H), pl.ds(1, W), :] = r.reshape(H, W, C)

    # num_block x ResidualBlockNoBN:  x = x + conv2(relu(conv1(x)))
    for blk in range(num_block):
        r1 = jnp.maximum(conv(act_ref, 1 + 2 * blk), 0.0)         # conv1 + ReLU
        tmp_ref[pl.ds(1, H), pl.ds(1, W), :] = r1.reshape(H, W, C)
        r2 = conv(tmp_ref, 2 + 2 * blk)                           # conv2
        ident = act_ref[pl.ds(1, H), pl.ds(1, W), :].reshape(H * W, C)
        act_ref[pl.ds(1, H), pl.ds(1, W), :] = (ident + r2).reshape(H, W, C)

    # Single HBM store per image.
    out_ref[0] = act_ref[pl.ds(1, H), pl.ds(1, W), :].astype(out_ref.dtype)


# ----------------------------------------------------------------------------
# Wrapper: NCHW in / NCHW out, like the PyTorch module.
# ----------------------------------------------------------------------------
def _stack_params(params, C):
    """Flatten all conv weights to (L, 9*C, C) and biases to (L, 1, C)."""
    w0, b0 = params["conv_first"]                 # (3, 3, Cin, C), (C,)
    Cin = w0.shape[2]
    assert Cin <= C, "num_in_ch must be <= num_out_ch for the fused kernel"
    w0p = jnp.zeros((3, 3, C, C), w0.dtype).at[:, :, :Cin, :].set(w0)
    ws, bs = [w0p], [b0]
    for (w1, b1, w2, b2) in params["blocks"]:
        ws += [w1, w2]
        bs += [b1, b2]
    w_stack = jnp.stack([w.reshape(9 * C, C) for w in ws])        # (L, 9C, C)
    b_stack = jnp.stack(bs).astype(jnp.float32)[:, None, :]       # (L, 1, C)
    return w_stack, b_stack


@jax.jit
def conv_residual_blocks(fea_nchw, params):
    N, Cin, H, W = fea_nchw.shape
    C = params["conv_first"][0].shape[-1]
    num_block = len(params["blocks"])
    L = 1 + 2 * num_block

    w_stack, b_stack = _stack_params(params, C)

    # NCHW -> NHWC (channels on the lane axis); zero-pad input channels to C
    # so the first conv uses the same uniform (9*C, C) weight layout.
    x = jnp.transpose(fea_nchw, (0, 2, 3, 1))
    if Cin < C:
        x = jnp.pad(x, ((0, 0), (0, 0), (0, 0), (0, C - Cin)))

    kernel = functools.partial(_fused_kernel, H=H, W=W, C=C,
                               num_block=num_block)
    out_nhwc = pl.pallas_call(
        kernel,
        out_shape=jax.ShapeDtypeStruct((N, H, W, C), fea_nchw.dtype),
        grid_spec=pltpu.PrefetchScalarGridSpec(
            num_scalar_prefetch=0,
            grid=(N,),
            in_specs=[
                pl.BlockSpec((1, H, W, C), lambda n: (n, 0, 0, 0)),
                pl.BlockSpec((L, 9 * C, C), lambda n: (0, 0, 0)),
                pl.BlockSpec((L, 1, C), lambda n: (0, 0, 0)),
            ],
            out_specs=pl.BlockSpec((1, H, W, C), lambda n: (n, 0, 0, 0)),
            scratch_shapes=[
                pltpu.VMEM((H + 2, W + 2, C), jnp.float32),   # activation
                pltpu.VMEM((H + 2, W + 2, C), jnp.float32),   # conv1 output
            ],
        ),
        compiler_params=pltpu.CompilerParams(
            dimension_semantics=("parallel",),
            vmem_limit_bytes=32 * 1024 * 1024,
        ),
    )(x, w_stack, b_stack)

    return jnp.transpose(out_nhwc, (0, 3, 1, 2))                  # NHWC -> NCHW


# ----------------------------------------------------------------------------
# Deterministic synthetic parameters (shapes match the PyTorch module; weights
# stored HWIO = (3, 3, Cin, Cout)).
# ----------------------------------------------------------------------------
def init_params(key, num_in_ch, num_out_ch, num_block):
    def conv_param(k, cin, cout, scale):
        kw, kb = jax.random.split(k)
        w = scale * jax.random.normal(kw, (3, 3, cin, cout), jnp.float32)
        b = scale * jax.random.normal(kb, (cout,), jnp.float32)
        return w, b

    keys = jax.random.split(key, 1 + 2 * num_block)
    params = {"conv_first": conv_param(keys[0], num_in_ch, num_out_ch, 0.1),
              "blocks": []}
    for i in range(num_block):
        w1, b1 = conv_param(keys[1 + 2 * i], num_out_ch, num_out_ch, 0.1)
        w2, b2 = conv_param(keys[2 + 2 * i], num_out_ch, num_out_ch, 0.1)
        params["blocks"].append((w1, b1, w2, b2))
    return params


# ----------------------------------------------------------------------------
# Pure-JAX reference (lax.conv) used to validate the Pallas path.
# ----------------------------------------------------------------------------
def _ref_conv(x_nhwc, w_hwio, b):
    y = jax.lax.conv_general_dilated(
        x_nhwc, w_hwio, (1, 1), "SAME",
        dimension_numbers=("NHWC", "HWIO", "NHWC"))
    return y + b[None, None, None, :]


def reference_forward(fea_nchw, params):
    x = jnp.transpose(fea_nchw, (0, 2, 3, 1))
    w0, b0 = params["conv_first"]
    x = _ref_conv(x, w0, b0)
    x = jnp.where(x >= 0, x, 0.1 * x)
    for (w1, b1, w2, b2) in params["blocks"]:
        y = jnp.maximum(_ref_conv(x, w1, b1), 0.0)
        x = x + _ref_conv(y, w2, b2)
    return jnp.transpose(x, (0, 3, 1, 2))


if __name__ == "__main__":
    # Small shapes consistent with the module: batch=2, Cin=3, Cout=16,
    # 16x16 spatial, 2 residual blocks.
    N, Cin, Cout, H, W, NUM_BLOCK = 2, 3, 16, 16, 16, 2

    key = jax.random.PRNGKey(0)
    k_in, k_par = jax.random.split(key)
    fea = jax.random.normal(k_in, (N, Cin, H, W), jnp.float32)   # NCHW input
    params = init_params(k_par, Cin, Cout, NUM_BLOCK)

    out = jax.block_until_ready(conv_residual_blocks(fea, params))
    ref = jax.block_until_ready(reference_forward(fea, params))

    assert out.shape == (N, Cout, H, W), out.shape
    max_err = float(jnp.max(jnp.abs(out - ref)))
    assert jnp.allclose(out, ref, atol=1e-3, rtol=1e-3), max_err
    print("KERNEL_OK")
</pallas_src>

<mosaic_0001>
module attributes {stable_mosaic.version = 11 : i64} {
  func.func @_fused_kernel(%arg0: i32, %arg1: memref<1x16x16x16xf32, #tpu.memory_space<vmem>>, %arg2: memref<5x144x16xf32, #tpu.memory_space<vmem>>, %arg3: memref<5x1x16xf32, #tpu.memory_space<vmem>>, %arg4: memref<1x16x16x16xf32, #tpu.memory_space<vmem>>, %arg5: memref<18x18x16xf32, #tpu.memory_space<vmem>>, %arg6: memref<18x18x16xf32, #tpu.memory_space<vmem>>) attributes {dimension_semantics = [#tpu.dimension_semantics<parallel>], iteration_bounds = array<i64: 2>, scalar_prefetch = 0 : i64, scratch_operands = 2 : i64, tpu.core_type = #tpu.core_type<tc>, window_params = [{transform_indices = @transform_0, window_bounds = array<i64: 1, 16, 16, 16>}, {pipeline_mode = #tpu.pipeline_mode<synchronous>, transform_indices = @transform_1, window_bounds = array<i64: 5, 144, 16>}, {pipeline_mode = #tpu.pipeline_mode<synchronous>, transform_indices = @transform_2, window_bounds = array<i64: 5, 1, 16>}, {transform_indices = @transform_3, window_bounds = array<i64: 1, 16, 16, 16>}]} {
    %cst = arith.constant 0.000000e+00 : f32
    %0 = vector.broadcast %cst : f32 to vector<18x18x16xf32>
    %c0 = arith.constant 0 : index
    %c0_0 = arith.constant 0 : index
    %c0_1 = arith.constant 0 : index
    %1 = vector.load %arg5[%c0, %c0_0, %c0_1] : memref<18x18x16xf32, #tpu.memory_space<vmem>>, vector<18x18x16xf32>
    tpu.vector_store %arg5[%c0, %c0_0, %c0_1], %0 {strides = array<i32>} : memref<18x18x16xf32, #tpu.memory_space<vmem>>, vector<18x18x16xf32>,
    %cst_2 = arith.constant 0.000000e+00 : f32
    %2 = vector.broadcast %cst_2 : f32 to vector<18x18x16xf32>
    %c0_3 = arith.constant 0 : index
    %c0_4 = arith.constant 0 : index
    %c0_5 = arith.constant 0 : index
    %3 = vector.load %arg6[%c0_3, %c0_4, %c0_5] : memref<18x18x16xf32, #tpu.memory_space<vmem>>, vector<18x18x16xf32>
    tpu.vector_store %arg6[%c0_3, %c0_4, %c0_5], %2 {strides = array<i32>} : memref<18x18x16xf32, #tpu.memory_space<vmem>>, vector<18x18x16xf32>,
    %c0_6 = arith.constant 0 : index
    %c0_7 = arith.constant 0 : index
    %c0_8 = arith.constant 0 : index
    %c0_9 = arith.constant 0 : index
    %4 = vector.load %arg1[%c0_6, %c0_7, %c0_8, %c0_9] : memref<1x16x16x16xf32, #tpu.memory_space<vmem>>, vector<1x16x16x16xf32>
    %5 = vector.shape_cast %4 : vector<1x16x16x16xf32> to vector<16x16x16xf32>
    %c1 = arith.constant 1 : index
    %c1_10 = arith.constant 1 : index
    %c0_11 = arith.constant 0 : index
    %6 = vector.load %arg5[%c1, %c1_10, %c0_11] : memref<18x18x16xf32, #tpu.memory_space<vmem>>, vector<16x16x16xf32>
    tpu.vector_store %arg5[%c1, %c1_10, %c0_11], %5 {strides = array<i32>} : memref<18x18x16xf32, #tpu.memory_space<vmem>>, vector<16x16x16xf32>,
    %c0_12 = arith.constant 0 : index
    %c0_13 = arith.constant 0 : index
    %c0_14 = arith.constant 0 : index
    %7 = vector.load %arg5[%c0_12, %c0_13, %c0_14] : memref<18x18x16xf32, #tpu.memory_space<vmem>>, vector<18x18x16xf32>
    %8 = vector.extract_strided_slice %7 {offsets = [0, 0, 0], sizes = [18, 16, 16], strides = [1, 1, 1]} : vector<18x18x16xf32> to vector<18x16x16xf32>
    %9 = vector.extract_strided_slice %7 {offsets = [0, 1, 0], sizes = [18, 16, 16], strides = [1, 1, 1]} : vector<18x18x16xf32> to vector<18x16x16xf32>
    %10 = vector.extract_strided_slice %7 {offsets = [0, 2, 0], sizes = [18, 16, 16], strides = [1, 1, 1]} : vector<18x18x16xf32> to vector<18x16x16xf32>
    %11 = tpu.concatenate %8, %9, %10 in 2 : vector<18x16x16xf32>, vector<18x16x16xf32>, vector<18x16x16xf32> -> vector<18x16x48xf32>
    %12 = vector.extract_strided_slice %11 {offsets = [0, 0, 0], sizes = [16, 16, 48], strides = [1, 1, 1]} : vector<18x16x48xf32> to vector<16x16x48xf32>
    %13 = vector.extract_strided_slice %11 {offsets = [1, 0, 0], sizes = [16, 16, 48], strides = [1, 1, 1]} : vector<18x16x48xf32> to vector<16x16x48xf32>
    %14 = vector.extract_strided_slice %11 {offsets = [2, 0, 0], sizes = [16, 16, 48], strides = [1, 1, 1]} : vector<18x16x48xf32> to vector<16x16x48xf32>
    %15 = tpu.concatenate %12, %13, %14 in 2 : vector<16x16x48xf32>, vector<16x16x48xf32>, vector<16x16x48xf32> -> vector<16x16x144xf32>
    %16 = vector.shape_cast %15 : vector<16x16x144xf32> to vector<256x144xf32>
    %c0_15 = arith.constant 0 : index
    %c0_16 = arith.constant 0 : index
    %c0_17 = arith.constant 0 : index
    %17 = vector.load %arg2[%c0_15, %c0_16, %c0_17] : memref<5x144x16xf32, #tpu.memory_space<vmem>>, vector<1x144x16xf32>
    %18 = vector.shape_cast %17 : vector<1x144x16xf32> to vector<144x16xf32>
    %cst_18 = arith.constant dense<0.000000e+00> : vector<256x16xf32>
    %19 = tpu.matmul %16, %18, %cst_18 {dimension_numbers = #tpu.dot_dimension_numbers<[1], [0], [0], [1], [0, 0, 1, 1], [], []>} : vector<256x144xf32>, vector<144x16xf32>, vector<256x16xf32> -> vector<256x16xf32>
    %c0_19 = arith.constant 0 : index
    %c0_20 = arith.constant 0 : index
    %c0_21 = arith.constant 0 : index
    %20 = vector.load %arg3[%c0_19, %c0_20, %c0_21] : memref<5x1x16xf32, #tpu.memory_space<vmem>>, vector<1x1x16xf32>
    %21 = vector.shape_cast %20 : vector<1x1x16xf32> to vector<1x16xf32>
    %22 = vector.broadcast %21 : vector<1x16xf32> to vector<256x16xf32>
    %23 = arith.addf %19, %22 : vector<256x16xf32>
    %cst_22 = arith.constant 0.000000e+00 : f32
    %24 = vector.broadcast %cst_22 : f32 to vector<256x16xf32>
    %25 = arith.cmpf oge, %23, %24 : vector<256x16xf32>
    %cst_23 = arith.constant 1.000000e-01 : f32
    %26 = vector.broadcast %cst_23 : f32 to vector<256x16xf32>
    %27 = arith.mulf %26, %23 : vector<256x16xf32>
    %28 = arith.select %25, %23, %27 : vector<256x16xi1>, vector<256x16xf32>
    %29 = vector.shape_cast %28 : vector<256x16xf32> to vector<16x16x16xf32>
    %c1_24 = arith.constant 1 : index
    %c1_25 = arith.constant 1 : index
    %c0_26 = arith.constant 0 : index
    %30 = vector.load %arg5[%c1_24, %c1_25, %c0_26] : memref<18x18x16xf32, #tpu.memory_space<vmem>>, vector<16x16x16xf32>
    tpu.vector_store %arg5[%c1_24, %c1_25, %c0_26], %29 {strides = array<i32>} : memref<18x18x16xf32, #tpu.memory_space<vmem>>, vector<16x16x16xf32>,
    %c0_27 = arith.constant 0 : index
    %c0_28 = arith.constant 0 : index
    %c0_29 = arith.constant 0 : index
    %31 = vector.load %arg5[%c0_27, %c0_28, %c0_29] : memref<18x18x16xf32, #tpu.memory_space<vmem>>, vector<18x18x16xf32>
    %32 = vector.extract_strided_slice %31 {offsets = [0, 0, 0], sizes = [18, 16, 16], strides = [1, 1, 1]} : vector<18x18x16xf32> to vector<18x16x16xf32>
    %33 = vector.extract_strided_slice %31 {offsets = [0, 1, 0], sizes = [18, 16, 16], strides = [1, 1, 1]} : vector<18x18x16xf32> to vector<18x16x16xf32>
    %34 = vector.extract_strided_slice %31 {offsets = [0, 2, 0], sizes = [18, 16, 16], strides = [1, 1, 1]} : vector<18x18x16xf32> to vector<18x16x16xf32>
    %35 = tpu.concatenate %32, %33, %34 in 2 : vector<18x16x16xf32>, vector<18x16x16xf32>, vector<18x16x16xf32> -> vector<18x16x48xf32>
    %36 = vector.extract_strided_slice %35 {offsets = [0, 0, 0], sizes = [16, 16, 48], strides = [1, 1, 1]} : vector<18x16x48xf32> to vector<16x16x48xf32>
    %37 = vector.extract_strided_slice %35 {offsets = [1, 0, 0], sizes = [16, 16, 48], strides = [1, 1, 1]} : vector<18x16x48xf32> to vector<16x16x48xf32>
    %38 = vector.extract_strided_slice %35 {offsets = [2, 0, 0], sizes = [16, 16, 48], strides = [1, 1, 1]} : vector<18x16x48xf32> to vector<16x16x48xf32>
    %39 = tpu.concatenate %36, %37, %38 in 2 : vector<16x16x48xf32>, vector<16x16x48xf32>, vector<16x16x48xf32> -> vector<16x16x144xf32>
    %40 = vector.shape_cast %39 : vector<16x16x144xf32> to vector<256x144xf32>
    %c1_30 = arith.constant 1 : index
    %c0_31 = arith.constant 0 : index
    %c0_32 = arith.constant 0 : index
    %41 = vector.load %arg2[%c1_30, %c0_31, %c0_32] : memref<5x144x16xf32, #tpu.memory_space<vmem>>, vector<1x144x16xf32>
    %42 = vector.shape_cast %41 : vector<1x144x16xf32> to vector<144x16xf32>
    %cst_33 = arith.constant dense<0.000000e+00> : vector<256x16xf32>
    %43 = tpu.matmul %40, %42, %cst_33 {dimension_numbers = #tpu.dot_dimension_numbers<[1], [0], [0], [1], [0, 0, 1, 1], [], []>} : vector<256x144xf32>, vector<144x16xf32>, vector<256x16xf32> -> vector<256x16xf32>
    %c1_34 = arith.constant 1 : index
    %c0_35 = arith.constant 0 : index
    %c0_36 = arith.constant 0 : index
    %44 = vector.load %arg3[%c1_34, %c0_35, %c0_36] : memref<5x1x16xf32, #tpu.memory_space<vmem>>, vector<1x1x16xf32>
    %45 = vector.shape_cast %44 : vector<1x1x16xf32> to vector<1x16xf32>
    %46 = vector.broadcast %45 : vector<1x16xf32> to vector<256x16xf32>
    %47 = arith.addf %43, %46 : vector<256x16xf32>
    %cst_37 = arith.constant 0.000000e+00 : f32
    %48 = vector.broadcast %cst_37 : f32 to vector<256x16xf32>
    %49 = arith.maximumf %47, %48 : vector<256x16xf32>
    %50 = vector.shape_cast %49 : vector<256x16xf32> to vector<16x16x16xf32>
    %c1_38 = arith.constant 1 : index
    %c1_39 = arith.constant 1 : index
    %c0_40 = arith.constant 0 : index
    %51 = vector.load %arg6[%c1_38, %c1_39, %c0_40] : memref<18x18x16xf32, #tpu.memory_space<vmem>>, vector<16x16x16xf32>
    tpu.vector_store %arg6[%c1_38, %c1_39, %c0_40], %50 {strides = array<i32>} : memref<18x18x16xf32, #tpu.memory_space<vmem>>, vector<16x16x16xf32>,
    %c0_41 = arith.constant 0 : index
    %c0_42 = arith.constant 0 : index
    %c0_43 = arith.constant 0 : index
    %52 = vector.load %arg6[%c0_41, %c0_42, %c0_43] : memref<18x18x16xf32, #tpu.memory_space<vmem>>, vector<18x18x16xf32>
    %53 = vector.extract_strided_slice %52 {offsets = [0, 0, 0], sizes = [18, 16, 16], strides = [1, 1, 1]} : vector<18x18x16xf32> to vector<18x16x16xf32>
    %54 = vector.extract_strided_slice %52 {offsets = [0, 1, 0], sizes = [18, 16, 16], strides = [1, 1, 1]} : vector<18x18x16xf32> to vector<18x16x16xf32>
    %55 = vector.extract_strided_slice %52 {offsets = [0, 2, 0], sizes = [18, 16, 16], strides = [1, 1, 1]} : vector<18x18x16xf32> to vector<18x16x16xf32>
    %56 = tpu.concatenate %53, %54, %55 in 2 : vector<18x16x16xf32>, vector<18x16x16xf32>, vector<18x16x16xf32> -> vector<18x16x48xf32>
    %57 = vector.extract_strided_slice %56 {offsets = [0, 0, 0], sizes = [16, 16, 48], strides = [1, 1, 1]} : vector<18x16x48xf32> to vector<16x16x48xf32>
    %58 = vector.extract_strided_slice %56 {offsets = [1, 0, 0], sizes = [16, 16, 48], strides = [1, 1, 1]} : vector<18x16x48xf32> to vector<16x16x48xf32>
    %59 = vector.extract_strided_slice %56 {offsets = [2, 0, 0], sizes = [16, 16, 48], strides = [1, 1, 1]} : vector<18x16x48xf32> to vector<16x16x48xf32>
    %60 = tpu.concatenate %57, %58, %59 in 2 : vector<16x16x48xf32>, vector<16x16x48xf32>, vector<16x16x48xf32> -> vector<16x16x144xf32>
    %61 = vector.shape_cast %60 : vector<16x16x144xf32> to vector<256x144xf32>
    %c2 = arith.constant 2 : index
    %c0_44 = arith.constant 0 : index
    %c0_45 = arith.constant 0 : index
    %62 = vector.load %arg2[%c2, %c0_44, %c0_45] : memref<5x144x16xf32, #tpu.memory_space<vmem>>, vector<1x144x16xf32>
    %63 = vector.shape_cast %62 : vector<1x144x16xf32> to vector<144x16xf32>
    %cst_46 = arith.constant dense<0.000000e+00> : vector<256x16xf32>
    %64 = tpu.matmul %61, %63, %cst_46 {dimension_numbers = #tpu.dot_dimension_numbers<[1], [0], [0], [1], [0, 0, 1, 1], [], []>} : vector<256x144xf32>, vector<144x16xf32>, vector<256x16xf32> -> vector<256x16xf32>
    %c2_47 = arith.constant 2 : index
    %c0_48 = arith.constant 0 : index
    %c0_49 = arith.constant 0 : index
    %65 = vector.load %arg3[%c2_47, %c0_48, %c0_49] : memref<5x1x16xf32, #tpu.memory_space<vmem>>, vector<1x1x16xf32>
    %66 = vector.shape_cast %65 : vector<1x1x16xf32> to vector<1x16xf32>
    %67 = vector.broadcast %66 : vector<1x16xf32> to vector<256x16xf32>
    %68 = arith.addf %64, %67 : vector<256x16xf32>
    %c1_50 = arith.constant 1 : index
    %c1_51 = arith.constant 1 : index
    %c0_52 = arith.constant 0 : index
    %69 = vector.load %arg5[%c1_50, %c1_51, %c0_52] : memref<18x18x16xf32, #tpu.memory_space<vmem>>, vector<16x16x16xf32>
    %70 = vector.shape_cast %69 : vector<16x16x16xf32> to vector<256x16xf32>
    %71 = arith.addf %70, %68 : vector<256x16xf32>
    %72 = vector.shape_cast %71 : vector<256x16xf32> to vector<16x16x16xf32>
    %c1_53 = arith.constant 1 : index
    %c1_54 = arith.constant 1 : index
    %c0_55 = arith.constant 0 : index
    %73 = vector.load %arg5[%c1_53, %c1_54, %c0_55] : memref<18x18x16xf32, #tpu.memory_space<vmem>>, vector<16x16x16xf32>
    tpu.vector_store %arg5[%c1_53, %c1_54, %c0_55], %72 {strides = array<i32>} : memref<18x18x16xf32, #tpu.memory_space<vmem>>, vector<16x16x16xf32>,
    %c0_56 = arith.constant 0 : index
    %c0_57 = arith.constant 0 : index
    %c0_58 = arith.constant 0 : index
    %74 = vector.load %arg5[%c0_56, %c0_57, %c0_58] : memref<18x18x16xf32, #tpu.memory_space<vmem>>, vector<18x18x16xf32>
    %75 = vector.extract_strided_slice %74 {offsets = [0, 0, 0], sizes = [18, 16, 16], strides = [1, 1, 1]} : vector<18x18x16xf32> to vector<18x16x16xf32>
    %76 = vector.extract_strided_slice %74 {offsets = [0, 1, 0], sizes = [18, 16, 16], strides = [1, 1, 1]} : vector<18x18x16xf32> to vector<18x16x16xf32>
    %77 = vector.extract_strided_slice %74 {offsets = [0, 2, 0], sizes = [18, 16, 16], strides = [1, 1, 1]} : vector<18x18x16xf32> to vector<18x16x16xf32>
    %78 = tpu.concatenate %75, %76, %77 in 2 : vector<18x16x16xf32>, vector<18x16x16xf32>, vector<18x16x16xf32> -> vector<18x16x48xf32>
    %79 = vector.extract_strided_slice %78 {offsets = [0, 0, 0], sizes = [16, 16, 48], strides = [1, 1, 1]} : vector<18x16x48xf32> to vector<16x16x48xf32>
    %80 = vector.extract_strided_slice %78 {offsets = [1, 0, 0], sizes = [16, 16, 48], strides = [1, 1, 1]} : vector<18x16x48xf32> to vector<16x16x48xf32>
    %81 = vector.extract_strided_slice %78 {offsets = [2, 0, 0], sizes = [16, 16, 48], strides = [1, 1, 1]} : vector<18x16x48xf32> to vector<16x16x48xf32>
    %82 = tpu.concatenate %79, %80, %81 in 2 : vector<16x16x48xf32>, vector<16x16x48xf32>, vector<16x16x48xf32> -> vector<16x16x144xf32>
    %83 = vector.shape_cast %82 : vector<16x16x144xf32> to vector<256x144xf32>
    %c3 = arith.constant 3 : index
    %c0_59 = arith.constant 0 : index
    %c0_60 = arith.constant 0 : index
    %84 = vector.load %arg2[%c3, %c0_59, %c0_60] : memref<5x144x16xf32, #tpu.memory_space<vmem>>, vector<1x144x16xf32>
    %85 = vector.shape_cast %84 : vector<1x144x16xf32> to vector<144x16xf32>
    %cst_61 = arith.constant dense<0.000000e+00> : vector<256x16xf32>
    %86 = tpu.matmul %83, %85, %cst_61 {dimension_numbers = #tpu.dot_dimension_numbers<[1], [0], [0], [1], [0, 0, 1, 1], [], []>} : vector<256x144xf32>, vector<144x16xf32>, vector<256x16xf32> -> vector<256x16xf32>
    %c3_62 = arith.constant 3 : index
    %c0_63 = arith.constant 0 : index
    %c0_64 = arith.constant 0 : index
    %87 = vector.load %arg3[%c3_62, %c0_63, %c0_64] : memref<5x1x16xf32, #tpu.memory_space<vmem>>, vector<1x1x16xf32>
    %88 = vector.shape_cast %87 : vector<1x1x16xf32> to vector<1x16xf32>
    %89 = vector.broadcast %88 : vector<1x16xf32> to vector<256x16xf32>
    %90 = arith.addf %86, %89 : vector<256x16xf32>
    %cst_65 = arith.constant 0.000000e+00 : f32
    %91 = vector.broadcast %cst_65 : f32 to vector<256x16xf32>
    %92 = arith.maximumf %90, %91 : vector<256x16xf32>
    %93 = vector.shape_cast %92 : vector<256x16xf32> to vector<16x16x16xf32>
    %c1_66 = arith.constant 1 : index
    %c1_67 = arith.constant 1 : index
    %c0_68 = arith.constant 0 : index
    %94 = vector.load %arg6[%c1_66, %c1_67, %c0_68] : memref<18x18x16xf32, #tpu.memory_space<vmem>>, vector<16x16x16xf32>
    tpu.vector_store %arg6[%c1_66, %c1_67, %c0_68], %93 {strides = array<i32>} : memref<18x18x16xf32, #tpu.memory_space<vmem>>, vector<16x16x16xf32>,
    %c0_69 = arith.constant 0 : index
    %c0_70 = arith.constant 0 : index
    %c0_71 = arith.constant 0 : index
    %95 = vector.load %arg6[%c0_69, %c0_70, %c0_71] : memref<18x18x16xf32, #tpu.memory_space<vmem>>, vector<18x18x16xf32>
    %96 = vector.extract_strided_slice %95 {offsets = [0, 0, 0], sizes = [18, 16, 16], strides = [1, 1, 1]} : vector<18x18x16xf32> to vector<18x16x16xf32>
    %97 = vector.extract_strided_slice %95 {offsets = [0, 1, 0], sizes = [18, 16, 16], strides = [1, 1, 1]} : vector<18x18x16xf32> to vector<18x16x16xf32>
    %98 = vector.extract_strided_slice %95 {offsets = [0, 2, 0], sizes = [18, 16, 16], strides = [1, 1, 1]} : vector<18x18x16xf32> to vector<18x16x16xf32>
    %99 = tpu.concatenate %96, %97, %98 in 2 : vector<18x16x16xf32>, vector<18x16x16xf32>, vector<18x16x16xf32> -> vector<18x16x48xf32>
    %100 = vector.extract_strided_slice %99 {offsets = [0, 0, 0], sizes = [16, 16, 48], strides = [1, 1, 1]} : vector<18x16x48xf32> to vector<16x16x48xf32>
    %101 = vector.extract_strided_slice %99 {offsets = [1, 0, 0], sizes = [16, 16, 48], strides = [1, 1, 1]} : vector<18x16x48xf32> to vector<16x16x48xf32>
    %102 = vector.extract_strided_slice %99 {offsets = [2, 0, 0], sizes = [16, 16, 48], strides = [1, 1, 1]} : vector<18x16x48xf32> to vector<16x16x48xf32>
    %103 = tpu.concatenate %100, %101, %102 in 2 : vector<16x16x48xf32>, vector<16x16x48xf32>, vector<16x16x48xf32> -> vector<16x16x144xf32>
    %104 = vector.shape_cast %103 : vector<16x16x144xf32> to vector<256x144xf32>
    %c4 = arith.constant 4 : index
    %c0_72 = arith.constant 0 : index
    %c0_73 = arith.constant 0 : index
    %105 = vector.load %arg2[%c4, %c0_72, %c0_73] : memref<5x144x16xf32, #tpu.memory_space<vmem>>, vector<1x144x16xf32>
    %106 = vector.shape_cast %105 : vector<1x144x16xf32> to vector<144x16xf32>
    %cst_74 = arith.constant dense<0.000000e+00> : vector<256x16xf32>
    %107 = tpu.matmul %104, %106, %cst_74 {dimension_numbers = #tpu.dot_dimension_numbers<[1], [0], [0], [1], [0, 0, 1, 1], [], []>} : vector<256x144xf32>, vector<144x16xf32>, vector<256x16xf32> -> vector<256x16xf32>
    %c4_75 = arith.constant 4 : index
    %c0_76 = arith.constant 0 : index
    %c0_77 = arith.constant 0 : index
    %108 = vector.load %arg3[%c4_75, %c0_76, %c0_77] : memref<5x1x16xf32, #tpu.memory_space<vmem>>, vector<1x1x16xf32>
    %109 = vector.shape_cast %108 : vector<1x1x16xf32> to vector<1x16xf32>
    %110 = vector.broadcast %109 : vector<1x16xf32> to vector<256x16xf32>
    %111 = arith.addf %107, %110 : vector<256x16xf32>
    %c1_78 = arith.constant 1 : index
    %c1_79 = arith.constant 1 : index
    %c0_80 = arith.constant 0 : index
    %112 = vector.load %arg5[%c1_78, %c1_79, %c0_80] : memref<18x18x16xf32, #tpu.memory_space<vmem>>, vector<16x16x16xf32>
    %113 = vector.shape_cast %112 : vector<16x16x16xf32> to vector<256x16xf32>
    %114 = arith.addf %113, %111 : vector<256x16xf32>
    %115 = vector.shape_cast %114 : vector<256x16xf32> to vector<16x16x16xf32>
    %c1_81 = arith.constant 1 : index
    %c1_82 = arith.constant 1 : index
    %c0_83 = arith.constant 0 : index
    %116 = vector.load %arg5[%c1_81, %c1_82, %c0_83] : memref<18x18x16xf32, #tpu.memory_space<vmem>>, vector<16x16x16xf32>
    tpu.vector_store %arg5[%c1_81, %c1_82, %c0_83], %115 {strides = array<i32>} : memref<18x18x16xf32, #tpu.memory_space<vmem>>, vector<16x16x16xf32>,
    %c1_84 = arith.constant 1 : index
    %c1_85 = arith.constant 1 : index
    %c0_86 = arith.constant 0 : index
    %117 = vector.load %arg5[%c1_84, %c1_85, %c0_86] : memref<18x18x16xf32, #tpu.memory_space<vmem>>, vector<16x16x16xf32>
    %c0_87 = arith.constant 0 : index
    %c0_88 = arith.constant 0 : index
    %c0_89 = arith.constant 0 : index
    %c0_90 = arith.constant 0 : index
    %118 = vector.load %arg4[%c0_87, %c0_88, %c0_89, %c0_90] : memref<1x16x16x16xf32, #tpu.memory_space<vmem>>, vector<1x16x16x16xf32>
    %119 = vector.shape_cast %118 : vector<1x16x16x16xf32> to vector<16x16x16xf32>
    %120 = vector.shape_cast %117 : vector<16x16x16xf32> to vector<1x16x16x16xf32>
    tpu.vector_store %arg4[%c0_87, %c0_88, %c0_89, %c0_90], %120 {strides = array<i32>} : memref<1x16x16x16xf32, #tpu.memory_space<vmem>>, vector<1x16x16x16xf32>,
    return
  }
  func.func @transform_0(%arg0: i32) -> (i32, i32, i32, i32) {
    %c0_i32 = arith.constant 0 : i32
    %c0_i32_0 = arith.constant 0 : i32
    %c0_i32_1 = arith.constant 0 : i32
    %c0_i32_2 = arith.constant 0 : i32
    return %arg0, %c0_i32, %c0_i32_0, %c0_i32_1 : i32, i32, i32, i32
  }
  func.func @transform_1(%arg0: i32) -> (i32, i32, i32) {
    %c0_i32 = arith.constant 0 : i32
    %c0_i32_0 = arith.constant 0 : i32
    %c0_i32_1 = arith.constant 0 : i32
    %c0_i32_2 = arith.constant 0 : i32
    return %c0_i32, %c0_i32_0, %c0_i32_1 : i32, i32, i32
  }
  func.func @transform_2(%arg0: i32) -> (i32, i32, i32) {
    %c0_i32 = arith.constant 0 : i32
    %c0_i32_0 = arith.constant 0 : i32
    %c0_i32_1 = arith.constant 0 : i32
    %c0_i32_2 = arith.constant 0 : i32
    return %c0_i32, %c0_i32_0, %c0_i32_1 : i32, i32, i32
  }
  func.func @transform_3(%arg0: i32) -> (i32, i32, i32, i32) {
    %c0_i32 = arith.constant 0 : i32
    %c0_i32_0 = arith.constant 0 : i32
    %c0_i32_1 = arith.constant 0 : i32
    %c0_i32_2 = arith.constant 0 : i32
    return %arg0, %c0_i32, %c0_i32_0, %c0_i32_1 : i32, i32, i32, i32
  }
}

</mosaic_0001>

<llo_original>
// kernel: conv_residual_blocks.1
$region0: #{conv_residual_blocks.1}
  #allocation0 [shape = 'u32[]', space=smem, size = 0x4, offset = 0x4, fixed_abs, tag = 'smem constant byte address 0x4 - core index']
  #allocation1 [shape = 'u32[144,128]{1,0:T(1,128)}', space=vmem, size = 0x12000, scoped, tag = 'internal scratch']
  #allocation2 [shape = 'f32[18,18,16]{2,1,0:T(8,128)}', space=vmem, size = 0x36000, scoped, tag = 'scratch operand']
  #allocation3 [shape = 'f32[18,18,16]{2,1,0:T(8,128)}', space=vmem, size = 0x36000, scoped, tag = 'scratch operand']
  %s0 = inlined_call_operand.vmem [shape: f32[2,16,16,16], index: 0, kind: input, shape index: {}]
  %s1 = inlined_call_operand.vmem [shape: f32[5,144,16], index: 1, kind: input, shape index: {}]
  %s2 = inlined_call_operand.vmem [shape: f32[5,1,16], index: 2, kind: input, shape index: {}]
  %s3 = inlined_call_operand.vmem [shape: f32[2,16,16,16], index: 3, kind: output, shape index: {}]
  %s4 = sld [smem:[#allocation0]]
  $region45: #{conv_residual_blocks.1} parent=0
    _
  %s6 = ssub.s32 1, %s4
  %s7 = scalar_select 0, %s6, %s4
  loop: start=0, step=1, limit=4
  $region2: #{conv_residual_blocks.1} parent=0 // loop_pre_header
    _
  $region3: #{conv_residual_blocks.1} parent=0 // loop_header
    %s9 = sphi 0, %s13
    %p10 = scmp.ge.s32.totalorder %s9, 4
    %s19 = sphi 0, %s21
    %s22 = sphi 0, %s19
    %s23 = sphi 0, %s22
    %s39 = sphi 0, %s23
    %s43 = sphi 0, %s43
    %s45 = sphi 0, %s43
    %s46 = sphi 0, %s45
    %s60 = sphi 0, %s46
    %s64 = sphi 0, %s64
    %s66 = sphi 0, %s64
    %s67 = sphi 0, %s66
    %s81 = sphi 0, %s67
    %s87 = sphi 0, %s89
    %s90 = sphi 0, %s87
    %s91 = sphi 0, %s90
    %s107 = sphi 0, %s91
  $region4: #{conv_residual_blocks.1} parent=0 // loop_header_branch
    %12 = sbr.rel (%p10) target = $region8
  $region5: #{conv_residual_blocks.1} parent=0 // loop_body
    %s14 = ssub.s32 %s9, 1
    %s15 = ssub.s32 %s9, 2
    %s16 = sadd.s32 %s9, 1
    %s17 = ssub.s32 %s9, %s16
    %p18 = scmp.eq.s32.totalorder %s17, 0
    %s20 = sadd.s32 %s19, 1
    %s21 = scalar_select %p18, %s19, %s20
    %p24 = pneg %p18
    %p25 = scmp.eq.s32.totalorder %s9, 1
    %p26 = por %p24, %p25
    %p27 = scmp.ne.s32.totalorder %s19, %s22
    %p28 = scmp.eq.s32.totalorder %s9, 0
    %p29 = por %p27, %p28
    %p30 = scmp.ne.s32.totalorder %s19, %s22
    %p31 = scmp.eq.s32.totalorder %s14, 1
    %p32 = por %p30, %p31
    %p33 = scmp.ne.s32.totalorder %s22, %s23
    %p34 = scmp.eq.s32.totalorder %s14, 0
    %p35 = por %p33, %p34
    %p36 = scmp.ne.s32.totalorder %s22, %s23
    %p37 = scmp.eq.s32.totalorder %s15, 1
    %p38 = por %p36, %p37
    %p40 = scmp.ne.s32.totalorder %s23, %s39
    %p41 = scmp.eq.s32.totalorder %s15, 0
    %p42 = por %p40, %p41
    %s44 = sadd.s32 %s43, 1
    %p47 = scmp.eq.s32.totalorder %s9, 1
    %p48 = scmp.ne.s32.totalorder %s43, %s45
    %p49 = scmp.eq.s32.totalorder %s9, 0
    %p50 = por %p48, %p49
    %p51 = scmp.ne.s32.totalorder %s43, %s45
    %p52 = scmp.eq.s32.totalorder %s14, 1
    %p53 = por %p51, %p52
    %p54 = scmp.ne.s32.totalorder %s45, %s46
    %p55 = scmp.eq.s32.totalorder %s14, 0
    %p56 = por %p54, %p55
    %p57 = scmp.ne.s32.totalorder %s45, %s46
    %p58 = scmp.eq.s32.totalorder %s15, 1
    %p59 = por %p57, %p58
    %p61 = scmp.ne.s32.totalorder %s46, %s60
    %p62 = scmp.eq.s32.totalorder %s15, 0
    %p63 = por %p61, %p62
    %s65 = sadd.s32 %s64, 1
    %p68 = scmp.eq.s32.totalorder %s9, 1
    %p69 = scmp.ne.s32.totalorder %s64, %s66
    %p70 = scmp.eq.s32.totalorder %s9, 0
    %p71 = por %p69, %p70
    %p72 = scmp.ne.s32.totalorder %s64, %s66
    %p73 = scmp.eq.s32.totalorder %s14, 1
    %p74 = por %p72, %p73
    %p75 = scmp.ne.s32.totalorder %s66, %s67
    %p76 = scmp.eq.s32.totalorder %s14, 0
    %p77 = por %p75, %p76
    %p78 = scmp.ne.s32.totalorder %s66, %s67
    %p79 = scmp.eq.s32.totalorder %s15, 1
    %p80 = por %p78, %p79
    %p82 = scmp.ne.s32.totalorder %s67, %s81
    %p83 = scmp.eq.s32.totalorder %s15, 0
    %p84 = por %p82, %p83
    %s85 = ssub.s32 %s9, %s16
    %p86 = scmp.eq.s32.totalorder %s85, 0
    %s88 = sadd.s32 %s87, 1
    %s89 = scalar_select %p86, %s87, %s88
    %p92 = pneg %p86
    %p93 = scmp.eq.s32.totalorder %s9, 1
    %p94 = por %p92, %p93
    %p95 = scmp.ne.s32.totalorder %s87, %s90
    %p96 = scmp.eq.s32.totalorder %s9, 0
    %p97 = por %p95, %p96
    %p98 = scmp.ne.s32.totalorder %s87, %s90
    %p99 = scmp.eq.s32.totalorder %s14, 1
    %p100 = por %p98, %p99
    %p101 = scmp.ne.s32.totalorder %s90, %s91
    %p102 = scmp.eq.s32.totalorder %s14, 0
    %p103 = por %p101, %p102
    %p104 = scmp.ne.s32.totalorder %s90, %s91
    %p105 = scmp.eq.s32.totalorder %s15, 1
    %p106 = por %p104, %p105
    %p108 = scmp.ne.s32.totalorder %s91, %s107
    %p109 = scmp.eq.s32.totalorder %s15, 0
    %p110 = por %p108, %p109
    %p111 = scmp.le.s32.totalorder 1, %s9
    %p112 = scmp.lt.s32.totalorder %s9, 3
    %p113 = pnand %p111, %p112
    %p114 = pneg %p113
    // Predicated region
    $region9: #{conv_residual_blocks.1} parent=5 // pred_check
      _
    $region10: #{conv_residual_blocks.1} parent=5 // pred_check_branch
      %116 = sbr.rel (%p113) target = $region12
    $region11: #{conv_residual_blocks.1} parent=5 // pred_region
      %s117 = ssub.s32 %s9, 1
      // Predicated region
      $region13: #{conv_residual_blocks.1} parent=11 // pred_check
        %p118 = pneg %p56
      $region14: #{conv_residual_blocks.1} parent=11 // pred_check_branch
        %120 = sbr.rel (%p118) target = $region16
      $region15: #{conv_residual_blocks.1} parent=11 // pred_region
        _
      $region16: #{conv_residual_blocks.1} parent=11 // pred_fallthru
        _
      // Predicated region
      $region17: #{conv_residual_blocks.1} parent=11 // pred_check
        %p121 = pneg %p77
      $region18: #{conv_residual_blocks.1} parent=11 // pred_check_branch
        %123 = sbr.rel (%p121) target = $region20
      $region19: #{conv_residual_blocks.1} parent=11 // pred_region
        _
      $region20: #{conv_residual_blocks.1} parent=11 // pred_fallthru
        _
    $region12: #{conv_residual_blocks.1} parent=5 // pred_fallthru
      _
    %p124 = scmp.lt.s32.totalorder %s9, 2
    // Predicated region
    $region21: #{conv_residual_blocks.1} parent=5 // pred_check
      %p125 = pneg %p124
    $region22: #{conv_residual_blocks.1} parent=5 // pred_check_branch
      %127 = sbr.rel (%p125) target = $region24
    $region23: #{conv_residual_blocks.1} parent=5 // pred_region
      // Predicated region
      $region25: #{conv_residual_blocks.1} parent=23 // pred_check
        %p128 = pneg %p29
      $region26: #{conv_residual_blocks.1} parent=23 // pred_check_branch
        %130 = sbr.rel (%p128) target = $region28
      $region27: #{conv_residual_blocks.1} parent=23 // pred_region
        %p131 = scmp.lt.s32.totalorder %s9, 1
        %s132 = scalar_select %p131, %s9, 1
        %s133 = smul.addr %s132, 32
        %s134 = smul.addr %s133, 8
        %s135 = scalar_lea.vmem %s0, %s134
      $region28: #{conv_residual_blocks.1} parent=23 // pred_fallthru
        _
    $region24: #{conv_residual_blocks.1} parent=5 // pred_fallthru
      _
    %p136 = scmp.le.s32.totalorder 1, %s9
    %p137 = scmp.lt.s32.totalorder %s9, 3
    %p138 = pnand %p136, %p137
    %p139 = pneg %p138
    // Predicated region
    $region29: #{conv_residual_blocks.1} parent=5 // pred_check
      _
    $region30: #{conv_residual_blocks.1} parent=5 // pred_check_branch
      %141 = sbr.rel (%p138) target = $region32
    $region31: #{conv_residual_blocks.1} parent=5 // pred_region
      %s142 = ssub.s32 %s9, 1
      %p143 = scmp.lt.s32.totalorder %s14, 1
      %s144 = scalar_select %p143, %s14, 1
      %s145 = smul.addr %s144, 32
      %s146 = smul.addr %s145, 8
      %s147 = scalar_lea.vmem %s0, %s146
      %p148 = pneg %p35
      %p149 = pneg %p32
      %p150 = pneg %p56
      %p151 = pneg %p53
      %p152 = pneg %p77
      %p153 = pneg %p74
      %p154 = pneg %p103
      %p155 = pneg %p100
      %p156 = scmp.lt.s32.totalorder %s14, 1
      %s157 = scalar_select %p156, %s14, 1
      %s158 = smul.addr %s157, 32
      %s159 = smul.addr %s158, 8
      %s160 = scalar_lea.vmem %s3, %s159
      %p161 = scmp.lt.s32.totalorder %s14, 1
      %s162 = scalar_select %p161, %s14, 1
      %s163 = smul.addr %s162, 32
      %s164 = smul.addr %s163, 8
      %s165 = scalar_lea.vmem %s0, %s164
      %p166 = scmp.lt.s32.totalorder %s14, 1
      %s167 = scalar_select %p166, %s14, 1
      %s168 = smul.addr %s167, 32
      %s169 = smul.addr %s168, 8
      %s170 = scalar_lea.vmem %s3, %s169
      %vm171 = vcmask 130048
      %172 = vst.msk [vmem:[#allocation2] sm:$0xff] %vm171, 0.0
      %173 = vst.msk [vmem:[#allocation2 + $0x8] sm:$0xff] %vm171, 0.0
      %vm174 = vcmask 123904
      %175 = vst.msk [vmem:[#allocation2 + $0x10] sm:$0x3] %vm174, 0.0
      %176 = vst.msk [vmem:[#allocation2 + $0x18] sm:$0xff] %vm171, 0.0
      %177 = vst.msk [vmem:[#allocation2 + $0x20] sm:$0xff] %vm171, 0.0
      %178 = vst.msk [vmem:[#allocation2 + $0x28] sm:$0x3] %vm174, 0.0
      %179 = vst.msk [vmem:[#allocation2 + $0x30] sm:$0xff] %vm171, 0.0
      %180 = vst.msk [vmem:[#allocation2 + $0x38] sm:$0xff] %vm171, 0.0
      %181 = vst.msk [vmem:[#allocation2 + $0x40] sm:$0x3] %vm174, 0.0
      %182 = vst.msk [vmem:[#allocation2 + $0x48] sm:$0xff] %vm171, 0.0
      %183 = vst.msk [vmem:[#allocation2 + $0x50] sm:$0xff] %vm171, 0.0
      %184 = vst.msk [vmem:[#allocation2 + $0x58] sm:$0x3] %vm174, 0.0
      %185 = vst.msk [vmem:[#allocation2 + $0x60] sm:$0xff] %vm171, 0.0
      %186 = vst.msk [vmem:[#allocation2 + $0x68] sm:$0xff] %vm171, 0.0
      %187 = vst.msk [vmem:[#allocation2 + $0x70] sm:$0x3] %vm174, 0.0
      %188 = vst.msk [vmem:[#allocation2 + $0x78] sm:$0xff] %vm171, 0.0
      %189 = vst.msk [vmem:[#allocation2 + $0x80] sm:$0xff] %vm171, 0.0
      %190 = vst.msk [vmem:[#allocation2 + $0x88] sm:$0x3] %vm174, 0.0
      %191 = vst.msk [vmem:[#allocation2 + $0x90] sm:$0xff] %vm171, 0.0
      %192 = vst.msk [vmem:[#allocation2 + $0x98] sm:$0xff] %vm171, 0.0
      %193 = vst.msk [vmem:[#allocation2 + $0xa0] sm:$0x3] %vm174, 0.0
      %194 = vst.msk [vmem:[#allocation2 + $0xa8] sm:$0xff] %vm171, 0.0
      %195 = vst.msk [vmem:[#allocation2 + $0xb0] sm:$0xff] %vm171, 0.0
      %196 = vst.msk [vmem:[#allocation2 + $0xb8] sm:$0x3] %vm174, 0.0
      %197 = vst.msk [vmem:[#allocation2 + $0xc0] sm:$0xff] %vm171, 0.0
      %198 = vst.msk [vmem:[#allocation2 + $0xc8] sm:$0xff] %vm171, 0.0
      %199 = vst.msk [vmem:[#allocation2 + $0xd0] sm:$0x3] %vm174, 0.0
      %200 = vst.msk [vmem:[#allocation2 + $0xd8] sm:$0xff] %vm171, 0.0
      %201 = vst.msk [vmem:[#allocation2 + $0xe0] sm:$0xff] %vm171, 0.0
      %202 = vst.msk [vmem:[#allocation2 + $0xe8] sm:$0x3] %vm174, 0.0
      %203 = vst.msk [vmem:[#allocation2 + $0xf0] sm:$0xff] %vm171, 0.0
      %204 = vst.msk [vmem:[#allocation2 + $0xf8] sm:$0xff] %vm171, 0.0
      %205 = vst.msk [vmem:[#allocation2 + $0x100] sm:$0x3] %vm174, 0.0
      %206 = vst.msk [vmem:[#allocation2 + $0x108] sm:$0xff] %vm171, 0.0
      %207 = vst.msk [vmem:[#allocation2 + $0x110] sm:$0xff] %vm171, 0.0
      %208 = vst.msk [vmem:[#allocation2 + $0x118] sm:$0x3] %vm174, 0.0
      %209 = vst.msk [vmem:[#allocation2 + $0x120] sm:$0xff] %vm171, 0.0
      %210 = vst.msk [vmem:[#allocation2 + $0x128] sm:$0xff] %vm171, 0.0
      %211 = vst.msk [vmem:[#allocation2 + $0x130] sm:$0x3] %vm174, 0.0
      %212 = vst.msk [vmem:[#allocation2 + $0x138] sm:$0xff] %vm171, 0.0
      %213 = vst.msk [vmem:[#allocation2 + $0x140] sm:$0xff] %vm171, 0.0
      %214 = vst.msk [vmem:[#allocation2 + $0x148] sm:$0x3] %vm174, 0.0
      %215 = vst.msk [vmem:[#allocation2 + $0x150] sm:$0xff] %vm171, 0.0
      %216 = vst.msk [vmem:[#allocation2 + $0x158] sm:$0xff] %vm171, 0.0
      %217 = vst.msk [vmem:[#allocation2 + $0x160] sm:$0x3] %vm174, 0.0
      %218 = vst.msk [vmem:[#allocation2 + $0x168] sm:$0xff] %vm171, 0.0
      %219 = vst.msk [vmem:[#allocation2 + $0x170] sm:$0xff] %vm171, 0.0
      %220 = vst.msk [vmem:[#allocation2 + $0x178] sm:$0x3] %vm174, 0.0
      %221 = vst.msk [vmem:[#allocation2 + $0x180] sm:$0xff] %vm171, 0.0
      %222 = vst.msk [vmem:[#allocation2 + $0x188] sm:$0xff] %vm171, 0.0
      %223 = vst.msk [vmem:[#allocation2 + $0x190] sm:$0x3] %vm174, 0.0
      %224 = vst.msk [vmem:[#allocation2 + $0x198] sm:$0xff] %vm171, 0.0
      %225 = vst.msk [vmem:[#allocation2 + $0x1a0] sm:$0xff] %vm171, 0.0
      %226 = vst.msk [vmem:[#allocation2 + $0x1a8] sm:$0x3] %vm174, 0.0
      %227 = vst.msk [vmem:[#allocation3] sm:$0xff] %vm171, 0.0
      %228 = vst.msk [vmem:[#allocation3 + $0x8] sm:$0xff] %vm171, 0.0
      %229 = vst.msk [vmem:[#allocation3 + $0x10] sm:$0x3] %vm174, 0.0
      %230 = vst.msk [vmem:[#allocation3 + $0x18] sm:$0xff] %vm171, 0.0
      %231 = vst.msk [vmem:[#allocation3 + $0x20] sm:$0xff] %vm171, 0.0
      %232 = vst.msk [vmem:[#allocation3 + $0x28] sm:$0x3] %vm174, 0.0
      %233 = vst.msk [vmem:[#allocation3 + $0x30] sm:$0xff] %vm171, 0.0
      %234 = vst.msk [vmem:[#allocation3 + $0x38] sm:$0xff] %vm171, 0.0
      %235 = vst.msk [vmem:[#allocation3 + $0x40] sm:$0x3] %vm174, 0.0
      %236 = vst.msk [vmem:[#allocation3 + $0x48] sm:$0xff] %vm171, 0.0
      %237 = vst.msk [vmem:[#allocation3 + $0x50] sm:$0xff] %vm171, 0.0
      %238 = vst.msk [vmem:[#allocation3 + $0x58] sm:$0x3] %vm174, 0.0
      %239 = vst.msk [vmem:[#allocation3 + $0x60] sm:$0xff] %vm171, 0.0
      %240 = vst.msk [vmem:[#allocation3 + $0x68] sm:$0xff] %vm171, 0.0
      %241 = vst.msk [vmem:[#allocation3 + $0x70] sm:$0x3] %vm174, 0.0
      %242 = vst.msk [vmem:[#allocation3 + $0x78] sm:$0xff] %vm171, 0.0
      %243 = vst.msk [vmem:[#allocation3 + $0x80] sm:$0xff] %vm171, 0.0
      %244 = vst.msk [vmem:[#allocation3 + $0x88] sm:$0x3] %vm174, 0.0
      %245 = vst.msk [vmem:[#allocation3 + $0x90] sm:$0xff] %vm171, 0.0
      %246 = vst.msk [vmem:[#allocation3 + $0x98] sm:$0xff] %vm171, 0.0
      %247 = vst.msk [vmem:[#allocation3 + $0xa0] sm:$0x3] %vm174, 0.0
      %248 = vst.msk [vmem:[#allocation3 + $0xa8] sm:$0xff] %vm171, 0.0
      %249 = vst.msk [vmem:[#allocation3 + $0xb0] sm:$0xff] %vm171, 0.0
      %250 = vst.msk [vmem:[#allocation3 + $0xb8] sm:$0x3] %vm174, 0.0
      %251 = vst.msk [vmem:[#allocation3 + $0xc0] sm:$0xff] %vm171, 0.0
      %252 = vst.msk [vmem:[#allocation3 + $0xc8] sm:$0xff] %vm171, 0.0
      %253 = vst.msk [vmem:[#allocation3 + $0xd0] sm:$0x3] %vm174, 0.0
      %254 = vst.msk [vmem:[#allocation3 + $0xd8] sm:$0xff] %vm171, 0.0
      %255 = vst.msk [vmem:[#allocation3 + $0xe0] sm:$0xff] %vm171, 0.0
      %256 = vst.msk [vmem:[#allocation3 + $0xe8] sm:$0x3] %vm174, 0.0
      %257 = vst.msk [vmem:[#allocation3 + $0xf0] sm:$0xff] %vm171, 0.0
      %258 = vst.msk [vmem:[#allocation3 + $0xf8] sm:$0xff] %vm171, 0.0
      %259 = vst.msk [vmem:[#allocation3 + $0x100] sm:$0x3] %vm174, 0.0
      %260 = vst.msk [vmem:[#allocation3 + $0x108] sm:$0xff] %vm171, 0.0
      %261 = vst.msk [vmem:[#allocation3 + $0x110] sm:$0xff] %vm171, 0.0
      %262 = vst.msk [vmem:[#allocation3 + $0x118] sm:$0x3] %vm174, 0.0
      %263 = vst.msk [vmem:[#allocation3 + $0x120] sm:$0xff] %vm171, 0.0
      %264 = vst.msk [vmem:[#allocation3 + $0x128] sm:$0xff] %vm171, 0.0
      %265 = vst.msk [vmem:[#allocation3 + $0x130] sm:$0x3] %vm174, 0.0
      %266 = vst.msk [vmem:[#allocation3 + $0x138] sm:$0xff] %vm171, 0.0
      %267 = vst.msk [vmem:[#allocation3 + $0x140] sm:$0xff] %vm171, 0.0
      %268 = vst.msk [vmem:[#allocation3 + $0x148] sm:$0x3] %vm174, 0.0
      %269 = vst.msk [vmem:[#allocation3 + $0x150] sm:$0xff] %vm171, 0.0
      %270 = vst.msk [vmem:[#allocation3 + $0x158] sm:$0xff] %vm171, 0.0
      %271 = vst.msk [vmem:[#allocation3 + $0x160] sm:$0x3] %vm174, 0.0
      %272 = vst.msk [vmem:[#allocation3 + $0x168] sm:$0xff] %vm171, 0.0
      %273 = vst.msk [vmem:[#allocation3 + $0x170] sm:$0xff] %vm171, 0.0
      %274 = vst.msk [vmem:[#allocation3 + $0x178] sm:$0x3] %vm174, 0.0
      %275 = vst.msk [vmem:[#allocation3 + $0x180] sm:$0xff] %vm171, 0.0
      %276 = vst.msk [vmem:[#allocation3 + $0x188] sm:$0xff] %vm171, 0.0
      %277 = vst.msk [vmem:[#allocation3 + $0x190] sm:$0x3] %vm174, 0.0
      %278 = vst.msk [vmem:[#allocation3 + $0x198] sm:$0xff] %vm171, 0.0
      %279 = vst.msk [vmem:[#allocation3 + $0x1a0] sm:$0xff] %vm171, 0.0
      %280 = vst.msk [vmem:[#allocation3 + $0x1a8] sm:$0x3] %vm174, 0.0
      %v281 = vld [vmem:[%s165] sm:$0xff]
      %v282 = vld [vmem:[%s165 + $0x8] sm:$0xff]
      %v283 = vld [vmem:[%s165 + $0x10] sm:$0xff]
      %v284 = vld [vmem:[%s165 + $0x18] sm:$0xff]
      %v285 = vld [vmem:[%s165 + $0x20] sm:$0xff]
      %v286 = vld [vmem:[%s165 + $0x28] sm:$0xff]
      %v287 = vld [vmem:[%s165 + $0x30] sm:$0xff]
      %v288 = vld [vmem:[%s165 + $0x38] sm:$0xff]
      %v289 = vld [vmem:[%s165 + $0x40] sm:$0xff]
      %v290 = vld [vmem:[%s165 + $0x48] sm:$0xff]
      %v291 = vld [vmem:[%s165 + $0x50] sm:$0xff]
      %v292 = vld [vmem:[%s165 + $0x58] sm:$0xff]
      %v293 = vld [vmem:[%s165 + $0x60] sm:$0xff]
      %v294 = vld [vmem:[%s165 + $0x68] sm:$0xff]
      %v295 = vld [vmem:[%s165 + $0x70] sm:$0xff]
      %v296 = vld [vmem:[%s165 + $0x78] sm:$0xff]
      %v297 = vld [vmem:[%s165 + $0x80] sm:$0xff]
      %v298 = vld [vmem:[%s165 + $0x88] sm:$0xff]
      %v299 = vld [vmem:[%s165 + $0x90] sm:$0xff]
      %v300 = vld [vmem:[%s165 + $0x98] sm:$0xff]
      %v301 = vld [vmem:[%s165 + $0xa0] sm:$0xff]
      %v302 = vld [vmem:[%s165 + $0xa8] sm:$0xff]
      %v303 = vld [vmem:[%s165 + $0xb0] sm:$0xff]
      %v304 = vld [vmem:[%s165 + $0xb8] sm:$0xff]
      %v305 = vld [vmem:[%s165 + $0xc0] sm:$0xff]
      %v306 = vld [vmem:[%s165 + $0xc8] sm:$0xff]
      %v307 = vld [vmem:[%s165 + $0xd0] sm:$0xff]
      %v308 = vld [vmem:[%s165 + $0xd8] sm:$0xff]
      %v309 = vld [vmem:[%s165 + $0xe0] sm:$0xff]
      %v310 = vld [vmem:[%s165 + $0xe8] sm:$0xff]
      %v311 = vld [vmem:[%s165 + $0xf0] sm:$0xff]
      %v312 = vld [vmem:[%s165 + $0xf8] sm:$0xff]
      %s313 = scalar_lea.vmem [#allocation2], 24
      %314 = vst.msk [vmem:[%s313 + $0x1] sm:$0xff] %vm171, %v281
      %315 = vst.msk [vmem:[%s313 + $0x9] sm:$0xff] %vm171, %v282
      %316 = vst.msk [vmem:[%s313 + $0x19] sm:$0xff] %vm171, %v283
      %317 = vst.msk [vmem:[%s313 + $0x21] sm:$0xff] %vm171, %v284
      %318 = vst.msk [vmem:[%s313 + $0x31] sm:$0xff] %vm171, %v285
      %319 = vst.msk [vmem:[%s313 + $0x39] sm:$0xff] %vm171, %v286
      %320 = vst.msk [vmem:[%s313 + $0x49] sm:$0xff] %vm171, %v287
      %321 = vst.msk [vmem:[%s313 + $0x51] sm:$0xff] %vm171, %v288
      %322 = vst.msk [vmem:[%s313 + $0x61] sm:$0xff] %vm171, %v289
      %323 = vst.msk [vmem:[%s313 + $0x69] sm:$0xff] %vm171, %v290
      %324 = vst.msk [vmem:[%s313 + $0x79] sm:$0xff] %vm171, %v291
      %325 = vst.msk [vmem:[%s313 + $0x81] sm:$0xff] %vm171, %v292
      %326 = vst.msk [vmem:[%s313 + $0x91] sm:$0xff] %vm171, %v293
      %327 = vst.msk [vmem:[%s313 + $0x99] sm:$0xff] %vm171, %v294
      %328 = vst.msk [vmem:[%s313 + $0xa9] sm:$0xff] %vm171, %v295
      %329 = vst.msk [vmem:[%s313 + $0xb1] sm:$0xff] %vm171, %v296
      %330 = vst.msk [vmem:[%s313 + $0xc1] sm:$0xff] %vm171, %v297
      %331 = vst.msk [vmem:[%s313 + $0xc9] sm:$0xff] %vm171, %v298
      %332 = vst.msk [vmem:[%s313 + $0xd9] sm:$0xff] %vm171, %v299
      %333 = vst.msk [vmem:[%s313 + $0xe1] sm:$0xff] %vm171, %v300
      %334 = vst.msk [vmem:[%s313 + $0xf1] sm:$0xff] %vm171, %v301
      %335 = vst.msk [vmem:[%s313 + $0xf9] sm:$0xff] %vm171, %v302
      %336 = vst.msk [vmem:[%s313 + $0x109] sm:$0xff] %vm171, %v303
      %337 = vst.msk [vmem:[%s313 + $0x111] sm:$0xff] %vm171, %v304
      %338 = vst.msk [vmem:[%s313 + $0x121] sm:$0xff] %vm171, %v305
      %339 = vst.msk [vmem:[%s313 + $0x129] sm:$0xff] %vm171, %v306
      %340 = vst.msk [vmem:[%s313 + $0x139] sm:$0xff] %vm171, %v307
      %341 = vst.msk [vmem:[%s313 + $0x141] sm:$0xff] %vm171, %v308
      %342 = vst.msk [vmem:[%s313 + $0x151] sm:$0xff] %vm171, %v309
      %343 = vst.msk [vmem:[%s313 + $0x159] sm:$0xff] %vm171, %v310
      %344 = vst.msk [vmem:[%s313 + $0x169] sm:$0xff] %vm171, %v311
      %345 = vst.msk [vmem:[%s313 + $0x171] sm:$0xff] %vm171, %v312
      %v346 = vld [vmem:[#allocation2] sm:$0xff]
      %v347 = vld [vmem:[#allocation2 + $0x8] sm:$0xff]
      %v348 = vld [vmem:[#allocation2 + $0x10] sm:$0x3]
      %v349 = vld [vmem:[#allocation2 + $0x18] sm:$0xff]
      %v350 = vld [vmem:[#allocation2 + $0x20] sm:$0xff]
      %v351 = vld [vmem:[#allocation2 + $0x28] sm:$0x3]
      %v352 = vld [vmem:[#allocation2 + $0x30] sm:$0xff]
      %v353 = vld [vmem:[#allocation2 + $0x38] sm:$0xff]
      %v354 = vld [vmem:[#allocation2 + $0x40] sm:$0x3]
      %v355 = vld [vmem:[#allocation2 + $0x48] sm:$0xff]
      %v356 = vld [vmem:[#allocation2 + $0x50] sm:$0xff]
      %v357 = vld [vmem:[#allocation2 + $0x58] sm:$0x3]
      %v358 = vld [vmem:[#allocation2 + $0x60] sm:$0xff]
      %v359 = vld [vmem:[#allocation2 + $0x68] sm:$0xff]
      %v360 = vld [vmem:[#allocation2 + $0x70] sm:$0x3]
      %v361 = vld [vmem:[#allocation2 + $0x78] sm:$0xff]
      %v362 = vld [vmem:[#allocation2 + $0x80] sm:$0xff]
      %v363 = vld [vmem:[#allocation2 + $0x88] sm:$0x3]
      %v364 = vld [vmem:[#allocation2 + $0x90] sm:$0xff]
      %v365 = vld [vmem:[#allocation2 + $0x98] sm:$0xff]
      %v366 = vld [vmem:[#allocation2 + $0xa0] sm:$0x3]
      %v367 = vld [vmem:[#allocation2 + $0xa8] sm:$0xff]
      %v368 = vld [vmem:[#allocation2 + $0xb0] sm:$0xff]
      %v369 = vld [vmem:[#allocation2 + $0xb8] sm:$0x3]
      %v370 = vld [vmem:[#allocation2 + $0xc0] sm:$0xff]
      %v371 = vld [vmem:[#allocation2 + $0xc8] sm:$0xff]
      %v372 = vld [vmem:[#allocation2 + $0xd0] sm:$0x3]
      %v373 = vld [vmem:[#allocation2 + $0xd8] sm:$0xff]
      %v374 = vld [vmem:[#allocation2 + $0xe0] sm:$0xff]
      %v375 = vld [vmem:[#allocation2 + $0xe8] sm:$0x3]
      %v376 = vld [vmem:[#allocation2 + $0xf0] sm:$0xff]
      %v377 = vld [vmem:[#allocation2 + $0xf8] sm:$0xff]
      %v378 = vld [vmem:[#allocation2 + $0x100] sm:$0x3]
      %v379 = vld [vmem:[#allocation2 + $0x108] sm:$0xff]
      %v380 = vld [vmem:[#allocation2 + $0x110] sm:$0xff]
      %v381 = vld [vmem:[#allocation2 + $0x118] sm:$0x3]
      %v382 = vld [vmem:[#allocation2 + $0x120] sm:$0xff]
      %v383 = vld [vmem:[#allocation2 + $0x128] sm:$0xff]
      %v384 = vld [vmem:[#allocation2 + $0x130] sm:$0x3]
      %v385 = vld [vmem:[#allocation2 + $0x138] sm:$0xff]
      %v386 = vld [vmem:[#allocation2 + $0x140] sm:$0xff]
      %v387 = vld [vmem:[#allocation2 + $0x148] sm:$0x3]
      %v388 = vld [vmem:[#allocation2 + $0x150] sm:$0xff]
      %v389 = vld [vmem:[#allocation2 + $0x158] sm:$0xff]
      %v390 = vld [vmem:[#allocation2 + $0x160] sm:$0x3]
      %v391 = vld [vmem:[#allocation2 + $0x168] sm:$0xff]
      %v392 = vld [vmem:[#allocation2 + $0x170] sm:$0xff]
      %v393 = vld [vmem:[#allocation2 + $0x178] sm:$0x3]
      %v394 = vld [vmem:[#allocation2 + $0x180] sm:$0xff]
      %v395 = vld [vmem:[#allocation2 + $0x188] sm:$0xff]
      %v396 = vld [vmem:[#allocation2 + $0x190] sm:$0x3]
      %v397 = vld [vmem:[#allocation2 + $0x198] sm:$0xff]
      %v398 = vld [vmem:[#allocation2 + $0x1a0] sm:$0xff]
      %v399 = vld [vmem:[#allocation2 + $0x1a8] sm:$0x3]
      %vm454 = vcmask 1046528
      %v455 = vrot.slane %v346, 1
      %v456 = vrot.slane %v347, 1
      %v457 = vsel %vm454, %v455, %v456
      %v458 = vrot.slane %v348, 1
      %v459 = vsel %vm454, %v456, %v458
      %v460 = vrot.slane %v349, 1
      %v461 = vrot.slane %v350, 1
      %v462 = vsel %vm454, %v460, %v461
      %v463 = vrot.slane %v351, 1
      %v464 = vsel %vm454, %v461, %v463
      %v465 = vrot.slane %v352, 1
      %v466 = vrot.slane %v353, 1
      %v467 = vsel %vm454, %v465, %v466
      %v468 = vrot.slane %v354, 1
      %v469 = vsel %vm454, %v466, %v468
      %v470 = vrot.slane %v355, 1
      %v471 = vrot.slane %v356, 1
      %v472 = vsel %vm454, %v470, %v471
      %v473 = vrot.slane %v357, 1
      %v474 = vsel %vm454, %v471, %v473
      %v475 = vrot.slane %v358, 1
      %v476 = vrot.slane %v359, 1
      %v477 = vsel %vm454, %v475, %v476
      %v478 = vrot.slane %v360, 1
      %v479 = vsel %vm454, %v476, %v478
      %v480 = vrot.slane %v361, 1
      %v481 = vrot.slane %v362, 1
      %v482 = vsel %vm454, %v480, %v481
      %v483 = vrot.slane %v363, 1
      %v484 = vsel %vm454, %v481, %v483
      %v485 = vrot.slane %v364, 1
      %v486 = vrot.slane %v365, 1
      %v487 = vsel %vm454, %v485, %v486
      %v488 = vrot.slane %v366, 1
      %v489 = vsel %vm454, %v486, %v488
      %v490 = vrot.slane %v367, 1
      %v491 = vrot.slane %v368, 1
      %v492 = vsel %vm454, %v490, %v491
      %v493 = vrot.slane %v369, 1
      %v494 = vsel %vm454, %v491, %v493
      %v495 = vrot.slane %v370, 1
      %v496 = vrot.slane %v371, 1
      %v497 = vsel %vm454, %v495, %v496
      %v498 = vrot.slane %v372, 1
      %v499 = vsel %vm454, %v496, %v498
      %v500 = vrot.slane %v373, 1
      %v501 = vrot.slane %v374, 1
      %v502 = vsel %vm454, %v500, %v501
      %v503 = vrot.slane %v375, 1
      %v504 = vsel %vm454, %v501, %v503
      %v505 = vrot.slane %v376, 1
      %v506 = vrot.slane %v377, 1
      %v507 = vsel %vm454, %v505, %v506
      %v508 = vrot.slane %v378, 1
      %v509 = vsel %vm454, %v506, %v508
      %v510 = vrot.slane %v379, 1
      %v511 = vrot.slane %v380, 1
      %v512 = vsel %vm454, %v510, %v511
      %v513 = vrot.slane %v381, 1
      %v514 = vsel %vm454, %v511, %v513
      %v515 = vrot.slane %v382, 1
      %v516 = vrot.slane %v383, 1
      %v517 = vsel %vm454, %v515, %v516
      %v518 = vrot.slane %v384, 1
      %v519 = vsel %vm454, %v516, %v518
      %v520 = vrot.slane %v385, 1
      %v521 = vrot.slane %v386, 1
      %v522 = vsel %vm454, %v520, %v521
      %v523 = vrot.slane %v387, 1
      %v524 = vsel %vm454, %v521, %v523
      %v525 = vrot.slane %v388, 1
      %v526 = vrot.slane %v389, 1
      %v527 = vsel %vm454, %v525, %v526
      %v528 = vrot.slane %v390, 1
      %v529 = vsel %vm454, %v526, %v528
      %v530 = vrot.slane %v391, 1
      %v531 = vrot.slane %v392, 1
      %v532 = vsel %vm454, %v530, %v531
      %v533 = vrot.slane %v393, 1
      %v534 = vsel %vm454, %v531, %v533
      %v535 = vrot.slane %v394, 1
      %v536 = vrot.slane %v395, 1
      %v537 = vsel %vm454, %v535, %v536
      %v538 = vrot.slane %v396, 1
      %v539 = vsel %vm454, %v536, %v538
      %v540 = vrot.slane %v397, 1
      %v541 = vrot.slane %v398, 1
      %v542 = vsel %vm454, %v540, %v541
      %v543 = vrot.slane %v399, 1
      %v544 = vsel %vm454, %v541, %v543
      %545 = vrot.lane.b32.xlu0 %v457, 16
      %v546 = vpop.permute.xlu0 %545
      %547 = vrot.lane.b32.xlu0 %v459, 16
      %v548 = vpop.permute.xlu0 %547
      %549 = vrot.lane.b32.xlu0 %v462, 16
      %v550 = vpop.permute.xlu0 %549
      %551 = vrot.lane.b32.xlu0 %v464, 16
      %v552 = vpop.permute.xlu0 %551
      %553 = vrot.lane.b32.xlu0 %v467, 16
      %v554 = vpop.permute.xlu0 %553
      %555 = vrot.lane.b32.xlu0 %v469, 16
      %v556 = vpop.permute.xlu0 %555
      %557 = vrot.lane.b32.xlu0 %v472, 16
      %v558 = vpop.permute.xlu0 %557
      %559 = vrot.lane.b32.xlu0 %v474, 16
      %v560 = vpop.permute.xlu0 %559
      %561 = vrot.lane.b32.xlu0 %v477, 16
      %v562 = vpop.permute.xlu0 %561
      %563 = vrot.lane.b32.xlu0 %v479, 16
      %v564 = vpop.permute.xlu0 %563
      %565 = vrot.lane.b32.xlu0 %v482, 16
      %v566 = vpop.permute.xlu0 %565
      %567 = vrot.lane.b32.xlu0 %v484, 16
      %v568 = vpop.permute.xlu0 %567
      %569 = vrot.lane.b32.xlu0 %v487, 16
      %v570 = vpop.permute.xlu0 %569
      %571 = vrot.lane.b32.xlu0 %v489, 16
      %v572 = vpop.permute.xlu0 %571
      %573 = vrot.lane.b32.xlu0 %v492, 16
      %v574 = vpop.permute.xlu0 %573
      %575 = vrot.lane.b32.xlu0 %v494, 16
      %v576 = vpop.permute.xlu0 %575
      %577 = vrot.lane.b32.xlu0 %v497, 16
      %v578 = vpop.permute.xlu0 %577
      %579 = vrot.lane.b32.xlu0 %v499, 16
      %v580 = vpop.permute.xlu0 %579
      %581 = vrot.lane.b32.xlu0 %v502, 16
      %v582 = vpop.permute.xlu0 %581
      %583 = vrot.lane.b32.xlu0 %v504, 16
      %v584 = vpop.permute.xlu0 %583
      %585 = vrot.lane.b32.xlu0 %v507, 16
      %v586 = vpop.permute.xlu0 %585
      %587 = vrot.lane.b32.xlu0 %v509, 16
      %v588 = vpop.permute.xlu0 %587
      %589 = vrot.lane.b32.xlu0 %v512, 16
      %v590 = vpop.permute.xlu0 %589
      %591 = vrot.lane.b32.xlu0 %v514, 16
      %v592 = vpop.permute.xlu0 %591
      %593 = vrot.lane.b32.xlu0 %v517, 16
      %v594 = vpop.permute.xlu0 %593
      %595 = vrot.lane.b32.xlu0 %v519, 16
      %v596 = vpop.permute.xlu0 %595
      %597 = vrot.lane.b32.xlu0 %v522, 16
      %v598 = vpop.permute.xlu0 %597
      %599 = vrot.lane.b32.xlu0 %v524, 16
      %v600 = vpop.permute.xlu0 %599
      %601 = vrot.lane.b32.xlu0 %v527, 16
      %v602 = vpop.permute.xlu0 %601
      %603 = vrot.lane.b32.xlu0 %v529, 16
      %v604 = vpop.permute.xlu0 %603
      %605 = vrot.lane.b32.xlu0 %v532, 16
      %v606 = vpop.permute.xlu0 %605
      %607 = vrot.lane.b32.xlu0 %v534, 16
      %v608 = vpop.permute.xlu0 %607
      %609 = vrot.lane.b32.xlu0 %v537, 16
      %v610 = vpop.permute.xlu0 %609
      %611 = vrot.lane.b32.xlu0 %v539, 16
      %v612 = vpop.permute.xlu0 %611
      %613 = vrot.lane.b32.xlu0 %v542, 16
      %v614 = vpop.permute.xlu0 %613
      %615 = vrot.lane.b32.xlu0 %v544, 16
      %v616 = vpop.permute.xlu0 %615
      %vm653 = vcmask 1045504
      %v654 = vrot.slane %v346, 2
      %v655 = vrot.slane %v347, 2
      %v656 = vsel %vm653, %v654, %v655
      %v657 = vrot.slane %v348, 2
      %v658 = vsel %vm653, %v655, %v657
      %v659 = vrot.slane %v349, 2
      %v660 = vrot.slane %v350, 2
      %v661 = vsel %vm653, %v659, %v660
      %v662 = vrot.slane %v351, 2
      %v663 = vsel %vm653, %v660, %v662
      %v664 = vrot.slane %v352, 2
      %v665 = vrot.slane %v353, 2
      %v666 = vsel %vm653, %v664, %v665
      %v667 = vrot.slane %v354, 2
      %v668 = vsel %vm653, %v665, %v667
      %v669 = vrot.slane %v355, 2
      %v670 = vrot.slane %v356, 2
      %v671 = vsel %vm653, %v669, %v670
      %v672 = vrot.slane %v357, 2
      %v673 = vsel %vm653, %v670, %v672
      %v674 = vrot.slane %v358, 2
      %v675 = vrot.slane %v359, 2
      %v676 = vsel %vm653, %v674, %v675
      %v677 = vrot.slane %v360, 2
      %v678 = vsel %vm653, %v675, %v677
      %v679 = vrot.slane %v361, 2
      %v680 = vrot.slane %v362, 2
      %v681 = vsel %vm653, %v679, %v680
      %v682 = vrot.slane %v363, 2
      %v683 = vsel %vm653, %v680, %v682
      %v684 = vrot.slane %v364, 2
      %v685 = vrot.slane %v365, 2
      %v686 = vsel %vm653, %v684, %v685
      %v687 = vrot.slane %v366, 2
      %v688 = vsel %vm653, %v685, %v687
      %v689 = vrot.slane %v367, 2
      %v690 = vrot.slane %v368, 2
      %v691 = vsel %vm653, %v689, %v690
      %v692 = vrot.slane %v369, 2
      %v693 = vsel %vm653, %v690, %v692
      %v694 = vrot.slane %v370, 2
      %v695 = vrot.slane %v371, 2
      %v696 = vsel %vm653, %v694, %v695
      %v697 = vrot.slane %v372, 2
      %v698 = vsel %vm653, %v695, %v697
      %v699 = vrot.slane %v373, 2
      %v700 = vrot.slane %v374, 2
      %v701 = vsel %vm653, %v699, %v700
      %v702 = vrot.slane %v375, 2
      %v703 = vsel %vm653, %v700, %v702
      %v704 = vrot.slane %v376, 2
      %v705 = vrot.slane %v377, 2
      %v706 = vsel %vm653, %v704, %v705
      %v707 = vrot.slane %v378, 2
      %v708 = vsel %vm653, %v705, %v707
      %v709 = vrot.slane %v379, 2
      %v710 = vrot.slane %v380, 2
      %v711 = vsel %vm653, %v709, %v710
      %v712 = vrot.slane %v381, 2
      %v713 = vsel %vm653, %v710, %v712
      %v714 = vrot.slane %v382, 2
      %v715 = vrot.slane %v383, 2
      %v716 = vsel %vm653, %v714, %v715
      %v717 = vrot.slane %v384, 2
      %v718 = vsel %vm653, %v715, %v717
      %v719 = vrot.slane %v385, 2
      %v720 = vrot.slane %v386, 2
      %v721 = vsel %vm653, %v719, %v720
      %v722 = vrot.slane %v387, 2
      %v723 = vsel %vm653, %v720, %v722
      %v724 = vrot.slane %v388, 2
      %v725 = vrot.slane %v389, 2
      %v726 = vsel %vm653, %v724, %v725
      %v727 = vrot.slane %v390, 2
      %v728 = vsel %vm653, %v725, %v727
      %v729 = vrot.slane %v391, 2
      %v730 = vrot.slane %v392, 2
      %v731 = vsel %vm653, %v729, %v730
      %v732 = vrot.slane %v393, 2
      %v733 = vsel %vm653, %v730, %v732
      %v734 = vrot.slane %v394, 2
      %v735 = vrot.slane %v395, 2
      %v736 = vsel %vm653, %v734, %v735
      %v737 = vrot.slane %v396, 2
      %v738 = vsel %vm653, %v735, %v737
      %v739 = vrot.slane %v397, 2
      %v740 = vrot.slane %v398, 2
      %v741 = vsel %vm653, %v739, %v740
      %v742 = vrot.slane %v399, 2
      %v743 = vsel %vm653, %v740, %v742
      %744 = vrot.lane.b32.xlu0 %v656, 32
      %v745 = vpop.permute.xlu0 %744
      %746 = vrot.lane.b32.xlu0 %v658, 32
      %v747 = vpop.permute.xlu0 %746
      %748 = vrot.lane.b32.xlu0 %v661, 32
      %v749 = vpop.permute.xlu0 %748
      %750 = vrot.lane.b32.xlu0 %v663, 32
      %v751 = vpop.permute.xlu0 %750
      %752 = vrot.lane.b32.xlu0 %v666, 32
      %v753 = vpop.permute.xlu0 %752
      %754 = vrot.lane.b32.xlu0 %v668, 32
      %v755 = vpop.permute.xlu0 %754
      %756 = vrot.lane.b32.xlu0 %v671, 32
      %v757 = vpop.permute.xlu0 %756
      %758 = vrot.lane.b32.xlu0 %v673, 32
      %v759 = vpop.permute.xlu0 %758
      %760 = vrot.lane.b32.xlu0 %v676, 32
      %v761 = vpop.permute.xlu0 %760
      %762 = vrot.lane.b32.xlu0 %v678, 32
      %v763 = vpop.permute.xlu0 %762
      %764 = vrot.lane.b32.xlu0 %v681, 32
      %v765 = vpop.permute.xlu0 %764
      %766 = vrot.lane.b32.xlu0 %v683, 32
      %v767 = vpop.permute.xlu0 %766
      %768 = vrot.lane.b32.xlu0 %v686, 32
      %v769 = vpop.permute.xlu0 %768
      %770 = vrot.lane.b32.xlu0 %v688, 32
      %v771 = vpop.permute.xlu0 %770
      %772 = vrot.lane.b32.xlu0 %v691, 32
      %v773 = vpop.permute.xlu0 %772
      %774 = vrot.lane.b32.xlu0 %v693, 32
      %v775 = vpop.permute.xlu0 %774
      %776 = vrot.lane.b32.xlu0 %v696, 32
      %v777 = vpop.permute.xlu0 %776
      %778 = vrot.lane.b32.xlu0 %v698, 32
      %v779 = vpop.permute.xlu0 %778
      %780 = vrot.lane.b32.xlu0 %v701, 32
      %v781 = vpop.permute.xlu0 %780
      %782 = vrot.lane.b32.xlu0 %v703, 32
      %v783 = vpop.permute.xlu0 %782
      %784 = vrot.lane.b32.xlu0 %v706, 32
      %v785 = vpop.permute.xlu0 %784
      %786 = vrot.lane.b32.xlu0 %v708, 32
      %v787 = vpop.permute.xlu0 %786
      %788 = vrot.lane.b32.xlu0 %v711, 32
      %v789 = vpop.permute.xlu0 %788
      %790 = vrot.lane.b32.xlu0 %v713, 32
      %v791 = vpop.permute.xlu0 %790
      %792 = vrot.lane.b32.xlu0 %v716, 32
      %v793 = vpop.permute.xlu0 %792
      %794 = vrot.lane.b32.xlu0 %v718, 32
      %v795 = vpop.permute.xlu0 %794
      %796 = vrot.lane.b32.xlu0 %v721, 32
      %v797 = vpop.permute.xlu0 %796
      %798 = vrot.lane.b32.xlu0 %v723, 32
      %v799 = vpop.permute.xlu0 %798
      %800 = vrot.lane.b32.xlu0 %v726, 32
      %v801 = vpop.permute.xlu0 %800
      %802 = vrot.lane.b32.xlu0 %v728, 32
      %v803 = vpop.permute.xlu0 %802
      %804 = vrot.lane.b32.xlu0 %v731, 32
      %v805 = vpop.permute.xlu0 %804
      %806 = vrot.lane.b32.xlu0 %v733, 32
      %v807 = vpop.permute.xlu0 %806
      %808 = vrot.lane.b32.xlu0 %v736, 32
      %v809 = vpop.permute.xlu0 %808
      %810 = vrot.lane.b32.xlu0 %v738, 32
      %v811 = vpop.permute.xlu0 %810
      %812 = vrot.lane.b32.xlu0 %v741, 32
      %v813 = vpop.permute.xlu0 %812
      %814 = vrot.lane.b32.xlu0 %v743, 32
      %v815 = vpop.permute.xlu0 %814
      %v852 = vsel %vm171, %v346, %v546
      %v853 = vsel %vm171, %v347, %v548
      %v854 = vsel %vm171, %v349, %v550
      %v855 = vsel %vm171, %v350, %v552
      %v856 = vsel %vm171, %v352, %v554
      %v857 = vsel %vm171, %v353, %v556
      %v858 = vsel %vm171, %v355, %v558
      %v859 = vsel %vm171, %v356, %v560
      %v860 = vsel %vm171, %v358, %v562
      %v861 = vsel %vm171, %v359, %v564
      %v862 = vsel %vm171, %v361, %v566
      %v863 = vsel %vm171, %v362, %v568
      %v864 = vsel %vm171, %v364, %v570
      %v865 = vsel %vm171, %v365, %v572
      %v866 = vsel %vm171, %v367, %v574
      %v867 = vsel %vm171, %v368, %v576
      %v868 = vsel %vm171, %v370, %v578
      %v869 = vsel %vm171, %v371, %v580
      %v870 = vsel %vm171, %v373, %v582
      %v871 = vsel %vm171, %v374, %v584
      %v872 = vsel %vm171, %v376, %v586
      %v873 = vsel %vm171, %v377, %v588
      %v874 = vsel %vm171, %v379, %v590
      %v875 = vsel %vm171, %v380, %v592
      %v876 = vsel %vm171, %v382, %v594
      %v877 = vsel %vm171, %v383, %v596
      %v878 = vsel %vm171, %v385, %v598
      %v879 = vsel %vm171, %v386, %v600
      %v880 = vsel %vm171, %v388, %v602
      %v881 = vsel %vm171, %v389, %v604
      %v882 = vsel %vm171, %v391, %v606
      %v883 = vsel %vm171, %v392, %v608
      %v884 = vsel %vm171, %v394, %v610
      %v885 = vsel %vm171, %v395, %v612
      %v886 = vsel %vm171, %v397, %v614
      %v887 = vsel %vm171, %v398, %v616
      %vm888 = vcmask 261120
      %v889 = vsel %vm888, %v852, %v745
      %v890 = vsel %vm888, %v853, %v747
      %v891 = vsel %vm888, %v854, %v749
      %v892 = vsel %vm888, %v855, %v751
      %v893 = vsel %vm888, %v856, %v753
      %v894 = vsel %vm888, %v857, %v755
      %v895 = vsel %vm888, %v858, %v757
      %v896 = vsel %vm888, %v859, %v759
      %v897 = vsel %vm888, %v860, %v761
      %v898 = vsel %vm888, %v861, %v763
      %v899 = vsel %vm888, %v862, %v765
      %v900 = vsel %vm888, %v863, %v767
      %v901 = vsel %vm888, %v864, %v769
      %v902 = vsel %vm888, %v865, %v771
      %v903 = vsel %vm888, %v866, %v773
      %v904 = vsel %vm888, %v867, %v775
      %v905 = vsel %vm888, %v868, %v777
      %v906 = vsel %vm888, %v869, %v779
      %v907 = vsel %vm888, %v870, %v781
      %v908 = vsel %vm888, %v871, %v783
      %v909 = vsel %vm888, %v872, %v785
      %v910 = vsel %vm888, %v873, %v787
      %v911 = vsel %vm888, %v874, %v789
      %v912 = vsel %vm888, %v875, %v791
      %v913 = vsel %vm888, %v876, %v793
      %v914 = vsel %vm888, %v877, %v795
      %v915 = vsel %vm888, %v878, %v797
      %v916 = vsel %vm888, %v879, %v799
      %v917 = vsel %vm888, %v880, %v801
      %v918 = vsel %vm888, %v881, %v803
      %v919 = vsel %vm888, %v882, %v805
      %v920 = vsel %vm888, %v883, %v807
      %v921 = vsel %vm888, %v884, %v809
      %v922 = vsel %vm888, %v885, %v811
      %v923 = vsel %vm888, %v886, %v813
      %v924 = vsel %vm888, %v887, %v815
      %957 = vrot.lane.b32.xlu0 %v891, 48
      %v958 = vpop.permute.xlu0 %957
      %959 = vrot.lane.b32.xlu0 %v892, 48
      %v960 = vpop.permute.xlu0 %959
      %961 = vrot.lane.b32.xlu0 %v893, 48
      %v962 = vpop.permute.xlu0 %961
      %963 = vrot.lane.b32.xlu0 %v894, 48
      %v964 = vpop.permute.xlu0 %963
      %965 = vrot.lane.b32.xlu0 %v895, 48
      %v966 = vpop.permute.xlu0 %965
      %967 = vrot.lane.b32.xlu0 %v896, 48
      %v968 = vpop.permute.xlu0 %967
      %969 = vrot.lane.b32.xlu0 %v897, 48
      %v970 = vpop.permute.xlu0 %969
      %971 = vrot.lane.b32.xlu0 %v898, 48
      %v972 = vpop.permute.xlu0 %971
      %973 = vrot.lane.b32.xlu0 %v899, 48
      %v974 = vpop.permute.xlu0 %973
      %975 = vrot.lane.b32.xlu0 %v900, 48
      %v976 = vpop.permute.xlu0 %975
      %977 = vrot.lane.b32.xlu0 %v901, 48
      %v978 = vpop.permute.xlu0 %977
      %979 = vrot.lane.b32.xlu0 %v902, 48
      %v980 = vpop.permute.xlu0 %979
      %981 = vrot.lane.b32.xlu0 %v903, 48
      %v982 = vpop.permute.xlu0 %981
      %983 = vrot.lane.b32.xlu0 %v904, 48
      %v984 = vpop.permute.xlu0 %983
      %985 = vrot.lane.b32.xlu0 %v905, 48
      %v986 = vpop.permute.xlu0 %985
      %987 = vrot.lane.b32.xlu0 %v906, 48
      %v988 = vpop.permute.xlu0 %987
      %989 = vrot.lane.b32.xlu0 %v907, 48
      %v990 = vpop.permute.xlu0 %989
      %991 = vrot.lane.b32.xlu0 %v908, 48
      %v992 = vpop.permute.xlu0 %991
      %993 = vrot.lane.b32.xlu0 %v909, 48
      %v994 = vpop.permute.xlu0 %993
      %995 = vrot.lane.b32.xlu0 %v910, 48
      %v996 = vpop.permute.xlu0 %995
      %997 = vrot.lane.b32.xlu0 %v911, 48
      %v998 = vpop.permute.xlu0 %997
      %999 = vrot.lane.b32.xlu0 %v912, 48
      %v1000 = vpop.permute.xlu0 %999
      %1001 = vrot.lane.b32.xlu0 %v913, 48
      %v1002 = vpop.permute.xlu0 %1001
      %1003 = vrot.lane.b32.xlu0 %v914, 48
      %v1004 = vpop.permute.xlu0 %1003
      %1005 = vrot.lane.b32.xlu0 %v915, 48
      %v1006 = vpop.permute.xlu0 %1005
      %1007 = vrot.lane.b32.xlu0 %v916, 48
      %v1008 = vpop.permute.xlu0 %1007
      %1009 = vrot.lane.b32.xlu0 %v917, 48
      %v1010 = vpop.permute.xlu0 %1009
      %1011 = vrot.lane.b32.xlu0 %v918, 48
      %v1012 = vpop.permute.xlu0 %1011
      %1013 = vrot.lane.b32.xlu0 %v919, 48
      %v1014 = vpop.permute.xlu0 %1013
      %1015 = vrot.lane.b32.xlu0 %v920, 48
      %v1016 = vpop.permute.xlu0 %1015
      %1017 = vrot.lane.b32.xlu0 %v921, 48
      %v1018 = vpop.permute.xlu0 %1017
      %1019 = vrot.lane.b32.xlu0 %v922, 48
      %v1020 = vpop.permute.xlu0 %1019
      %1055 = vrot.lane.b32.xlu0 %v893, 96
      %v1056 = vpop.permute.xlu0 %1055
      %1057 = vrot.lane.b32.xlu0 %v894, 96
      %v1058 = vpop.permute.xlu0 %1057
      %1059 = vrot.lane.b32.xlu0 %v895, 96
      %v1060 = vpop.permute.xlu0 %1059
      %1061 = vrot.lane.b32.xlu0 %v896, 96
      %v1062 = vpop.permute.xlu0 %1061
      %1063 = vrot.lane.b32.xlu0 %v897, 96
      %v1064 = vpop.permute.xlu0 %1063
      %1065 = vrot.lane.b32.xlu0 %v898, 96
      %v1066 = vpop.permute.xlu0 %1065
      %1067 = vrot.lane.b32.xlu0 %v899, 96
      %v1068 = vpop.permute.xlu0 %1067
      %1069 = vrot.lane.b32.xlu0 %v900, 96
      %v1070 = vpop.permute.xlu0 %1069
      %1071 = vrot.lane.b32.xlu0 %v901, 96
      %v1072 = vpop.permute.xlu0 %1071
      %1073 = vrot.lane.b32.xlu0 %v902, 96
      %v1074 = vpop.permute.xlu0 %1073
      %1075 = vrot.lane.b32.xlu0 %v903, 96
      %v1076 = vpop.permute.xlu0 %1075
      %1077 = vrot.lane.b32.xlu0 %v904, 96
      %v1078 = vpop.permute.xlu0 %1077
      %1079 = vrot.lane.b32.xlu0 %v905, 96
      %v1080 = vpop.permute.xlu0 %1079
      %1081 = vrot.lane.b32.xlu0 %v906, 96
      %v1082 = vpop.permute.xlu0 %1081
      %1083 = vrot.lane.b32.xlu0 %v907, 96
      %v1084 = vpop.permute.xlu0 %1083
      %1085 = vrot.lane.b32.xlu0 %v908, 96
      %v1086 = vpop.permute.xlu0 %1085
      %1087 = vrot.lane.b32.xlu0 %v909, 96
      %v1088 = vpop.permute.xlu0 %1087
      %1089 = vrot.lane.b32.xlu0 %v910, 96
      %v1090 = vpop.permute.xlu0 %1089
      %1091 = vrot.lane.b32.xlu0 %v911, 96
      %v1092 = vpop.permute.xlu0 %1091
      %1093 = vrot.lane.b32.xlu0 %v912, 96
      %v1094 = vpop.permute.xlu0 %1093
      %1095 = vrot.lane.b32.xlu0 %v913, 96
      %v1096 = vpop.permute.xlu0 %1095
      %1097 = vrot.lane.b32.xlu0 %v914, 96
      %v1098 = vpop.permute.xlu0 %1097
      %1099 = vrot.lane.b32.xlu0 %v915, 96
      %v1100 = vpop.permute.xlu0 %1099
      %1101 = vrot.lane.b32.xlu0 %v916, 96
      %v1102 = vpop.permute.xlu0 %1101
      %1103 = vrot.lane.b32.xlu0 %v917, 96
      %v1104 = vpop.permute.xlu0 %1103
      %1105 = vrot.lane.b32.xlu0 %v918, 96
      %v1106 = vpop.permute.xlu0 %1105
      %1107 = vrot.lane.b32.xlu0 %v919, 96
      %v1108 = vpop.permute.xlu0 %1107
      %1109 = vrot.lane.b32.xlu0 %v920, 96
      %v1110 = vpop.permute.xlu0 %1109
      %1111 = vrot.lane.b32.xlu0 %v921, 96
      %v1112 = vpop.permute.xlu0 %1111
      %1113 = vrot.lane.b32.xlu0 %v922, 96
      %v1114 = vpop.permute.xlu0 %1113
      %1115 = vrot.lane.b32.xlu0 %v923, 96
      %v1116 = vpop.permute.xlu0 %1115
      %1117 = vrot.lane.b32.xlu0 %v924, 96
      %v1118 = vpop.permute.xlu0 %1117
      %vm1151 = vcmask 392192
      %v1152 = vsel %vm1151, %v889, %v958
      %v1153 = vsel %vm1151, %v890, %v960
      %v1154 = vsel %vm1151, %v891, %v962
      %v1155 = vsel %vm1151, %v892, %v964
      %v1156 = vsel %vm1151, %v893, %v966
      %v1157 = vsel %vm1151, %v894, %v968
      %v1158 = vsel %vm1151, %v895, %v970
      %v1159 = vsel %vm1151, %v896, %v972
      %v1160 = vsel %vm1151, %v897, %v974
      %v1161 = vsel %vm1151, %v898, %v976
      %v1162 = vsel %vm1151, %v899, %v978
      %v1163 = vsel %vm1151, %v900, %v980
      %v1164 = vsel %vm1151, %v901, %v982
      %v1165 = vsel %vm1151, %v902, %v984
      %v1166 = vsel %vm1151, %v903, %v986
      %v1167 = vsel %vm1151, %v904, %v988
      %v1168 = vsel %vm1151, %v905, %v990
      %v1169 = vsel %vm1151, %v906, %v992
      %v1170 = vsel %vm1151, %v907, %v994
      %v1171 = vsel %vm1151, %v908, %v996
      %v1172 = vsel %vm1151, %v909, %v998
      %v1173 = vsel %vm1151, %v910, %v1000
      %v1174 = vsel %vm1151, %v911, %v1002
      %v1175 = vsel %vm1151, %v912, %v1004
      %v1176 = vsel %vm1151, %v913, %v1006
      %v1177 = vsel %vm1151, %v914, %v1008
      %v1178 = vsel %vm1151, %v915, %v1010
      %v1179 = vsel %vm1151, %v916, %v1012
      %v1180 = vsel %vm1151, %v917, %v1014
      %v1181 = vsel %vm1151, %v918, %v1016
      %v1182 = vsel %vm1151, %v919, %v1018
      %v1183 = vsel %vm1151, %v920, %v1020
      %vm1184 = vcmask 785408
      %v1185 = vsel %vm1184, %v1152, %v1056
      %v1186 = vsel %vm1184, %v1153, %v1058
      %v1187 = vsel %vm1184, %v1154, %v1060
      %v1188 = vsel %vm1184, %v1155, %v1062
      %v1189 = vsel %vm1184, %v1156, %v1064
      %v1190 = vsel %vm1184, %v1157, %v1066
      %v1191 = vsel %vm1184, %v1158, %v1068
      %v1192 = vsel %vm1184, %v1159, %v1070
      %v1193 = vsel %vm1184, %v1160, %v1072
      %v1194 = vsel %vm1184, %v1161, %v1074
      %v1195 = vsel %vm1184, %v1162, %v1076
      %v1196 = vsel %vm1184, %v1163, %v1078
      %v1197 = vsel %vm1184, %v1164, %v1080
      %v1198 = vsel %vm1184, %v1165, %v1082
      %v1199 = vsel %vm1184, %v1166, %v1084
      %v1200 = vsel %vm1184, %v1167, %v1086
      %v1201 = vsel %vm1184, %v1168, %v1088
      %v1202 = vsel %vm1184, %v1169, %v1090
      %v1203 = vsel %vm1184, %v1170, %v1092
      %v1204 = vsel %vm1184, %v1171, %v1094
      %v1205 = vsel %vm1184, %v1172, %v1096
      %v1206 = vsel %vm1184, %v1173, %v1098
      %v1207 = vsel %vm1184, %v1174, %v1100
      %v1208 = vsel %vm1184, %v1175, %v1102
      %v1209 = vsel %vm1184, %v1176, %v1104
      %v1210 = vsel %vm1184, %v1177, %v1106
      %v1211 = vsel %vm1184, %v1178, %v1108
      %v1212 = vsel %vm1184, %v1179, %v1110
      %v1213 = vsel %vm1184, %v1180, %v1112
      %v1214 = vsel %vm1184, %v1181, %v1114
      %v1215 = vsel %vm1184, %v1182, %v1116
      %v1216 = vsel %vm1184, %v1183, %v1118
      %v1217 = vld [vmem:[%s1] sm:$0xff]
      %v1218 = vld [vmem:[%s1 + $0x8] sm:$0xff]
      %v1219 = vld [vmem:[%s1 + $0x10] sm:$0xff]
      %v1220 = vld [vmem:[%s1 + $0x18] sm:$0xff]
      %v1221 = vld [vmem:[%s1 + $0x20] sm:$0xff]
      %v1222 = vld [vmem:[%s1 + $0x28] sm:$0xff]
      %v1223 = vld [vmem:[%s1 + $0x30] sm:$0xff]
      %v1224 = vld [vmem:[%s1 + $0x38] sm:$0xff]
      %v1225 = vld [vmem:[%s1 + $0x40] sm:$0xff]
      %v1226 = vld [vmem:[%s1 + $0x48] sm:$0xff]
      %v1227 = vld [vmem:[%s1 + $0x50] sm:$0xff]
      %v1228 = vld [vmem:[%s1 + $0x58] sm:$0xff]
      %v1229 = vld [vmem:[%s1 + $0x60] sm:$0xff]
      %v1230 = vld [vmem:[%s1 + $0x68] sm:$0xff]
      %v1231 = vld [vmem:[%s1 + $0x70] sm:$0xff]
      %v1232 = vld [vmem:[%s1 + $0x78] sm:$0xff]
      %v1233 = vld [vmem:[%s1 + $0x80] sm:$0xff]
      %v1234 = vld [vmem:[%s1 + $0x88] sm:$0xff]
      %v1235 = vld [vmem:[%s2] sm:$0x1]
      %v1237 = vlaneseq
      %v1238 = vshrl.u32 %v1237, 7
      %v1239 = vsub.s32 0, %v1238
      %v1240 = vrot.slane %v1235, %v1239
      %v1242 = vsel %vm171, %v1056, 0
      %v1244 = vsel %vm171, %v1058, 0
      %v1246 = vsel %vm171, %v1060, 0
      %v1248 = vsel %vm171, %v1062, 0
      %v1250 = vsel %vm171, %v1064, 0
      %v1252 = vsel %vm171, %v1066, 0
      %v1254 = vsel %vm171, %v1068, 0
      %v1256 = vsel %vm171, %v1070, 0
      %v1258 = vsel %vm171, %v1072, 0
      %v1260 = vsel %vm171, %v1074, 0
      %v1262 = vsel %vm171, %v1076, 0
      %v1264 = vsel %vm171, %v1078, 0
      %v1266 = vsel %vm171, %v1080, 0
      %v1268 = vsel %vm171, %v1082, 0
      %v1270 = vsel %vm171, %v1084, 0
      %v1272 = vsel %vm171, %v1086, 0
      %v1274 = vsel %vm171, %v1088, 0
      %v1276 = vsel %vm171, %v1090, 0
      %v1278 = vsel %vm171, %v1092, 0
      %v1280 = vsel %vm171, %v1094, 0
      %v1282 = vsel %vm171, %v1096, 0
      %v1284 = vsel %vm171, %v1098, 0
      %v1286 = vsel %vm171, %v1100, 0
      %v1288 = vsel %vm171, %v1102, 0
      %v1290 = vsel %vm171, %v1104, 0
      %v1292 = vsel %vm171, %v1106, 0
      %v1294 = vsel %vm171, %v1108, 0
      %v1296 = vsel %vm171, %v1110, 0
      %v1298 = vsel %vm171, %v1112, 0
      %v1300 = vsel %vm171, %v1114, 0
      %v1302 = vsel %vm171, %v1116, 0
      %v1304 = vsel %vm171, %v1118, 0
      %1306 = vmatprep.subr.mxu0 0.0
      %1307 = vmatpush1.msra.mxu0 %v1232
      %1308 = vmatprep.subr.mxu0 0.0
      %1309 = vmatpush1.msra.mxu0 %v1231
      %1310 = vmatprep.subr.mxu0 0.0
      %1311 = vmatpush1.msra.mxu0 %v1230
      %1312 = vmatprep.subr.mxu0 0.0
      %1313 = vmatpush1.msra.mxu0 %v1229
      %1314 = vmatprep.subr.mxu0 0.0
      %1315 = vmatpush1.msra.mxu0 %v1228
      %1316 = vmatprep.subr.mxu0 0.0
      %1317 = vmatpush1.msra.mxu0 %v1227
      %1318 = vmatprep.subr.mxu0 0.0
      %1319 = vmatpush1.msra.mxu0 %v1226
      %1320 = vmatprep.subr.mxu0 0.0
      %1321 = vmatpush1.msra.mxu0 %v1225
      %1322 = vmatprep.subr.mxu0 0.0
      %1323 = vmatpush1.msra.mxu0 %v1224
      %1324 = vmatprep.subr.mxu0 0.0
      %1325 = vmatpush1.msra.mxu0 %v1223
      %1326 = vmatprep.subr.mxu0 0.0
      %1327 = vmatpush1.msra.mxu0 %v1222
      %1328 = vmatprep.subr.mxu0 0.0
      %1329 = vmatpush1.msra.mxu0 %v1221
      %1330 = vmatprep.subr.mxu0 0.0
      %1331 = vmatpush1.msra.mxu0 %v1220
      %1332 = vmatprep.subr.mxu0 0.0
      %1333 = vmatpush1.msra.mxu0 %v1219
      %1334 = vmatprep.subr.mxu0 0.0
      %1335 = vmatpush1.msra.mxu0 %v1218
      %1336 = vmatprep.subr.mxu0 0.0
      %1337 = vmatpush1.msra.mxu0 %v1217
      %1338 = vmatprep.subr.mxu0 0.0
      %1339 = vmatpush2.msra.mxu0 0.0
      %1340 = vmatprep.subr.mxu0 0.0
      %1341 = vmatpush2.msra.mxu0 0.0
      %1342 = vmatprep.subr.mxu0 0.0
      %1343 = vmatpush2.msra.mxu0 0.0
      %1344 = vmatprep.subr.mxu0 0.0
      %1345 = vmatpush2.msra.mxu0 0.0
      %1346 = vmatprep.subr.mxu0 0.0
      %1347 = vmatpush2.msra.mxu0 0.0
      %1348 = vmatprep.subr.mxu0 0.0
      %1349 = vmatpush2.msra.mxu0 0.0
      %1350 = vmatprep.subr.mxu0 0.0
      %1351 = vmatpush2.msra.mxu0 0.0
      %1352 = vmatprep.subr.mxu0 0.0
      %1353 = vmatpush2.msra.mxu0 0.0
      %1354 = vmatprep.subr.mxu0 0.0
      %1355 = vmatpush2.msra.mxu0 0.0
      %1356 = vmatprep.subr.mxu0 0.0
      %1357 = vmatpush2.msra.mxu0 0.0
      %1358 = vmatprep.subr.mxu0 0.0
      %1359 = vmatpush2.msra.mxu0 0.0
      %1360 = vmatprep.subr.mxu0 0.0
      %1361 = vmatpush2.msra.mxu0 0.0
      %1362 = vmatprep.subr.mxu0 0.0
      %1363 = vmatpush2.msra.mxu0 0.0
      %1364 = vmatprep.subr.mxu0 0.0
      %1365 = vmatpush2.msra.mxu0 0.0
      %1366 = vmatprep.subr.mxu0 0.0
      %1367 = vmatpush2.msra.mxu0 %v1234
      %1368 = vmatprep.subr.mxu0 0.0
      %1369 = vmatpush2.msra.mxu0 %v1233
      %1370 = vmatprep.mubr.f32.mxu0 %v1242
      %1371 = vmatmul.mubr.f32.gmra.mxu0 %v1185
      %v1372 = vpop.f32.mrf.mxu0
      %v1373 = vadd.f32 %v1240, %v1372
      %v1374 = vpop.f32.mrf.mxu0
      %1375 = vmatprep.mubr.f32.mxu0 %v1244
      %1376 = vmatmul.mubr.f32.gmra.mxu0 %v1186
      %v1377 = vpop.f32.mrf.mxu0
      %v1378 = vadd.f32 %v1240, %v1377
      %v1379 = vpop.f32.mrf.mxu0
      %1380 = vmatprep.mubr.f32.mxu0 %v1246
      %1381 = vmatmul.mubr.f32.gmra.mxu0 %v1187
      %v1382 = vpop.f32.mrf.mxu0
      %v1383 = vadd.f32 %v1240, %v1382
      %v1384 = vpop.f32.mrf.mxu0
      %1385 = vmatprep.mubr.f32.mxu0 %v1248
      %1386 = vmatmul.mubr.f32.gmra.mxu0 %v1188
      %v1387 = vpop.f32.mrf.mxu0
      %v1388 = vadd.f32 %v1240, %v1387
      %v1389 = vpop.f32.mrf.mxu0
      %1390 = vmatprep.mubr.f32.mxu0 %v1250
      %1391 = vmatmul.mubr.f32.gmra.mxu0 %v1189
      %v1392 = vpop.f32.mrf.mxu0
      %v1393 = vadd.f32 %v1240, %v1392
      %v1394 = vpop.f32.mrf.mxu0
      %1395 = vmatprep.mubr.f32.mxu0 %v1252
      %1396 = vmatmul.mubr.f32.gmra.mxu0 %v1190
      %v1397 = vpop.f32.mrf.mxu0
      %v1398 = vadd.f32 %v1240, %v1397
      %v1399 = vpop.f32.mrf.mxu0
      %1400 = vmatprep.mubr.f32.mxu0 %v1254
      %1401 = vmatmul.mubr.f32.gmra.mxu0 %v1191
      %v1402 = vpop.f32.mrf.mxu0
      %v1403 = vadd.f32 %v1240, %v1402
      %v1404 = vpop.f32.mrf.mxu0
      %1405 = vmatprep.mubr.f32.mxu0 %v1256
      %1406 = vmatmul.mubr.f32.gmra.mxu0 %v1192
      %v1407 = vpop.f32.mrf.mxu0
      %v1408 = vadd.f32 %v1240, %v1407
      %v1409 = vpop.f32.mrf.mxu0
      %1410 = vmatprep.mubr.f32.mxu0 %v1258
      %1411 = vmatmul.mubr.f32.gmra.mxu0 %v1193
      %v1412 = vpop.f32.mrf.mxu0
      %v1413 = vadd.f32 %v1240, %v1412
      %v1414 = vpop.f32.mrf.mxu0
      %1415 = vmatprep.mubr.f32.mxu0 %v1260
      %1416 = vmatmul.mubr.f32.gmra.mxu0 %v1194
      %v1417 = vpop.f32.mrf.mxu0
      %v1418 = vadd.f32 %v1240, %v1417
      %v1419 = vpop.f32.mrf.mxu0
      %1420 = vmatprep.mubr.f32.mxu0 %v1262
      %1421 = vmatmul.mubr.f32.gmra.mxu0 %v1195
      %v1422 = vpop.f32.mrf.mxu0
      %v1423 = vadd.f32 %v1240, %v1422
      %v1424 = vpop.f32.mrf.mxu0
      %1425 = vmatprep.mubr.f32.mxu0 %v1264
      %1426 = vmatmul.mubr.f32.gmra.mxu0 %v1196
      %v1427 = vpop.f32.mrf.mxu0
      %v1428 = vadd.f32 %v1240, %v1427
      %v1429 = vpop.f32.mrf.mxu0
      %1430 = vmatprep.mubr.f32.mxu0 %v1266
      %1431 = vmatmul.mubr.f32.gmra.mxu0 %v1197
      %v1432 = vpop.f32.mrf.mxu0
      %v1433 = vadd.f32 %v1240, %v1432
      %v1434 = vpop.f32.mrf.mxu0
      %1435 = vmatprep.mubr.f32.mxu0 %v1268
      %1436 = vmatmul.mubr.f32.gmra.mxu0 %v1198
      %v1437 = vpop.f32.mrf.mxu0
      %v1438 = vadd.f32 %v1240, %v1437
      %v1439 = vpop.f32.mrf.mxu0
      %1440 = vmatprep.mubr.f32.mxu0 %v1270
      %1441 = vmatmul.mubr.f32.gmra.mxu0 %v1199
      %v1442 = vpop.f32.mrf.mxu0
      %v1443 = vadd.f32 %v1240, %v1442
      %v1444 = vpop.f32.mrf.mxu0
      %1445 = vmatprep.mubr.f32.mxu0 %v1272
      %1446 = vmatmul.mubr.f32.gmra.mxu0 %v1200
      %v1447 = vpop.f32.mrf.mxu0
      %v1448 = vadd.f32 %v1240, %v1447
      %v1449 = vpop.f32.mrf.mxu0
      %1450 = vmatprep.mubr.f32.mxu0 %v1274
      %1451 = vmatmul.mubr.f32.gmra.mxu0 %v1201
      %v1452 = vpop.f32.mrf.mxu0
      %v1453 = vadd.f32 %v1240, %v1452
      %v1454 = vpop.f32.mrf.mxu0
      %1455 = vmatprep.mubr.f32.mxu0 %v1276
      %1456 = vmatmul.mubr.f32.gmra.mxu0 %v1202
      %v1457 = vpop.f32.mrf.mxu0
      %v1458 = vadd.f32 %v1240, %v1457
      %v1459 = vpop.f32.mrf.mxu0
      %1460 = vmatprep.mubr.f32.mxu0 %v1278
      %1461 = vmatmul.mubr.f32.gmra.mxu0 %v1203
      %v1462 = vpop.f32.mrf.mxu0
      %v1463 = vadd.f32 %v1240, %v1462
      %v1464 = vpop.f32.mrf.mxu0
      %1465 = vmatprep.mubr.f32.mxu0 %v1280
      %1466 = vmatmul.mubr.f32.gmra.mxu0 %v1204
      %v1467 = vpop.f32.mrf.mxu0
      %v1468 = vadd.f32 %v1240, %v1467
      %v1469 = vpop.f32.mrf.mxu0
      %1470 = vmatprep.mubr.f32.mxu0 %v1282
      %1471 = vmatmul.mubr.f32.gmra.mxu0 %v1205
      %v1472 = vpop.f32.mrf.mxu0
      %v1473 = vadd.f32 %v1240, %v1472
      %v1474 = vpop.f32.mrf.mxu0
      %1475 = vmatprep.mubr.f32.mxu0 %v1284
      %1476 = vmatmul.mubr.f32.gmra.mxu0 %v1206
      %v1477 = vpop.f32.mrf.mxu0
      %v1478 = vadd.f32 %v1240, %v1477
      %v1479 = vpop.f32.mrf.mxu0
      %1480 = vmatprep.mubr.f32.mxu0 %v1286
      %1481 = vmatmul.mubr.f32.gmra.mxu0 %v1207
      %v1482 = vpop.f32.mrf.mxu0
      %v1483 = vadd.f32 %v1240, %v1482
      %v1484 = vpop.f32.mrf.mxu0
      %1485 = vmatprep.mubr.f32.mxu0 %v1288
      %1486 = vmatmul.mubr.f32.gmra.mxu0 %v1208
      %v1487 = vpop.f32.mrf.mxu0
      %v1488 = vadd.f32 %v1240, %v1487
      %v1489 = vpop.f32.mrf.mxu0
      %1490 = vmatprep.mubr.f32.mxu0 %v1290
      %1491 = vmatmul.mubr.f32.gmra.mxu0 %v1209
      %v1492 = vpop.f32.mrf.mxu0
      %v1493 = vadd.f32 %v1240, %v1492
      %v1494 = vpop.f32.mrf.mxu0
      %1495 = vmatprep.mubr.f32.mxu0 %v1292
      %1496 = vmatmul.mubr.f32.gmra.mxu0 %v1210
      %v1497 = vpop.f32.mrf.mxu0
      %v1498 = vadd.f32 %v1240, %v1497
      %v1499 = vpop.f32.mrf.mxu0
      %1500 = vmatprep.mubr.f32.mxu0 %v1294
      %1501 = vmatmul.mubr.f32.gmra.mxu0 %v1211
      %v1502 = vpop.f32.mrf.mxu0
      %v1503 = vadd.f32 %v1240, %v1502
      %v1504 = vpop.f32.mrf.mxu0
      %1505 = vmatprep.mubr.f32.mxu0 %v1296
      %1506 = vmatmul.mubr.f32.gmra.mxu0 %v1212
      %v1507 = vpop.f32.mrf.mxu0
      %v1508 = vadd.f32 %v1240, %v1507
      %v1509 = vpop.f32.mrf.mxu0
      %1510 = vmatprep.mubr.f32.mxu0 %v1298
      %1511 = vmatmul.mubr.f32.gmra.mxu0 %v1213
      %v1512 = vpop.f32.mrf.mxu0
      %v1513 = vadd.f32 %v1240, %v1512
      %v1514 = vpop.f32.mrf.mxu0
      %1515 = vmatprep.mubr.f32.mxu0 %v1300
      %1516 = vmatmul.mubr.f32.gmra.mxu0 %v1214
      %v1517 = vpop.f32.mrf.mxu0
      %v1518 = vadd.f32 %v1240, %v1517
      %v1519 = vpop.f32.mrf.mxu0
      %1520 = vmatprep.mubr.f32.mxu0 %v1302
      %1521 = vmatmul.mubr.f32.gmra.mxu0 %v1215
      %v1522 = vpop.f32.mrf.mxu0
      %v1523 = vadd.f32 %v1240, %v1522
      %v1524 = vpop.f32.mrf.mxu0
      %1525 = vmatprep.mubr.f32.mxu0 %v1304
      %1526 = vmatmul.mubr.f32.gmra.mxu0 %v1216
      %v1527 = vpop.f32.mrf.mxu0
      %v1528 = vadd.f32 %v1240, %v1527
      %v1529 = vpop.f32.mrf.mxu0
      %1530 = vdwg.mxu0
      %vm1531 = vcmp.ge.f32.partialorder %v1373, 0.0
      %vm1532 = vcmp.ge.f32.partialorder %v1378, 0.0
      %vm1533 = vcmp.ge.f32.partialorder %v1383, 0.0
      %vm1534 = vcmp.ge.f32.partialorder %v1388, 0.0
      %vm1535 = vcmp.ge.f32.partialorder %v1393, 0.0
      %vm1536 = vcmp.ge.f32.partialorder %v1398, 0.0
      %vm1537 = vcmp.ge.f32.partialorder %v1403, 0.0
      %vm1538 = vcmp.ge.f32.partialorder %v1408, 0.0
      %vm1539 = vcmp.ge.f32.partialorder %v1413, 0.0
      %vm1540 = vcmp.ge.f32.partialorder %v1418, 0.0
      %vm1541 = vcmp.ge.f32.partialorder %v1423, 0.0
      %vm1542 = vcmp.ge.f32.partialorder %v1428, 0.0
      %vm1543 = vcmp.ge.f32.partialorder %v1433, 0.0
      %vm1544 = vcmp.ge.f32.partialorder %v1438, 0.0
      %vm1545 = vcmp.ge.f32.partialorder %v1443, 0.0
      %vm1546 = vcmp.ge.f32.partialorder %v1448, 0.0
      %vm1547 = vcmp.ge.f32.partialorder %v1453, 0.0
      %vm1548 = vcmp.ge.f32.partialorder %v1458, 0.0
      %vm1549 = vcmp.ge.f32.partialorder %v1463, 0.0
      %vm1550 = vcmp.ge.f32.partialorder %v1468, 0.0
      %vm1551 = vcmp.ge.f32.partialorder %v1473, 0.0
      %vm1552 = vcmp.ge.f32.partialorder %v1478, 0.0
      %vm1553 = vcmp.ge.f32.partialorder %v1483, 0.0
      %vm1554 = vcmp.ge.f32.partialorder %v1488, 0.0
      %vm1555 = vcmp.ge.f32.partialorder %v1493, 0.0
      %vm1556 = vcmp.ge.f32.partialorder %v1498, 0.0
      %vm1557 = vcmp.ge.f32.partialorder %v1503, 0.0
      %vm1558 = vcmp.ge.f32.partialorder %v1508, 0.0
      %vm1559 = vcmp.ge.f32.partialorder %v1513, 0.0
      %vm1560 = vcmp.ge.f32.partialorder %v1518, 0.0
      %vm1561 = vcmp.ge.f32.partialorder %v1523, 0.0
      %vm1562 = vcmp.ge.f32.partialorder %v1528, 0.0
      %v1563 = vmul.f32 %v1373, 0.1
      %v1564 = vmul.f32 %v1378, 0.1
      %v1565 = vmul.f32 %v1383, 0.1
      %v1566 = vmul.f32 %v1388, 0.1
      %v1567 = vmul.f32 %v1393, 0.1
      %v1568 = vmul.f32 %v1398, 0.1
      %v1569 = vmul.f32 %v1403, 0.1
      %v1570 = vmul.f32 %v1408, 0.1
      %v1571 = vmul.f32 %v1413, 0.1
      %v1572 = vmul.f32 %v1418, 0.1
      %v1573 = vmul.f32 %v1423, 0.1
      %v1574 = vmul.f32 %v1428, 0.1
      %v1575 = vmul.f32 %v1433, 0.1
      %v1576 = vmul.f32 %v1438, 0.1
      %v1577 = vmul.f32 %v1443, 0.1
      %v1578 = vmul.f32 %v1448, 0.1
      %v1579 = vmul.f32 %v1453, 0.1
      %v1580 = vmul.f32 %v1458, 0.1
      %v1581 = vmul.f32 %v1463, 0.1
      %v1582 = vmul.f32 %v1468, 0.1
      %v1583 = vmul.f32 %v1473, 0.1
      %v1584 = vmul.f32 %v1478, 0.1
      %v1585 = vmul.f32 %v1483, 0.1
      %v1586 = vmul.f32 %v1488, 0.1
      %v1587 = vmul.f32 %v1493, 0.1
      %v1588 = vmul.f32 %v1498, 0.1
      %v1589 = vmul.f32 %v1503, 0.1
      %v1590 = vmul.f32 %v1508, 0.1
      %v1591 = vmul.f32 %v1513, 0.1
      %v1592 = vmul.f32 %v1518, 0.1
      %v1593 = vmul.f32 %v1523, 0.1
      %v1594 = vmul.f32 %v1528, 0.1
      %v1595 = vsel %vm1531, %v1373, %v1563
      %v1596 = vsel %vm1532, %v1378, %v1564
      %v1597 = vsel %vm1533, %v1383, %v1565
      %v1598 = vsel %vm1534, %v1388, %v1566
      %v1599 = vsel %vm1535, %v1393, %v1567
      %v1600 = vsel %vm1536, %v1398, %v1568
      %v1601 = vsel %vm1537, %v1403, %v1569
      %v1602 = vsel %vm1538, %v1408, %v1570
      %v1603 = vsel %vm1539, %v1413, %v1571
      %v1604 = vsel %vm1540, %v1418, %v1572
      %v1605 = vsel %vm1541, %v1423, %v1573
      %v1606 = vsel %vm1542, %v1428, %v1574
      %v1607 = vsel %vm1543, %v1433, %v1575
      %v1608 = vsel %vm1544, %v1438, %v1576
      %v1609 = vsel %vm1545, %v1443, %v1577
      %v1610 = vsel %vm1546, %v1448, %v1578
      %v1611 = vsel %vm1547, %v1453, %v1579
      %v1612 = vsel %vm1548, %v1458, %v1580
      %v1613 = vsel %vm1549, %v1463, %v1581
      %v1614 = vsel %vm1550, %v1468, %v1582
      %v1615 = vsel %vm1551, %v1473, %v1583
      %v1616 = vsel %vm1552, %v1478, %v1584
      %v1617 = vsel %vm1553, %v1483, %v1585
      %v1618 = vsel %vm1554, %v1488, %v1586
      %v1619 = vsel %vm1555, %v1493, %v1587
      %v1620 = vsel %vm1556, %v1498, %v1588
      %v1621 = vsel %vm1557, %v1503, %v1589
      %v1622 = vsel %vm1558, %v1508, %v1590
      %v1623 = vsel %vm1559, %v1513, %v1591
      %v1624 = vsel %vm1560, %v1518, %v1592
      %v1625 = vsel %vm1561, %v1523, %v1593
      %v1626 = vsel %vm1562, %v1528, %v1594
      %1627 = vst.msk [vmem:[%s313 + $0x1] sm:$0xff] %vm171, %v1595
      %1628 = vst.msk [vmem:[%s313 + $0x9] sm:$0xff] %vm171, %v1596
      %1629 = vst.msk [vmem:[%s313 + $0x19] sm:$0xff] %vm171, %v1597
      %1630 = vst.msk [vmem:[%s313 + $0x21] sm:$0xff] %vm171, %v1598
      %1631 = vst.msk [vmem:[%s313 + $0x31] sm:$0xff] %vm171, %v1599
      %1632 = vst.msk [vmem:[%s313 + $0x39] sm:$0xff] %vm171, %v1600
      %1633 = vst.msk [vmem:[%s313 + $0x49] sm:$0xff] %vm171, %v1601
      %1634 = vst.msk [vmem:[%s313 + $0x51] sm:$0xff] %vm171, %v1602
      %1635 = vst.msk [vmem:[%s313 + $0x61] sm:$0xff] %vm171, %v1603
      %1636 = vst.msk [vmem:[%s313 + $0x69] sm:$0xff] %vm171, %v1604
      %1637 = vst.msk [vmem:[%s313 + $0x79] sm:$0xff] %vm171, %v1605
      %1638 = vst.msk [vmem:[%s313 + $0x81] sm:$0xff] %vm171, %v1606
      %1639 = vst.msk [vmem:[%s313 + $0x91] sm:$0xff] %vm171, %v1607
      %1640 = vst.msk [vmem:[%s313 + $0x99] sm:$0xff] %vm171, %v1608
      %1641 = vst.msk [vmem:[%s313 + $0xa9] sm:$0xff] %vm171, %v1609
      %1642 = vst.msk [vmem:[%s313 + $0xb1] sm:$0xff] %vm171, %v1610
      %1643 = vst.msk [vmem:[%s313 + $0xc1] sm:$0xff] %vm171, %v1611
      %1644 = vst.msk [vmem:[%s313 + $0xc9] sm:$0xff] %vm171, %v1612
      %1645 = vst.msk [vmem:[%s313 + $0xd9] sm:$0xff] %vm171, %v1613
      %1646 = vst.msk [vmem:[%s313 + $0xe1] sm:$0xff] %vm171, %v1614
      %1647 = vst.msk [vmem:[%s313 + $0xf1] sm:$0xff] %vm171, %v1615
      %1648 = vst.msk [vmem:[%s313 + $0xf9] sm:$0xff] %vm171, %v1616
      %1649 = vst.msk [vmem:[%s313 + $0x109] sm:$0xff] %vm171, %v1617
      %1650 = vst.msk [vmem:[%s313 + $0x111] sm:$0xff] %vm171, %v1618
      %1651 = vst.msk [vmem:[%s313 + $0x121] sm:$0xff] %vm171, %v1619
      %1652 = vst.msk [vmem:[%s313 + $0x129] sm:$0xff] %vm171, %v1620
      %1653 = vst.msk [vmem:[%s313 + $0x139] sm:$0xff] %vm171, %v1621
      %1654 = vst.msk [vmem:[%s313 + $0x141] sm:$0xff] %vm171, %v1622
      %1655 = vst.msk [vmem:[%s313 + $0x151] sm:$0xff] %vm171, %v1623
      %1656 = vst.msk [vmem:[%s313 + $0x159] sm:$0xff] %vm171, %v1624
      %1657 = vst.msk [vmem:[%s313 + $0x169] sm:$0xff] %vm171, %v1625
      %1658 = vst.msk [vmem:[%s313 + $0x171] sm:$0xff] %vm171, %v1626
      %v1659 = vld [vmem:[#allocation2] sm:$0xff]
      %v1660 = vld [vmem:[#allocation2 + $0x8] sm:$0xff]
      %v1661 = vld [vmem:[#allocation2 + $0x10] sm:$0x3]
      %v1662 = vld [vmem:[#allocation2 + $0x18] sm:$0xff]
      %v1663 = vld [vmem:[#allocation2 + $0x20] sm:$0xff]
      %v1664 = vld [vmem:[#allocation2 + $0x28] sm:$0x3]
      %v1665 = vld [vmem:[#allocation2 + $0x30] sm:$0xff]
      %v1666 = vld [vmem:[#allocation2 + $0x38] sm:$0xff]
      %v1667 = vld [vmem:[#allocation2 + $0x40] sm:$0x3]
      %v1668 = vld [vmem:[#allocation2 + $0x48] sm:$0xff]
      %v1669 = vld [vmem:[#allocation2 + $0x50] sm:$0xff]
      %v1670 = vld [vmem:[#allocation2 + $0x58] sm:$0x3]
      %v1671 = vld [vmem:[#allocation2 + $0x60] sm:$0xff]
      %v1672 = vld [vmem:[#allocation2 + $0x68] sm:$0xff]
      %v1673 = vld [vmem:[#allocation2 + $0x70] sm:$0x3]
      %v1674 = vld [vmem:[#allocation2 + $0x78] sm:$0xff]
      %v1675 = vld [vmem:[#allocation2 + $0x80] sm:$0xff]
      %v1676 = vld [vmem:[#allocation2 + $0x88] sm:$0x3]
      %v1677 = vld [vmem:[#allocation2 + $0x90] sm:$0xff]
      %v1678 = vld [vmem:[#allocation2 + $0x98] sm:$0xff]
      %v1679 = vld [vmem:[#allocation2 + $0xa0] sm:$0x3]
      %v1680 = vld [vmem:[#allocation2 + $0xa8] sm:$0xff]
      %v1681 = vld [vmem:[#allocation2 + $0xb0] sm:$0xff]
      %v1682 = vld [vmem:[#allocation2 + $0xb8] sm:$0x3]
      %v1683 = vld [vmem:[#allocation2 + $0xc0] sm:$0xff]
      %v1684 = vld [vmem:[#allocation2 + $0xc8] sm:$0xff]
      %v1685 = vld [vmem:[#allocation2 + $0xd0] sm:$0x3]
      %v1686 = vld [vmem:[#allocation2 + $0xd8] sm:$0xff]
      %v1687 = vld [vmem:[#allocation2 + $0xe0] sm:$0xff]
      %v1688 = vld [vmem:[#allocation2 + $0xe8] sm:$0x3]
      %v1689 = vld [vmem:[#allocation2 + $0xf0] sm:$0xff]
      %v1690 = vld [vmem:[#allocation2 + $0xf8] sm:$0xff]
      %v1691 = vld [vmem:[#allocation2 + $0x100] sm:$0x3]
      %v1692 = vld [vmem:[#allocation2 + $0x108] sm:$0xff]
      %v1693 = vld [vmem:[#allocation2 + $0x110] sm:$0xff]
      %v1694 = vld [vmem:[#allocation2 + $0x118] sm:$0x3]
      %v1695 = vld [vmem:[#allocation2 + $0x120] sm:$0xff]
      %v1696 = vld [vmem:[#allocation2 + $0x128] sm:$0xff]
      %v1697 = vld [vmem:[#allocation2 + $0x130] sm:$0x3]
      %v1698 = vld [vmem:[#allocation2 + $0x138] sm:$0xff]
      %v1699 = vld [vmem:[#allocation2 + $0x140] sm:$0xff]
      %v1700 = vld [vmem:[#allocation2 + $0x148] sm:$0x3]
      %v1701 = vld [vmem:[#allocation2 + $0x150] sm:$0xff]
      %v1702 = vld [vmem:[#allocation2 + $0x158] sm:$0xff]
      %v1703 = vld [vmem:[#allocation2 + $0x160] sm:$0x3]
      %v1704 = vld [vmem:[#allocation2 + $0x168] sm:$0xff]
      %v1705 = vld [vmem:[#allocation2 + $0x170] sm:$0xff]
      %v1706 = vld [vmem:[#allocation2 + $0x178] sm:$0x3]
      %v1707 = vld [vmem:[#allocation2 + $0x180] sm:$0xff]
      %v1708 = vld [vmem:[#allocation2 + $0x188] sm:$0xff]
      %v1709 = vld [vmem:[#allocation2 + $0x190] sm:$0x3]
      %v1710 = vld [vmem:[#allocation2 + $0x198] sm:$0xff]
      %v1711 = vld [vmem:[#allocation2 + $0x1a0] sm:$0xff]
      %v1712 = vld [vmem:[#allocation2 + $0x1a8] sm:$0x3]
      %v1767 = vrot.slane %v1659, 1
      %v1768 = vrot.slane %v1660, 1
      %v1769 = vsel %vm454, %v1767, %v1768
      %v1770 = vrot.slane %v1661, 1
      %v1771 = vsel %vm454, %v1768, %v1770
      %v1772 = vrot.slane %v1662, 1
      %v1773 = vrot.slane %v1663, 1
      %v1774 = vsel %vm454, %v1772, %v1773
      %v1775 = vrot.slane %v1664, 1
      %v1776 = vsel %vm454, %v1773, %v1775
      %v1777 = vrot.slane %v1665, 1
      %v1778 = vrot.slane %v1666, 1
      %v1779 = vsel %vm454, %v1777, %v1778
      %v1780 = vrot.slane %v1667, 1
      %v1781 = vsel %vm454, %v1778, %v1780
      %v1782 = vrot.slane %v1668, 1
      %v1783 = vrot.slane %v1669, 1
      %v1784 = vsel %vm454, %v1782, %v1783
      %v1785 = vrot.slane %v1670, 1
      %v1786 = vsel %vm454, %v1783, %v1785
      %v1787 = vrot.slane %v1671, 1
      %v1788 = vrot.slane %v1672, 1
      %v1789 = vsel %vm454, %v1787, %v1788
      %v1790 = vrot.slane %v1673, 1
      %v1791 = vsel %vm454, %v1788, %v1790
      %v1792 = vrot.slane %v1674, 1
      %v1793 = vrot.slane %v1675, 1
      %v1794 = vsel %vm454, %v1792, %v1793
      %v1795 = vrot.slane %v1676, 1
      %v1796 = vsel %vm454, %v1793, %v1795
      %v1797 = vrot.slane %v1677, 1
      %v1798 = vrot.slane %v1678, 1
      %v1799 = vsel %vm454, %v1797, %v1798
      %v1800 = vrot.slane %v1679, 1
      %v1801 = vsel %vm454, %v1798, %v1800
      %v1802 = vrot.slane %v1680, 1
      %v1803 = vrot.slane %v1681, 1
      %v1804 = vsel %vm454, %v1802, %v1803
      %v1805 = vrot.slane %v1682, 1
      %v1806 = vsel %vm454, %v1803, %v1805
      %v1807 = vrot.slane %v1683, 1
      %v1808 = vrot.slane %v1684, 1
      %v1809 = vsel %vm454, %v1807, %v1808
      %v1810 = vrot.slane %v1685, 1
      %v1811 = vsel %vm454, %v1808, %v1810
      %v1812 = vrot.slane %v1686, 1
      %v1813 = vrot.slane %v1687, 1
      %v1814 = vsel %vm454, %v1812, %v1813
      %v1815 = vrot.slane %v1688, 1
      %v1816 = vsel %vm454, %v1813, %v1815
      %v1817 = vrot.slane %v1689, 1
      %v1818 = vrot.slane %v1690, 1
      %v1819 = vsel %vm454, %v1817, %v1818
      %v1820 = vrot.slane %v1691, 1
      %v1821 = vsel %vm454, %v1818, %v1820
      %v1822 = vrot.slane %v1692, 1
      %v1823 = vrot.slane %v1693, 1
      %v1824 = vsel %vm454, %v1822, %v1823
      %v1825 = vrot.slane %v1694, 1
      %v1826 = vsel %vm454, %v1823, %v1825
      %v1827 = vrot.slane %v1695, 1
      %v1828 = vrot.slane %v1696, 1
      %v1829 = vsel %vm454, %v1827, %v1828
      %v1830 = vrot.slane %v1697, 1
      %v1831 = vsel %vm454, %v1828, %v1830
      %v1832 = vrot.slane %v1698, 1
      %v1833 = vrot.slane %v1699, 1
      %v1834 = vsel %vm454, %v1832, %v1833
      %v1835 = vrot.slane %v1700, 1
      %v1836 = vsel %vm454, %v1833, %v1835
      %v1837 = vrot.slane %v1701, 1
      %v1838 = vrot.slane %v1702, 1
      %v1839 = vsel %vm454, %v1837, %v1838
      %v1840 = vrot.slane %v1703, 1
      %v1841 = vsel %vm454, %v1838, %v1840
      %v1842 = vrot.slane %v1704, 1
      %v1843 = vrot.slane %v1705, 1
      %v1844 = vsel %vm454, %v1842, %v1843
      %v1845 = vrot.slane %v1706, 1
      %v1846 = vsel %vm454, %v1843, %v1845
      %v1847 = vrot.slane %v1707, 1
      %v1848 = vrot.slane %v1708, 1
      %v1849 = vsel %vm454, %v1847, %v1848
      %v1850 = vrot.slane %v1709, 1
      %v1851 = vsel %vm454, %v1848, %v1850
      %v1852 = vrot.slane %v1710, 1
      %v1853 = vrot.slane %v1711, 1
      %v1854 = vsel %vm454, %v1852, %v1853
      %v1855 = vrot.slane %v1712, 1
      %v1856 = vsel %vm454, %v1853, %v1855
      %1857 = vrot.lane.b32.xlu0 %v1769, 16
      %v1858 = vpop.permute.xlu0 %1857
      %1859 = vrot.lane.b32.xlu0 %v1771, 16
      %v1860 = vpop.permute.xlu0 %1859
      %1861 = vrot.lane.b32.xlu0 %v1774, 16
      %v1862 = vpop.permute.xlu0 %1861
      %1863 = vrot.lane.b32.xlu0 %v1776, 16
      %v1864 = vpop.permute.xlu0 %1863
      %1865 = vrot.lane.b32.xlu0 %v1779, 16
      %v1866 = vpop.permute.xlu0 %1865
      %1867 = vrot.lane.b32.xlu0 %v1781, 16
      %v1868 = vpop.permute.xlu0 %1867
      %1869 = vrot.lane.b32.xlu0 %v1784, 16
      %v1870 = vpop.permute.xlu0 %1869
      %1871 = vrot.lane.b32.xlu0 %v1786, 16
      %v1872 = vpop.permute.xlu0 %1871
      %1873 = vrot.lane.b32.xlu0 %v1789, 16
      %v1874 = vpop.permute.xlu0 %1873
      %1875 = vrot.lane.b32.xlu0 %v1791, 16
      %v1876 = vpop.permute.xlu0 %1875
      %1877 = vrot.lane.b32.xlu0 %v1794, 16
      %v1878 = vpop.permute.xlu0 %1877
      %1879 = vrot.lane.b32.xlu0 %v1796, 16
      %v1880 = vpop.permute.xlu0 %1879
      %1881 = vrot.lane.b32.xlu0 %v1799, 16
      %v1882 = vpop.permute.xlu0 %1881
      %1883 = vrot.lane.b32.xlu0 %v1801, 16
      %v1884 = vpop.permute.xlu0 %1883
      %1885 = vrot.lane.b32.xlu0 %v1804, 16
      %v1886 = vpop.permute.xlu0 %1885
      %1887 = vrot.lane.b32.xlu0 %v1806, 16
      %v1888 = vpop.permute.xlu0 %1887
      %1889 = vrot.lane.b32.xlu0 %v1809, 16
      %v1890 = vpop.permute.xlu0 %1889
      %1891 = vrot.lane.b32.xlu0 %v1811, 16
      %v1892 = vpop.permute.xlu0 %1891
      %1893 = vrot.lane.b32.xlu0 %v1814, 16
      %v1894 = vpop.permute.xlu0 %1893
      %1895 = vrot.lane.b32.xlu0 %v1816, 16
      %v1896 = vpop.permute.xlu0 %1895
      %1897 = vrot.lane.b32.xlu0 %v1819, 16
      %v1898 = vpop.permute.xlu0 %1897
      %1899 = vrot.lane.b32.xlu0 %v1821, 16
      %v1900 = vpop.permute.xlu0 %1899
      %1901 = vrot.lane.b32.xlu0 %v1824, 16
      %v1902 = vpop.permute.xlu0 %1901
      %1903 = vrot.lane.b32.xlu0 %v1826, 16
      %v1904 = vpop.permute.xlu0 %1903
      %1905 = vrot.lane.b32.xlu0 %v1829, 16
      %v1906 = vpop.permute.xlu0 %1905
      %1907 = vrot.lane.b32.xlu0 %v1831, 16
      %v1908 = vpop.permute.xlu0 %1907
      %1909 = vrot.lane.b32.xlu0 %v1834, 16
      %v1910 = vpop.permute.xlu0 %1909
      %1911 = vrot.lane.b32.xlu0 %v1836, 16
      %v1912 = vpop.permute.xlu0 %1911
      %1913 = vrot.lane.b32.xlu0 %v1839, 16
      %v1914 = vpop.permute.xlu0 %1913
      %1915 = vrot.lane.b32.xlu0 %v1841, 16
      %v1916 = vpop.permute.xlu0 %1915
      %1917 = vrot.lane.b32.xlu0 %v1844, 16
      %v1918 = vpop.permute.xlu0 %1917
      %1919 = vrot.lane.b32.xlu0 %v1846, 16
      %v1920 = vpop.permute.xlu0 %1919
      %1921 = vrot.lane.b32.xlu0 %v1849, 16
      %v1922 = vpop.permute.xlu0 %1921
      %1923 = vrot.lane.b32.xlu0 %v1851, 16
      %v1924 = vpop.permute.xlu0 %1923
      %1925 = vrot.lane.b32.xlu0 %v1854, 16
      %v1926 = vpop.permute.xlu0 %1925
      %1927 = vrot.lane.b32.xlu0 %v1856, 16
      %v1928 = vpop.permute.xlu0 %1927
      %v1965 = vrot.slane %v1659, 2
      %v1966 = vrot.slane %v1660, 2
      %v1967 = vsel %vm653, %v1965, %v1966
      %v1968 = vrot.slane %v1661, 2
      %v1969 = vsel %vm653, %v1966, %v1968
      %v1970 = vrot.slane %v1662, 2
      %v1971 = vrot.slane %v1663, 2
      %v1972 = vsel %vm653, %v1970, %v1971
      %v1973 = vrot.slane %v1664, 2
      %v1974 = vsel %vm653, %v1971, %v1973
      %v1975 = vrot.slane %v1665, 2
      %v1976 = vrot.slane %v1666, 2
      %v1977 = vsel %vm653, %v1975, %v1976
      %v1978 = vrot.slane %v1667, 2
      %v1979 = vsel %vm653, %v1976, %v1978
      %v1980 = vrot.slane %v1668, 2
      %v1981 = vrot.slane %v1669, 2
      %v1982 = vsel %vm653, %v1980, %v1981
      %v1983 = vrot.slane %v1670, 2
      %v1984 = vsel %vm653, %v1981, %v1983
      %v1985 = vrot.slane %v1671, 2
      %v1986 = vrot.slane %v1672, 2
      %v1987 = vsel %vm653, %v1985, %v1986
      %v1988 = vrot.slane %v1673, 2
      %v1989 = vsel %vm653, %v1986, %v1988
      %v1990 = vrot.slane %v1674, 2
      %v1991 = vrot.slane %v1675, 2
      %v1992 = vsel %vm653, %v1990, %v1991
      %v1993 = vrot.slane %v1676, 2
      %v1994 = vsel %vm653, %v1991, %v1993
      %v1995 = vrot.slane %v1677, 2
      %v1996 = vrot.slane %v1678, 2
      %v1997 = vsel %vm653, %v1995, %v1996
      %v1998 = vrot.slane %v1679, 2
      %v1999 = vsel %vm653, %v1996, %v1998
      %v2000 = vrot.slane %v1680, 2
      %v2001 = vrot.slane %v1681, 2
      %v2002 = vsel %vm653, %v2000, %v2001
      %v2003 = vrot.slane %v1682, 2
      %v2004 = vsel %vm653, %v2001, %v2003
      %v2005 = vrot.slane %v1683, 2
      %v2006 = vrot.slane %v1684, 2
      %v2007 = vsel %vm653, %v2005, %v2006
      %v2008 = vrot.slane %v1685, 2
      %v2009 = vsel %vm653, %v2006, %v2008
      %v2010 = vrot.slane %v1686, 2
      %v2011 = vrot.slane %v1687, 2
      %v2012 = vsel %vm653, %v2010, %v2011
      %v2013 = vrot.slane %v1688, 2
      %v2014 = vsel %vm653, %v2011, %v2013
      %v2015 = vrot.slane %v1689, 2
      %v2016 = vrot.slane %v1690, 2
      %v2017 = vsel %vm653, %v2015, %v2016
      %v2018 = vrot.slane %v1691, 2
      %v2019 = vsel %vm653, %v2016, %v2018
      %v2020 = vrot.slane %v1692, 2
      %v2021 = vrot.slane %v1693, 2
      %v2022 = vsel %vm653, %v2020, %v2021
      %v2023 = vrot.slane %v1694, 2
      %v2024 = vsel %vm653, %v2021, %v2023
      %v2025 = vrot.slane %v1695, 2
      %v2026 = vrot.slane %v1696, 2
      %v2027 = vsel %vm653, %v2025, %v2026
      %v2028 = vrot.slane %v1697, 2
      %v2029 = vsel %vm653, %v2026, %v2028
      %v2030 = vrot.slane %v1698, 2
      %v2031 = vrot.slane %v1699, 2
      %v2032 = vsel %vm653, %v2030, %v2031
      %v2033 = vrot.slane %v1700, 2
      %v2034 = vsel %vm653, %v2031, %v2033
      %v2035 = vrot.slane %v1701, 2
      %v2036 = vrot.slane %v1702, 2
      %v2037 = vsel %vm653, %v2035, %v2036
      %v2038 = vrot.slane %v1703, 2
      %v2039 = vsel %vm653, %v2036, %v2038
      %v2040 = vrot.slane %v1704, 2
      %v2041 = vrot.slane %v1705, 2
      %v2042 = vsel %vm653, %v2040, %v2041
      %v2043 = vrot.slane %v1706, 2
      %v2044 = vsel %vm653, %v2041, %v2043
      %v2045 = vrot.slane %v1707, 2
      %v2046 = vrot.slane %v1708, 2
      %v2047 = vsel %vm653, %v2045, %v2046
      %v2048 = vrot.slane %v1709, 2
      %v2049 = vsel %vm653, %v2046, %v2048
      %v2050 = vrot.slane %v1710, 2
      %v2051 = vrot.slane %v1711, 2
      %v2052 = vsel %vm653, %v2050, %v2051
      %v2053 = vrot.slane %v1712, 2
      %v2054 = vsel %vm653, %v2051, %v2053
      %2055 = vrot.lane.b32.xlu0 %v1967, 32
      %v2056 = vpop.permute.xlu0 %2055
      %2057 = vrot.lane.b32.xlu0 %v1969, 32
      %v2058 = vpop.permute.xlu0 %2057
      %2059 = vrot.lane.b32.xlu0 %v1972, 32
      %v2060 = vpop.permute.xlu0 %2059
      %2061 = vrot.lane.b32.xlu0 %v1974, 32
      %v2062 = vpop.permute.xlu0 %2061
      %2063 = vrot.lane.b32.xlu0 %v1977, 32
      %v2064 = vpop.permute.xlu0 %2063
      %2065 = vrot.lane.b32.xlu0 %v1979, 32
      %v2066 = vpop.permute.xlu0 %2065
      %2067 = vrot.lane.b32.xlu0 %v1982, 32
      %v2068 = vpop.permute.xlu0 %2067
      %2069 = vrot.lane.b32.xlu0 %v1984, 32
      %v2070 = vpop.permute.xlu0 %2069
      %2071 = vrot.lane.b32.xlu0 %v1987, 32
      %v2072 = vpop.permute.xlu0 %2071
      %2073 = vrot.lane.b32.xlu0 %v1989, 32
      %v2074 = vpop.permute.xlu0 %2073
      %2075 = vrot.lane.b32.xlu0 %v1992, 32
      %v2076 = vpop.permute.xlu0 %2075
      %2077 = vrot.lane.b32.xlu0 %v1994, 32
      %v2078 = vpop.permute.xlu0 %2077
      %2079 = vrot.lane.b32.xlu0 %v1997, 32
      %v2080 = vpop.permute.xlu0 %2079
      %2081 = vrot.lane.b32.xlu0 %v1999, 32
      %v2082 = vpop.permute.xlu0 %2081
      %2083 = vrot.lane.b32.xlu0 %v2002, 32
      %v2084 = vpop.permute.xlu0 %2083
      %2085 = vrot.lane.b32.xlu0 %v2004, 32
      %v2086 = vpop.permute.xlu0 %2085
      %2087 = vrot.lane.b32.xlu0 %v2007, 32
      %v2088 = vpop.permute.xlu0 %2087
      %2089 = vrot.lane.b32.xlu0 %v2009, 32
      %v2090 = vpop.permute.xlu0 %2089
      %2091 = vrot.lane.b32.xlu0 %v2012, 32
      %v2092 = vpop.permute.xlu0 %2091
      %2093 = vrot.lane.b32.xlu0 %v2014, 32
      %v2094 = vpop.permute.xlu0 %2093
      %2095 = vrot.lane.b32.xlu0 %v2017, 32
      %v2096 = vpop.permute.xlu0 %2095
      %2097 = vrot.lane.b32.xlu0 %v2019, 32
      %v2098 = vpop.permute.xlu0 %2097
      %2099 = vrot.lane.b32.xlu0 %v2022, 32
      %v2100 = vpop.permute.xlu0 %2099
      %2101 = vrot.lane.b32.xlu0 %v2024, 32
      %v2102 = vpop.permute.xlu0 %2101
      %2103 = vrot.lane.b32.xlu0 %v2027, 32
      %v2104 = vpop.permute.xlu0 %2103
      %2105 = vrot.lane.b32.xlu0 %v2029, 32
      %v2106 = vpop.permute.xlu0 %2105
      %2107 = vrot.lane.b32.xlu0 %v2032, 32
      %v2108 = vpop.permute.xlu0 %2107
      %2109 = vrot.lane.b32.xlu0 %v2034, 32
      %v2110 = vpop.permute.xlu0 %2109
      %2111 = vrot.lane.b32.xlu0 %v2037, 32
      %v2112 = vpop.permute.xlu0 %2111
      %2113 = vrot.lane.b32.xlu0 %v2039, 32
      %v2114 = vpop.permute.xlu0 %2113
      %2115 = vrot.lane.b32.xlu0 %v2042, 32
      %v2116 = vpop.permute.xlu0 %2115
      %2117 = vrot.lane.b32.xlu0 %v2044, 32
      %v2118 = vpop.permute.xlu0 %2117
      %2119 = vrot.lane.b32.xlu0 %v2047, 32
      %v2120 = vpop.permute.xlu0 %2119
      %2121 = vrot.lane.b32.xlu0 %v2049, 32
      %v2122 = vpop.permute.xlu0 %2121
      %2123 = vrot.lane.b32.xlu0 %v2052, 32
      %v2124 = vpop.permute.xlu0 %2123
      %2125 = vrot.lane.b32.xlu0 %v2054, 32
      %v2126 = vpop.permute.xlu0 %2125
      %v2163 = vsel %vm171, %v1659, %v1858
      %v2164 = vsel %vm171, %v1660, %v1860
      %v2165 = vsel %vm171, %v1662, %v1862
      %v2166 = vsel %vm171, %v1663, %v1864
      %v2167 = vsel %vm171, %v1665, %v1866
      %v2168 = vsel %vm171, %v1666, %v1868
      %v2169 = vsel %vm171, %v1668, %v1870
      %v2170 = vsel %vm171, %v1669, %v1872
      %v2171 = vsel %vm171, %v1671, %v1874
      %v2172 = vsel %vm171, %v1672, %v1876
      %v2173 = vsel %vm171, %v1674, %v1878
      %v2174 = vsel %vm171, %v1675, %v1880
      %v2175 = vsel %vm171, %v1677, %v1882
      %v2176 = vsel %vm171, %v1678, %v1884
      %v2177 = vsel %vm171, %v1680, %v1886
      %v2178 = vsel %vm171, %v1681, %v1888
      %v2179 = vsel %vm171, %v1683, %v1890
      %v2180 = vsel %vm171, %v1684, %v1892
      %v2181 = vsel %vm171, %v1686, %v1894
      %v2182 = vsel %vm171, %v1687, %v1896
      %v2183 = vsel %vm171, %v1689, %v1898
      %v2184 = vsel %vm171, %v1690, %v1900
      %v2185 = vsel %vm171, %v1692, %v1902
      %v2186 = vsel %vm171, %v1693, %v1904
      %v2187 = vsel %vm171, %v1695, %v1906
      %v2188 = vsel %vm171, %v1696, %v1908
      %v2189 = vsel %vm171, %v1698, %v1910
      %v2190 = vsel %vm171, %v1699, %v1912
      %v2191 = vsel %vm171, %v1701, %v1914
      %v2192 = vsel %vm171, %v1702, %v1916
      %v2193 = vsel %vm171, %v1704, %v1918
      %v2194 = vsel %vm171, %v1705, %v1920
      %v2195 = vsel %vm171, %v1707, %v1922
      %v2196 = vsel %vm171, %v1708, %v1924
      %v2197 = vsel %vm171, %v1710, %v1926
      %v2198 = vsel %vm171, %v1711, %v1928
      %v2199 = vsel %vm888, %v2163, %v2056
      %v2200 = vsel %vm888, %v2164, %v2058
      %v2201 = vsel %vm888, %v2165, %v2060
      %v2202 = vsel %vm888, %v2166, %v2062
      %v2203 = vsel %vm888, %v2167, %v2064
      %v2204 = vsel %vm888, %v2168, %v2066
      %v2205 = vsel %vm888, %v2169, %v2068
      %v2206 = vsel %vm888, %v2170, %v2070
      %v2207 = vsel %vm888, %v2171, %v2072
      %v2208 = vsel %vm888, %v2172, %v2074
      %v2209 = vsel %vm888, %v2173, %v2076
      %v2210 = vsel %vm888, %v2174, %v2078
      %v2211 = vsel %vm888, %v2175, %v2080
      %v2212 = vsel %vm888, %v2176, %v2082
      %v2213 = vsel %vm888, %v2177, %v2084
      %v2214 = vsel %vm888, %v2178, %v2086
      %v2215 = vsel %vm888, %v2179, %v2088
      %v2216 = vsel %vm888, %v2180, %v2090
      %v2217 = vsel %vm888, %v2181, %v2092
      %v2218 = vsel %vm888, %v2182, %v2094
      %v2219 = vsel %vm888, %v2183, %v2096
      %v2220 = vsel %vm888, %v2184, %v2098
      %v2221 = vsel %vm888, %v2185, %v2100
      %v2222 = vsel %vm888, %v2186, %v2102
      %v2223 = vsel %vm888, %v2187, %v2104
      %v2224 = vsel %vm888, %v2188, %v2106
      %v2225 = vsel %vm888, %v2189, %v2108
      %v2226 = vsel %vm888, %v2190, %v2110
      %v2227 = vsel %vm888, %v2191, %v2112
      %v2228 = vsel %vm888, %v2192, %v2114
      %v2229 = vsel %vm888, %v2193, %v2116
      %v2230 = vsel %vm888, %v2194, %v2118
      %v2231 = vsel %vm888, %v2195, %v2120
      %v2232 = vsel %vm888, %v2196, %v2122
      %v2233 = vsel %vm888, %v2197, %v2124
      %v2234 = vsel %vm888, %v2198, %v2126
      %2267 = vrot.lane.b32.xlu0 %v2201, 48
      %v2268 = vpop.permute.xlu0 %2267
      %2269 = vrot.lane.b32.xlu0 %v2202, 48
      %v2270 = vpop.permute.xlu0 %2269
      %2271 = vrot.lane.b32.xlu0 %v2203, 48
      %v2272 = vpop.permute.xlu0 %2271
      %2273 = vrot.lane.b32.xlu0 %v2204, 48
      %v2274 = vpop.permute.xlu0 %2273
      %2275 = vrot.lane.b32.xlu0 %v2205, 48
      %v2276 = vpop.permute.xlu0 %2275
      %2277 = vrot.lane.b32.xlu0 %v2206, 48
      %v2278 = vpop.permute.xlu0 %2277
      %2279 = vrot.lane.b32.xlu0 %v2207, 48
      %v2280 = vpop.permute.xlu0 %2279
      %2281 = vrot.lane.b32.xlu0 %v2208, 48
      %v2282 = vpop.permute.xlu0 %2281
      %2283 = vrot.lane.b32.xlu0 %v2209, 48
      %v2284 = vpop.permute.xlu0 %2283
      %2285 = vrot.lane.b32.xlu0 %v2210, 48
      %v2286 = vpop.permute.xlu0 %2285
      %2287 = vrot.lane.b32.xlu0 %v2211, 48
      %v2288 = vpop.permute.xlu0 %2287
      %2289 = vrot.lane.b32.xlu0 %v2212, 48
      %v2290 = vpop.permute.xlu0 %2289
      %2291 = vrot.lane.b32.xlu0 %v2213, 48
      %v2292 = vpop.permute.xlu0 %2291
      %2293 = vrot.lane.b32.xlu0 %v2214, 48
      %v2294 = vpop.permute.xlu0 %2293
      %2295 = vrot.lane.b32.xlu0 %v2215, 48
      %v2296 = vpop.permute.xlu0 %2295
      %2297 = vrot.lane.b32.xlu0 %v2216, 48
      %v2298 = vpop.permute.xlu0 %2297
      %2299 = vrot.lane.b32.xlu0 %v2217, 48
      %v2300 = vpop.permute.xlu0 %2299
      %2301 = vrot.lane.b32.xlu0 %v2218, 48
      %v2302 = vpop.permute.xlu0 %2301
      %2303 = vrot.lane.b32.xlu0 %v2219, 48
      %v2304 = vpop.permute.xlu0 %2303
      %2305 = vrot.lane.b32.xlu0 %v2220, 48
      %v2306 = vpop.permute.xlu0 %2305
      %2307 = vrot.lane.b32.xlu0 %v2221, 48
      %v2308 = vpop.permute.xlu0 %2307
      %2309 = vrot.lane.b32.xlu0 %v2222, 48
      %v2310 = vpop.permute.xlu0 %2309
      %2311 = vrot.lane.b32.xlu0 %v2223, 48
      %v2312 = vpop.permute.xlu0 %2311
      %2313 = vrot.lane.b32.xlu0 %v2224, 48
      %v2314 = vpop.permute.xlu0 %2313
      %2315 = vrot.lane.b32.xlu0 %v2225, 48
      %v2316 = vpop.permute.xlu0 %2315
      %2317 = vrot.lane.b32.xlu0 %v2226, 48
      %v2318 = vpop.permute.xlu0 %2317
      %2319 = vrot.lane.b32.xlu0 %v2227, 48
      %v2320 = vpop.permute.xlu0 %2319
      %2321 = vrot.lane.b32.xlu0 %v2228, 48
      %v2322 = vpop.permute.xlu0 %2321
      %2323 = vrot.lane.b32.xlu0 %v2229, 48
      %v2324 = vpop.permute.xlu0 %2323
      %2325 = vrot.lane.b32.xlu0 %v2230, 48
      %v2326 = vpop.permute.xlu0 %2325
      %2327 = vrot.lane.b32.xlu0 %v2231, 48
      %v2328 = vpop.permute.xlu0 %2327
      %2329 = vrot.lane.b32.xlu0 %v2232, 48
      %v2330 = vpop.permute.xlu0 %2329
      %2365 = vrot.lane.b32.xlu0 %v2203, 96
      %v2366 = vpop.permute.xlu0 %2365
      %2367 = vrot.lane.b32.xlu0 %v2204, 96
      %v2368 = vpop.permute.xlu0 %2367
      %2369 = vrot.lane.b32.xlu0 %v2205, 96
      %v2370 = vpop.permute.xlu0 %2369
      %2371 = vrot.lane.b32.xlu0 %v2206, 96
      %v2372 = vpop.permute.xlu0 %2371
      %2373 = vrot.lane.b32.xlu0 %v2207, 96
      %v2374 = vpop.permute.xlu0 %2373
      %2375 = vrot.lane.b32.xlu0 %v2208, 96
      %v2376 = vpop.permute.xlu0 %2375
      %2377 = vrot.lane.b32.xlu0 %v2209, 96
      %v2378 = vpop.permute.xlu0 %2377
      %2379 = vrot.lane.b32.xlu0 %v2210, 96
      %v2380 = vpop.permute.xlu0 %2379
      %2381 = vrot.lane.b32.xlu0 %v2211, 96
      %v2382 = vpop.permute.xlu0 %2381
      %2383 = vrot.lane.b32.xlu0 %v2212, 96
      %v2384 = vpop.permute.xlu0 %2383
      %2385 = vrot.lane.b32.xlu0 %v2213, 96
      %v2386 = vpop.permute.xlu0 %2385
      %2387 = vrot.lane.b32.xlu0 %v2214, 96
      %v2388 = vpop.permute.xlu0 %2387
      %2389 = vrot.lane.b32.xlu0 %v2215, 96
      %v2390 = vpop.permute.xlu0 %2389
      %2391 = vrot.lane.b32.xlu0 %v2216, 96
      %v2392 = vpop.permute.xlu0 %2391
      %2393 = vrot.lane.b32.xlu0 %v2217, 96
      %v2394 = vpop.permute.xlu0 %2393
      %2395 = vrot.lane.b32.xlu0 %v2218, 96
      %v2396 = vpop.permute.xlu0 %2395
      %2397 = vrot.lane.b32.xlu0 %v2219, 96
      %v2398 = vpop.permute.xlu0 %2397
      %2399 = vrot.lane.b32.xlu0 %v2220, 96
      %v2400 = vpop.permute.xlu0 %2399
      %2401 = vrot.lane.b32.xlu0 %v2221, 96
      %v2402 = vpop.permute.xlu0 %2401
      %2403 = vrot.lane.b32.xlu0 %v2222, 96
      %v2404 = vpop.permute.xlu0 %2403
      %2405 = vrot.lane.b32.xlu0 %v2223, 96
      %v2406 = vpop.permute.xlu0 %2405
      %2407 = vrot.lane.b32.xlu0 %v2224, 96
      %v2408 = vpop.permute.xlu0 %2407
      %2409 = vrot.lane.b32.xlu0 %v2225, 96
      %v2410 = vpop.permute.xlu0 %2409
      %2411 = vrot.lane.b32.xlu0 %v2226, 96
      %v2412 = vpop.permute.xlu0 %2411
      %2413 = vrot.lane.b32.xlu0 %v2227, 96
      %v2414 = vpop.permute.xlu0 %2413
      %2415 = vrot.lane.b32.xlu0 %v2228, 96
      %v2416 = vpop.permute.xlu0 %2415
      %2417 = vrot.lane.b32.xlu0 %v2229, 96
      %v2418 = vpop.permute.xlu0 %2417
      %2419 = vrot.lane.b32.xlu0 %v2230, 96
      %v2420 = vpop.permute.xlu0 %2419
      %2421 = vrot.lane.b32.xlu0 %v2231, 96
      %v2422 = vpop.permute.xlu0 %2421
      %2423 = vrot.lane.b32.xlu0 %v2232, 96
      %v2424 = vpop.permute.xlu0 %2423
      %2425 = vrot.lane.b32.xlu0 %v2233, 96
      %v2426 = vpop.permute.xlu0 %2425
      %2427 = vrot.lane.b32.xlu0 %v2234, 96
      %v2428 = vpop.permute.xlu0 %2427
      %v2461 = vsel %vm1151, %v2199, %v2268
      %v2462 = vsel %vm1151, %v2200, %v2270
      %v2463 = vsel %vm1151, %v2201, %v2272
      %v2464 = vsel %vm1151, %v2202, %v2274
      %v2465 = vsel %vm1151, %v2203, %v2276
      %v2466 = vsel %vm1151, %v2204, %v2278
      %v2467 = vsel %vm1151, %v2205, %v2280
      %v2468 = vsel %vm1151, %v2206, %v2282
      %v2469 = vsel %vm1151, %v2207, %v2284
      %v2470 = vsel %vm1151, %v2208, %v2286
      %v2471 = vsel %vm1151, %v2209, %v2288
      %v2472 = vsel %vm1151, %v2210, %v2290
      %v2473 = vsel %vm1151, %v2211, %v2292
      %v2474 = vsel %vm1151, %v2212, %v2294
      %v2475 = vsel %vm1151, %v2213, %v2296
      %v2476 = vsel %vm1151, %v2214, %v2298
      %v2477 = vsel %vm1151, %v2215, %v2300
      %v2478 = vsel %vm1151, %v2216, %v2302
      %v2479 = vsel %vm1151, %v2217, %v2304
      %v2480 = vsel %vm1151, %v2218, %v2306
      %v2481 = vsel %vm1151, %v2219, %v2308
      %v2482 = vsel %vm1151, %v2220, %v2310
      %v2483 = vsel %vm1151, %v2221, %v2312
      %v2484 = vsel %vm1151, %v2222, %v2314
      %v2485 = vsel %vm1151, %v2223, %v2316
      %v2486 = vsel %vm1151, %v2224, %v2318
      %v2487 = vsel %vm1151, %v2225, %v2320
      %v2488 = vsel %vm1151, %v2226, %v2322
      %v2489 = vsel %vm1151, %v2227, %v2324
      %v2490 = vsel %vm1151, %v2228, %v2326
      %v2491 = vsel %vm1151, %v2229, %v2328
      %v2492 = vsel %vm1151, %v2230, %v2330
      %v2493 = vsel %vm1184, %v2461, %v2366
      %v2494 = vsel %vm1184, %v2462, %v2368
      %v2495 = vsel %vm1184, %v2463, %v2370
      %v2496 = vsel %vm1184, %v2464, %v2372
      %v2497 = vsel %vm1184, %v2465, %v2374
      %v2498 = vsel %vm1184, %v2466, %v2376
      %v2499 = vsel %vm1184, %v2467, %v2378
      %v2500 = vsel %vm1184, %v2468, %v2380
      %v2501 = vsel %vm1184, %v2469, %v2382
      %v2502 = vsel %vm1184, %v2470, %v2384
      %v2503 = vsel %vm1184, %v2471, %v2386
      %v2504 = vsel %vm1184, %v2472, %v2388
      %v2505 = vsel %vm1184, %v2473, %v2390
      %v2506 = vsel %vm1184, %v2474, %v2392
      %v2507 = vsel %vm1184, %v2475, %v2394
      %v2508 = vsel %vm1184, %v2476, %v2396
      %v2509 = vsel %vm1184, %v2477, %v2398
      %v2510 = vsel %vm1184, %v2478, %v2400
      %v2511 = vsel %vm1184, %v2479, %v2402
      %v2512 = vsel %vm1184, %v2480, %v2404
      %v2513 = vsel %vm1184, %v2481, %v2406
      %v2514 = vsel %vm1184, %v2482, %v2408
      %v2515 = vsel %vm1184, %v2483, %v2410
      %v2516 = vsel %vm1184, %v2484, %v2412
      %v2517 = vsel %vm1184, %v2485, %v2414
      %v2518 = vsel %vm1184, %v2486, %v2416
      %v2519 = vsel %vm1184, %v2487, %v2418
      %v2520 = vsel %vm1184, %v2488, %v2420
      %v2521 = vsel %vm1184, %v2489, %v2422
      %v2522 = vsel %vm1184, %v2490, %v2424
      %v2523 = vsel %vm1184, %v2491, %v2426
      %v2524 = vsel %vm1184, %v2492, %v2428
      %s2525 = scalar_lea.vmem %s1, 144
      %v2526 = vld [vmem:[%s2525] sm:$0xff]
      %v2527 = vld [vmem:[%s2525 + $0x8] sm:$0xff]
      %v2528 = vld [vmem:[%s2525 + $0x10] sm:$0xff]
      %v2529 = vld [vmem:[%s2525 + $0x18] sm:$0xff]
      %v2530 = vld [vmem:[%s2525 + $0x20] sm:$0xff]
      %v2531 = vld [vmem:[%s2525 + $0x28] sm:$0xff]
      %v2532 = vld [vmem:[%s2525 + $0x30] sm:$0xff]
      %v2533 = vld [vmem:[%s2525 + $0x38] sm:$0xff]
      %v2534 = vld [vmem:[%s2525 + $0x40] sm:$0xff]
      %v2535 = vld [vmem:[%s2525 + $0x48] sm:$0xff]
      %v2536 = vld [vmem:[%s2525 + $0x50] sm:$0xff]
      %v2537 = vld [vmem:[%s2525 + $0x58] sm:$0xff]
      %v2538 = vld [vmem:[%s2525 + $0x60] sm:$0xff]
      %v2539 = vld [vmem:[%s2525 + $0x68] sm:$0xff]
      %v2540 = vld [vmem:[%s2525 + $0x70] sm:$0xff]
      %v2541 = vld [vmem:[%s2525 + $0x78] sm:$0xff]
      %v2542 = vld [vmem:[%s2525 + $0x80] sm:$0xff]
      %v2543 = vld [vmem:[%s2525 + $0x88] sm:$0xff]
      %s2544 = scalar_lea.vmem %s2, 1
      %v2545 = vld [vmem:[%s2544] sm:$0x1]
      %v2547 = vlaneseq
      %v2548 = vshrl.u32 %v2547, 7
      %v2549 = vsub.s32 0, %v2548
      %v2550 = vrot.slane %v2545, %v2549
      %v2552 = vsel %vm171, %v2366, 0
      %v2554 = vsel %vm171, %v2368, 0
      %v2556 = vsel %vm171, %v2370, 0
      %v2558 = vsel %vm171, %v2372, 0
      %v2560 = vsel %vm171, %v2374, 0
      %v2562 = vsel %vm171, %v2376, 0
      %v2564 = vsel %vm171, %v2378, 0
      %v2566 = vsel %vm171, %v2380, 0
      %v2568 = vsel %vm171, %v2382, 0
      %v2570 = vsel %vm171, %v2384, 0
      %v2572 = vsel %vm171, %v2386, 0
      %v2574 = vsel %vm171, %v2388, 0
      %v2576 = vsel %vm171, %v2390, 0
      %v2578 = vsel %vm171, %v2392, 0
      %v2580 = vsel %vm171, %v2394, 0
      %v2582 = vsel %vm171, %v2396, 0
      %v2584 = vsel %vm171, %v2398, 0
      %v2586 = vsel %vm171, %v2400, 0
      %v2588 = vsel %vm171, %v2402, 0
      %v2590 = vsel %vm171, %v2404, 0
      %v2592 = vsel %vm171, %v2406, 0
      %v2594 = vsel %vm171, %v2408, 0
      %v2596 = vsel %vm171, %v2410, 0
      %v2598 = vsel %vm171, %v2412, 0
      %v2600 = vsel %vm171, %v2414, 0
      %v2602 = vsel %vm171, %v2416, 0
      %v2604 = vsel %vm171, %v2418, 0
      %v2606 = vsel %vm171, %v2420, 0
      %v2608 = vsel %vm171, %v2422, 0
      %v2610 = vsel %vm171, %v2424, 0
      %v2612 = vsel %vm171, %v2426, 0
      %v2614 = vsel %vm171, %v2428, 0
      %2616 = vmatprep.subr.mxu0 0.0
      %2617 = vmatpush1.msra.mxu0 %v2541
      %2618 = vmatprep.subr.mxu0 0.0
      %2619 = vmatpush1.msra.mxu0 %v2540
      %2620 = vmatprep.subr.mxu0 0.0
      %2621 = vmatpush1.msra.mxu0 %v2539
      %2622 = vmatprep.subr.mxu0 0.0
      %2623 = vmatpush1.msra.mxu0 %v2538
      %2624 = vmatprep.subr.mxu0 0.0
      %2625 = vmatpush1.msra.mxu0 %v2537
      %2626 = vmatprep.subr.mxu0 0.0
      %2627 = vmatpush1.msra.mxu0 %v2536
      %2628 = vmatprep.subr.mxu0 0.0
      %2629 = vmatpush1.msra.mxu0 %v2535
      %2630 = vmatprep.subr.mxu0 0.0
      %2631 = vmatpush1.msra.mxu0 %v2534
      %2632 = vmatprep.subr.mxu0 0.0
      %2633 = vmatpush1.msra.mxu0 %v2533
      %2634 = vmatprep.subr.mxu0 0.0
      %2635 = vmatpush1.msra.mxu0 %v2532
      %2636 = vmatprep.subr.mxu0 0.0
      %2637 = vmatpush1.msra.mxu0 %v2531
      %2638 = vmatprep.subr.mxu0 0.0
      %2639 = vmatpush1.msra.mxu0 %v2530
      %2640 = vmatprep.subr.mxu0 0.0
      %2641 = vmatpush1.msra.mxu0 %v2529
      %2642 = vmatprep.subr.mxu0 0.0
      %2643 = vmatpush1.msra.mxu0 %v2528
      %2644 = vmatprep.subr.mxu0 0.0
      %2645 = vmatpush1.msra.mxu0 %v2527
      %2646 = vmatprep.subr.mxu0 0.0
      %2647 = vmatpush1.msra.mxu0 %v2526
      %2648 = vmatprep.subr.mxu0 0.0
      %2649 = vmatpush2.msra.mxu0 0.0
      %2650 = vmatprep.subr.mxu0 0.0
      %2651 = vmatpush2.msra.mxu0 0.0
      %2652 = vmatprep.subr.mxu0 0.0
      %2653 = vmatpush2.msra.mxu0 0.0
      %2654 = vmatprep.subr.mxu0 0.0
      %2655 = vmatpush2.msra.mxu0 0.0
      %2656 = vmatprep.subr.mxu0 0.0
      %2657 = vmatpush2.msra.mxu0 0.0
      %2658 = vmatprep.subr.mxu0 0.0
      %2659 = vmatpush2.msra.mxu0 0.0
      %2660 = vmatprep.subr.mxu0 0.0
      %2661 = vmatpush2.msra.mxu0 0.0
      %2662 = vmatprep.subr.mxu0 0.0
      %2663 = vmatpush2.msra.mxu0 0.0
      %2664 = vmatprep.subr.mxu0 0.0
      %2665 = vmatpush2.msra.mxu0 0.0
      %2666 = vmatprep.subr.mxu0 0.0
      %2667 = vmatpush2.msra.mxu0 0.0
      %2668 = vmatprep.subr.mxu0 0.0
      %2669 = vmatpush2.msra.mxu0 0.0
      %2670 = vmatprep.subr.mxu0 0.0
      %2671 = vmatpush2.msra.mxu0 0.0
      %2672 = vmatprep.subr.mxu0 0.0
      %2673 = vmatpush2.msra.mxu0 0.0
      %2674 = vmatprep.subr.mxu0 0.0
      %2675 = vmatpush2.msra.mxu0 0.0
      %2676 = vmatprep.subr.mxu0 0.0
      %2677 = vmatpush2.msra.mxu0 %v2543
      %2678 = vmatprep.subr.mxu0 0.0
      %2679 = vmatpush2.msra.mxu0 %v2542
      %2680 = vmatprep.mubr.f32.mxu0 %v2552
      %2681 = vmatmul.mubr.f32.gmra.mxu0 %v2493
      %v2682 = vpop.f32.mrf.mxu0
      %v2683 = vadd.f32 %v2550, %v2682
      %v2684 = vpop.f32.mrf.mxu0
      %2685 = vmatprep.mubr.f32.mxu0 %v2554
      %2686 = vmatmul.mubr.f32.gmra.mxu0 %v2494
      %v2687 = vpop.f32.mrf.mxu0
      %v2688 = vadd.f32 %v2550, %v2687
      %v2689 = vpop.f32.mrf.mxu0
      %2690 = vmatprep.mubr.f32.mxu0 %v2556
      %2691 = vmatmul.mubr.f32.gmra.mxu0 %v2495
      %v2692 = vpop.f32.mrf.mxu0
      %v2693 = vadd.f32 %v2550, %v2692
      %v2694 = vpop.f32.mrf.mxu0
      %2695 = vmatprep.mubr.f32.mxu0 %v2558
      %2696 = vmatmul.mubr.f32.gmra.mxu0 %v2496
      %v2697 = vpop.f32.mrf.mxu0
      %v2698 = vadd.f32 %v2550, %v2697
      %v2699 = vpop.f32.mrf.mxu0
      %2700 = vmatprep.mubr.f32.mxu0 %v2560
      %2701 = vmatmul.mubr.f32.gmra.mxu0 %v2497
      %v2702 = vpop.f32.mrf.mxu0
      %v2703 = vadd.f32 %v2550, %v2702
      %v2704 = vpop.f32.mrf.mxu0
      %2705 = vmatprep.mubr.f32.mxu0 %v2562
      %2706 = vmatmul.mubr.f32.gmra.mxu0 %v2498
      %v2707 = vpop.f32.mrf.mxu0
      %v2708 = vadd.f32 %v2550, %v2707
      %v2709 = vpop.f32.mrf.mxu0
      %2710 = vmatprep.mubr.f32.mxu0 %v2564
      %2711 = vmatmul.mubr.f32.gmra.mxu0 %v2499
      %v2712 = vpop.f32.mrf.mxu0
      %v2713 = vadd.f32 %v2550, %v2712
      %v2714 = vpop.f32.mrf.mxu0
      %2715 = vmatprep.mubr.f32.mxu0 %v2566
      %2716 = vmatmul.mubr.f32.gmra.mxu0 %v2500
      %v2717 = vpop.f32.mrf.mxu0
      %v2718 = vadd.f32 %v2550, %v2717
      %v2719 = vpop.f32.mrf.mxu0
      %2720 = vmatprep.mubr.f32.mxu0 %v2568
      %2721 = vmatmul.mubr.f32.gmra.mxu0 %v2501
      %v2722 = vpop.f32.mrf.mxu0
      %v2723 = vadd.f32 %v2550, %v2722
      %v2724 = vpop.f32.mrf.mxu0
      %2725 = vmatprep.mubr.f32.mxu0 %v2570
      %2726 = vmatmul.mubr.f32.gmra.mxu0 %v2502
      %v2727 = vpop.f32.mrf.mxu0
      %v2728 = vadd.f32 %v2550, %v2727
      %v2729 = vpop.f32.mrf.mxu0
      %2730 = vmatprep.mubr.f32.mxu0 %v2572
      %2731 = vmatmul.mubr.f32.gmra.mxu0 %v2503
      %v2732 = vpop.f32.mrf.mxu0
      %v2733 = vadd.f32 %v2550, %v2732
      %v2734 = vpop.f32.mrf.mxu0
      %2735 = vmatprep.mubr.f32.mxu0 %v2574
      %2736 = vmatmul.mubr.f32.gmra.mxu0 %v2504
      %v2737 = vpop.f32.mrf.mxu0
      %v2738 = vadd.f32 %v2550, %v2737
      %v2739 = vpop.f32.mrf.mxu0
      %2740 = vmatprep.mubr.f32.mxu0 %v2576
      %2741 = vmatmul.mubr.f32.gmra.mxu0 %v2505
      %v2742 = vpop.f32.mrf.mxu0
      %v2743 = vadd.f32 %v2550, %v2742
      %v2744 = vpop.f32.mrf.mxu0
      %2745 = vmatprep.mubr.f32.mxu0 %v2578
      %2746 = vmatmul.mubr.f32.gmra.mxu0 %v2506
      %v2747 = vpop.f32.mrf.mxu0
      %v2748 = vadd.f32 %v2550, %v2747
      %v2749 = vpop.f32.mrf.mxu0
      %2750 = vmatprep.mubr.f32.mxu0 %v2580
      %2751 = vmatmul.mubr.f32.gmra.mxu0 %v2507
      %v2752 = vpop.f32.mrf.mxu0
      %v2753 = vadd.f32 %v2550, %v2752
      %v2754 = vpop.f32.mrf.mxu0
      %2755 = vmatprep.mubr.f32.mxu0 %v2582
      %2756 = vmatmul.mubr.f32.gmra.mxu0 %v2508
      %v2757 = vpop.f32.mrf.mxu0
      %v2758 = vadd.f32 %v2550, %v2757
      %v2759 = vpop.f32.mrf.mxu0
      %2760 = vmatprep.mubr.f32.mxu0 %v2584
      %2761 = vmatmul.mubr.f32.gmra.mxu0 %v2509
      %v2762 = vpop.f32.mrf.mxu0
      %v2763 = vadd.f32 %v2550, %v2762
      %v2764 = vpop.f32.mrf.mxu0
      %2765 = vmatprep.mubr.f32.mxu0 %v2586
      %2766 = vmatmul.mubr.f32.gmra.mxu0 %v2510
      %v2767 = vpop.f32.mrf.mxu0
      %v2768 = vadd.f32 %v2550, %v2767
      %v2769 = vpop.f32.mrf.mxu0
      %2770 = vmatprep.mubr.f32.mxu0 %v2588
      %2771 = vmatmul.mubr.f32.gmra.mxu0 %v2511
      %v2772 = vpop.f32.mrf.mxu0
      %v2773 = vadd.f32 %v2550, %v2772
      %v2774 = vpop.f32.mrf.mxu0
      %2775 = vmatprep.mubr.f32.mxu0 %v2590
      %2776 = vmatmul.mubr.f32.gmra.mxu0 %v2512
      %v2777 = vpop.f32.mrf.mxu0
      %v2778 = vadd.f32 %v2550, %v2777
      %v2779 = vpop.f32.mrf.mxu0
      %2780 = vmatprep.mubr.f32.mxu0 %v2592
      %2781 = vmatmul.mubr.f32.gmra.mxu0 %v2513
      %v2782 = vpop.f32.mrf.mxu0
      %v2783 = vadd.f32 %v2550, %v2782
      %v2784 = vpop.f32.mrf.mxu0
      %2785 = vmatprep.mubr.f32.mxu0 %v2594
      %2786 = vmatmul.mubr.f32.gmra.mxu0 %v2514
      %v2787 = vpop.f32.mrf.mxu0
      %v2788 = vadd.f32 %v2550, %v2787
      %v2789 = vpop.f32.mrf.mxu0
      %2790 = vmatprep.mubr.f32.mxu0 %v2596
      %2791 = vmatmul.mubr.f32.gmra.mxu0 %v2515
      %v2792 = vpop.f32.mrf.mxu0
      %v2793 = vadd.f32 %v2550, %v2792
      %v2794 = vpop.f32.mrf.mxu0
      %2795 = vmatprep.mubr.f32.mxu0 %v2598
      %2796 = vmatmul.mubr.f32.gmra.mxu0 %v2516
      %v2797 = vpop.f32.mrf.mxu0
      %v2798 = vadd.f32 %v2550, %v2797
      %v2799 = vpop.f32.mrf.mxu0
      %2800 = vmatprep.mubr.f32.mxu0 %v2600
      %2801 = vmatmul.mubr.f32.gmra.mxu0 %v2517
      %v2802 = vpop.f32.mrf.mxu0
      %v2803 = vadd.f32 %v2550, %v2802
      %v2804 = vpop.f32.mrf.mxu0
      %2805 = vmatprep.mubr.f32.mxu0 %v2602
      %2806 = vmatmul.mubr.f32.gmra.mxu0 %v2518
      %v2807 = vpop.f32.mrf.mxu0
      %v2808 = vadd.f32 %v2550, %v2807
      %v2809 = vpop.f32.mrf.mxu0
      %2810 = vmatprep.mubr.f32.mxu0 %v2604
      %2811 = vmatmul.mubr.f32.gmra.mxu0 %v2519
      %v2812 = vpop.f32.mrf.mxu0
      %v2813 = vadd.f32 %v2550, %v2812
      %v2814 = vpop.f32.mrf.mxu0
      %2815 = vmatprep.mubr.f32.mxu0 %v2606
      %2816 = vmatmul.mubr.f32.gmra.mxu0 %v2520
      %v2817 = vpop.f32.mrf.mxu0
      %v2818 = vadd.f32 %v2550, %v2817
      %v2819 = vpop.f32.mrf.mxu0
      %2820 = vmatprep.mubr.f32.mxu0 %v2608
      %2821 = vmatmul.mubr.f32.gmra.mxu0 %v2521
      %v2822 = vpop.f32.mrf.mxu0
      %v2823 = vadd.f32 %v2550, %v2822
      %v2824 = vpop.f32.mrf.mxu0
      %2825 = vmatprep.mubr.f32.mxu0 %v2610
      %2826 = vmatmul.mubr.f32.gmra.mxu0 %v2522
      %v2827 = vpop.f32.mrf.mxu0
      %v2828 = vadd.f32 %v2550, %v2827
      %v2829 = vpop.f32.mrf.mxu0
      %2830 = vmatprep.mubr.f32.mxu0 %v2612
      %2831 = vmatmul.mubr.f32.gmra.mxu0 %v2523
      %v2832 = vpop.f32.mrf.mxu0
      %v2833 = vadd.f32 %v2550, %v2832
      %v2834 = vpop.f32.mrf.mxu0
      %2835 = vmatprep.mubr.f32.mxu0 %v2614
      %2836 = vmatmul.mubr.f32.gmra.mxu0 %v2524
      %v2837 = vpop.f32.mrf.mxu0
      %v2838 = vadd.f32 %v2550, %v2837
      %v2839 = vpop.f32.mrf.mxu0
      %2840 = vdwg.mxu0
      %v2841 = vmax.f32 %v2683, 0.0
      %v2842 = vmax.f32 %v2688, 0.0
      %v2843 = vmax.f32 %v2693, 0.0
      %v2844 = vmax.f32 %v2698, 0.0
      %v2845 = vmax.f32 %v2703, 0.0
      %v2846 = vmax.f32 %v2708, 0.0
      %v2847 = vmax.f32 %v2713, 0.0
      %v2848 = vmax.f32 %v2718, 0.0
      %v2849 = vmax.f32 %v2723, 0.0
      %v2850 = vmax.f32 %v2728, 0.0
      %v2851 = vmax.f32 %v2733, 0.0
      %v2852 = vmax.f32 %v2738, 0.0
      %v2853 = vmax.f32 %v2743, 0.0
      %v2854 = vmax.f32 %v2748, 0.0
      %v2855 = vmax.f32 %v2753, 0.0
      %v2856 = vmax.f32 %v2758, 0.0
      %v2857 = vmax.f32 %v2763, 0.0
      %v2858 = vmax.f32 %v2768, 0.0
      %v2859 = vmax.f32 %v2773, 0.0
      %v2860 = vmax.f32 %v2778, 0.0
      %v2861 = vmax.f32 %v2783, 0.0
      %v2862 = vmax.f32 %v2788, 0.0
      %v2863 = vmax.f32 %v2793, 0.0
      %v2864 = vmax.f32 %v2798, 0.0
      %v2865 = vmax.f32 %v2803, 0.0
      %v2866 = vmax.f32 %v2808, 0.0
      %v2867 = vmax.f32 %v2813, 0.0
      %v2868 = vmax.f32 %v2818, 0.0
      %v2869 = vmax.f32 %v2823, 0.0
      %v2870 = vmax.f32 %v2828, 0.0
      %v2871 = vmax.f32 %v2833, 0.0
      %v2872 = vmax.f32 %v2838, 0.0
      %s2873 = scalar_lea.vmem [#allocation3], 24
      %2874 = vst.msk [vmem:[%s2873 + $0x1] sm:$0xff] %vm171, %v2841
      %2875 = vst.msk [vmem:[%s2873 + $0x9] sm:$0xff] %vm171, %v2842
      %2876 = vst.msk [vmem:[%s2873 + $0x19] sm:$0xff] %vm171, %v2843
      %2877 = vst.msk [vmem:[%s2873 + $0x21] sm:$0xff] %vm171, %v2844
      %2878 = vst.msk [vmem:[%s2873 + $0x31] sm:$0xff] %vm171, %v2845
      %2879 = vst.msk [vmem:[%s2873 + $0x39] sm:$0xff] %vm171, %v2846
      %2880 = vst.msk [vmem:[%s2873 + $0x49] sm:$0xff] %vm171, %v2847
      %2881 = vst.msk [vmem:[%s2873 + $0x51] sm:$0xff] %vm171, %v2848
      %2882 = vst.msk [vmem:[%s2873 + $0x61] sm:$0xff] %vm171, %v2849
      %2883 = vst.msk [vmem:[%s2873 + $0x69] sm:$0xff] %vm171, %v2850
      %2884 = vst.msk [vmem:[%s2873 + $0x79] sm:$0xff] %vm171, %v2851
      %2885 = vst.msk [vmem:[%s2873 + $0x81] sm:$0xff] %vm171, %v2852
      %2886 = vst.msk [vmem:[%s2873 + $0x91] sm:$0xff] %vm171, %v2853
      %2887 = vst.msk [vmem:[%s2873 + $0x99] sm:$0xff] %vm171, %v2854
      %2888 = vst.msk [vmem:[%s2873 + $0xa9] sm:$0xff] %vm171, %v2855
      %2889 = vst.msk [vmem:[%s2873 + $0xb1] sm:$0xff] %vm171, %v2856
      %2890 = vst.msk [vmem:[%s2873 + $0xc1] sm:$0xff] %vm171, %v2857
      %2891 = vst.msk [vmem:[%s2873 + $0xc9] sm:$0xff] %vm171, %v2858
      %2892 = vst.msk [vmem:[%s2873 + $0xd9] sm:$0xff] %vm171, %v2859
      %2893 = vst.msk [vmem:[%s2873 + $0xe1] sm:$0xff] %vm171, %v2860
      %2894 = vst.msk [vmem:[%s2873 + $0xf1] sm:$0xff] %vm171, %v2861
      %2895 = vst.msk [vmem:[%s2873 + $0xf9] sm:$0xff] %vm171, %v2862
      %2896 = vst.msk [vmem:[%s2873 + $0x109] sm:$0xff] %vm171, %v2863
      %2897 = vst.msk [vmem:[%s2873 + $0x111] sm:$0xff] %vm171, %v2864
      %2898 = vst.msk [vmem:[%s2873 + $0x121] sm:$0xff] %vm171, %v2865
      %2899 = vst.msk [vmem:[%s2873 + $0x129] sm:$0xff] %vm171, %v2866
      %2900 = vst.msk [vmem:[%s2873 + $0x139] sm:$0xff] %vm171, %v2867
      %2901 = vst.msk [vmem:[%s2873 + $0x141] sm:$0xff] %vm171, %v2868
      %2902 = vst.msk [vmem:[%s2873 + $0x151] sm:$0xff] %vm171, %v2869
      %2903 = vst.msk [vmem:[%s2873 + $0x159] sm:$0xff] %vm171, %v2870
      %2904 = vst.msk [vmem:[%s2873 + $0x169] sm:$0xff] %vm171, %v2871
      %2905 = vst.msk [vmem:[%s2873 + $0x171] sm:$0xff] %vm171, %v2872
      %v2906 = vld [vmem:[#allocation3] sm:$0xff]
      %v2907 = vld [vmem:[#allocation3 + $0x8] sm:$0xff]
      %v2908 = vld [vmem:[#allocation3 + $0x10] sm:$0x3]
      %v2909 = vld [vmem:[#allocation3 + $0x18] sm:$0xff]
      %v2910 = vld [vmem:[#allocation3 + $0x20] sm:$0xff]
      %v2911 = vld [vmem:[#allocation3 + $0x28] sm:$0x3]
      %v2912 = vld [vmem:[#allocation3 + $0x30] sm:$0xff]
      %v2913 = vld [vmem:[#allocation3 + $0x38] sm:$0xff]
      %v2914 = vld [vmem:[#allocation3 + $0x40] sm:$0x3]
      %v2915 = vld [vmem:[#allocation3 + $0x48] sm:$0xff]
      %v2916 = vld [vmem:[#allocation3 + $0x50] sm:$0xff]
      %v2917 = vld [vmem:[#allocation3 + $0x58] sm:$0x3]
      %v2918 = vld [vmem:[#allocation3 + $0x60] sm:$0xff]
      %v2919 = vld [vmem:[#allocation3 + $0x68] sm:$0xff]
      %v2920 = vld [vmem:[#allocation3 + $0x70] sm:$0x3]
      %v2921 = vld [vmem:[#allocation3 + $0x78] sm:$0xff]
      %v2922 = vld [vmem:[#allocation3 + $0x80] sm:$0xff]
      %v2923 = vld [vmem:[#allocation3 + $0x88] sm:$0x3]
      %v2924 = vld [vmem:[#allocation3 + $0x90] sm:$0xff]
      %v2925 = vld [vmem:[#allocation3 + $0x98] sm:$0xff]
      %v2926 = vld [vmem:[#allocation3 + $0xa0] sm:$0x3]
      %v2927 = vld [vmem:[#allocation3 + $0xa8] sm:$0xff]
      %v2928 = vld [vmem:[#allocation3 + $0xb0] sm:$0xff]
      %v2929 = vld [vmem:[#allocation3 + $0xb8] sm:$0x3]
      %v2930 = vld [vmem:[#allocation3 + $0xc0] sm:$0xff]
      %v2931 = vld [vmem:[#allocation3 + $0xc8] sm:$0xff]
      %v2932 = vld [vmem:[#allocation3 + $0xd0] sm:$0x3]
      %v2933 = vld [vmem:[#allocation3 + $0xd8] sm:$0xff]
      %v2934 = vld [vmem:[#allocation3 + $0xe0] sm:$0xff]
      %v2935 = vld [vmem:[#allocation3 + $0xe8] sm:$0x3]
      %v2936 = vld [vmem:[#allocation3 + $0xf0] sm:$0xff]
      %v2937 = vld [vmem:[#allocation3 + $0xf8] sm:$0xff]
      %v2938 = vld [vmem:[#allocation3 + $0x100] sm:$0x3]
      %v2939 = vld [vmem:[#allocation3 + $0x108] sm:$0xff]
      %v2940 = vld [vmem:[#allocation3 + $0x110] sm:$0xff]
      %v2941 = vld [vmem:[#allocation3 + $0x118] sm:$0x3]
      %v2942 = vld [vmem:[#allocation3 + $0x120] sm:$0xff]
      %v2943 = vld [vmem:[#allocation3 + $0x128] sm:$0xff]
      %v2944 = vld [vmem:[#allocation3 + $0x130] sm:$0x3]
      %v2945 = vld [vmem:[#allocation3 + $0x138] sm:$0xff]
      %v2946 = vld [vmem:[#allocation3 + $0x140] sm:$0xff]
      %v2947 = vld [vmem:[#allocation3 + $0x148] sm:$0x3]
      %v2948 = vld [vmem:[#allocation3 + $0x150] sm:$0xff]
      %v2949 = vld [vmem:[#allocation3 + $0x158] sm:$0xff]
      %v2950 = vld [vmem:[#allocation3 + $0x160] sm:$0x3]
      %v2951 = vld [vmem:[#allocation3 + $0x168] sm:$0xff]
      %v2952 = vld [vmem:[#allocation3 + $0x170] sm:$0xff]
      %v2953 = vld [vmem:[#allocation3 + $0x178] sm:$0x3]
      %v2954 = vld [vmem:[#allocation3 + $0x180] sm:$0xff]
      %v2955 = vld [vmem:[#allocation3 + $0x188] sm:$0xff]
      %v2956 = vld [vmem:[#allocation3 + $0x190] sm:$0x3]
      %v2957 = vld [vmem:[#allocation3 + $0x198] sm:$0xff]
      %v2958 = vld [vmem:[#allocation3 + $0x1a0] sm:$0xff]
      %v2959 = vld [vmem:[#allocation3 + $0x1a8] sm:$0x3]
      %v3014 = vrot.slane %v2906, 1
      %v3015 = vrot.slane %v2907, 1
      %v3016 = vsel %vm454, %v3014, %v3015
      %v3017 = vrot.slane %v2908, 1
      %v3018 = vsel %vm454, %v3015, %v3017
      %v3019 = vrot.slane %v2909, 1
      %v3020 = vrot.slane %v2910, 1
      %v3021 = vsel %vm454, %v3019, %v3020
      %v3022 = vrot.slane %v2911, 1
      %v3023 = vsel %vm454, %v3020, %v3022
      %v3024 = vrot.slane %v2912, 1
      %v3025 = vrot.slane %v2913, 1
      %v3026 = vsel %vm454, %v3024, %v3025
      %v3027 = vrot.slane %v2914, 1
      %v3028 = vsel %vm454, %v3025, %v3027
      %v3029 = vrot.slane %v2915, 1
      %v3030 = vrot.slane %v2916, 1
      %v3031 = vsel %vm454, %v3029, %v3030
      %v3032 = vrot.slane %v2917, 1
      %v3033 = vsel %vm454, %v3030, %v3032
      %v3034 = vrot.slane %v2918, 1
      %v3035 = vrot.slane %v2919, 1
      %v3036 = vsel %vm454, %v3034, %v3035
      %v3037 = vrot.slane %v2920, 1
      %v3038 = vsel %vm454, %v3035, %v3037
      %v3039 = vrot.slane %v2921, 1
      %v3040 = vrot.slane %v2922, 1
      %v3041 = vsel %vm454, %v3039, %v3040
      %v3042 = vrot.slane %v2923, 1
      %v3043 = vsel %vm454, %v3040, %v3042
      %v3044 = vrot.slane %v2924, 1
      %v3045 = vrot.slane %v2925, 1
      %v3046 = vsel %vm454, %v3044, %v3045
      %v3047 = vrot.slane %v2926, 1
      %v3048 = vsel %vm454, %v3045, %v3047
      %v3049 = vrot.slane %v2927, 1
      %v3050 = vrot.slane %v2928, 1
      %v3051 = vsel %vm454, %v3049, %v3050
      %v3052 = vrot.slane %v2929, 1
      %v3053 = vsel %vm454, %v3050, %v3052
      %v3054 = vrot.slane %v2930, 1
      %v3055 = vrot.slane %v2931, 1
      %v3056 = vsel %vm454, %v3054, %v3055
      %v3057 = vrot.slane %v2932, 1
      %v3058 = vsel %vm454, %v3055, %v3057
      %v3059 = vrot.slane %v2933, 1
      %v3060 = vrot.slane %v2934, 1
      %v3061 = vsel %vm454, %v3059, %v3060
      %v3062 = vrot.slane %v2935, 1
      %v3063 = vsel %vm454, %v3060, %v3062
      %v3064 = vrot.slane %v2936, 1
      %v3065 = vrot.slane %v2937, 1
      %v3066 = vsel %vm454, %v3064, %v3065
      %v3067 = vrot.slane %v2938, 1
      %v3068 = vsel %vm454, %v3065, %v3067
      %v3069 = vrot.slane %v2939, 1
      %v3070 = vrot.slane %v2940, 1
      %v3071 = vsel %vm454, %v3069, %v3070
      %v3072 = vrot.slane %v2941, 1
      %v3073 = vsel %vm454, %v3070, %v3072
      %v3074 = vrot.slane %v2942, 1
      %v3075 = vrot.slane %v2943, 1
      %v3076 = vsel %vm454, %v3074, %v3075
      %v3077 = vrot.slane %v2944, 1
      %v3078 = vsel %vm454, %v3075, %v3077
      %v3079 = vrot.slane %v2945, 1
      %v3080 = vrot.slane %v2946, 1
      %v3081 = vsel %vm454, %v3079, %v3080
      %v3082 = vrot.slane %v2947, 1
      %v3083 = vsel %vm454, %v3080, %v3082
      %v3084 = vrot.slane %v2948, 1
      %v3085 = vrot.slane %v2949, 1
      %v3086 = vsel %vm454, %v3084, %v3085
      %v3087 = vrot.slane %v2950, 1
      %v3088 = vsel %vm454, %v3085, %v3087
      %v3089 = vrot.slane %v2951, 1
      %v3090 = vrot.slane %v2952, 1
      %v3091 = vsel %vm454, %v3089, %v3090
      %v3092 = vrot.slane %v2953, 1
      %v3093 = vsel %vm454, %v3090, %v3092
      %v3094 = vrot.slane %v2954, 1
      %v3095 = vrot.slane %v2955, 1
      %v3096 = vsel %vm454, %v3094, %v3095
      %v3097 = vrot.slane %v2956, 1
      %v3098 = vsel %vm454, %v3095, %v3097
      %v3099 = vrot.slane %v2957, 1
      %v3100 = vrot.slane %v2958, 1
      %v3101 = vsel %vm454, %v3099, %v3100
      %v3102 = vrot.slane %v2959, 1
      %v3103 = vsel %vm454, %v3100, %v3102
      %3104 = vrot.lane.b32.xlu0 %v3016, 16
      %v3105 = vpop.permute.xlu0 %3104
      %3106 = vrot.lane.b32.xlu0 %v3018, 16
      %v3107 = vpop.permute.xlu0 %3106
      %3108 = vrot.lane.b32.xlu0 %v3021, 16
      %v3109 = vpop.permute.xlu0 %3108
      %3110 = vrot.lane.b32.xlu0 %v3023, 16
      %v3111 = vpop.permute.xlu0 %3110
      %3112 = vrot.lane.b32.xlu0 %v3026, 16
      %v3113 = vpop.permute.xlu0 %3112
      %3114 = vrot.lane.b32.xlu0 %v3028, 16
      %v3115 = vpop.permute.xlu0 %3114
      %3116 = vrot.lane.b32.xlu0 %v3031, 16
      %v3117 = vpop.permute.xlu0 %3116
      %3118 = vrot.lane.b32.xlu0 %v3033, 16
      %v3119 = vpop.permute.xlu0 %3118
      %3120 = vrot.lane.b32.xlu0 %v3036, 16
      %v3121 = vpop.permute.xlu0 %3120
      %3122 = vrot.lane.b32.xlu0 %v3038, 16
      %v3123 = vpop.permute.xlu0 %3122
      %3124 = vrot.lane.b32.xlu0 %v3041, 16
      %v3125 = vpop.permute.xlu0 %3124
      %3126 = vrot.lane.b32.xlu0 %v3043, 16
      %v3127 = vpop.permute.xlu0 %3126
      %3128 = vrot.lane.b32.xlu0 %v3046, 16
      %v3129 = vpop.permute.xlu0 %3128
      %3130 = vrot.lane.b32.xlu0 %v3048, 16
      %v3131 = vpop.permute.xlu0 %3130
      %3132 = vrot.lane.b32.xlu0 %v3051, 16
      %v3133 = vpop.permute.xlu0 %3132
      %3134 = vrot.lane.b32.xlu0 %v3053, 16
      %v3135 = vpop.permute.xlu0 %3134
      %3136 = vrot.lane.b32.xlu0 %v3056, 16
      %v3137 = vpop.permute.xlu0 %3136
      %3138 = vrot.lane.b32.xlu0 %v3058, 16
      %v3139 = vpop.permute.xlu0 %3138
      %3140 = vrot.lane.b32.xlu0 %v3061, 16
      %v3141 = vpop.permute.xlu0 %3140
      %3142 = vrot.lane.b32.xlu0 %v3063, 16
      %v3143 = vpop.permute.xlu0 %3142
      %3144 = vrot.lane.b32.xlu0 %v3066, 16
      %v3145 = vpop.permute.xlu0 %3144
      %3146 = vrot.lane.b32.xlu0 %v3068, 16
      %v3147 = vpop.permute.xlu0 %3146
      %3148 = vrot.lane.b32.xlu0 %v3071, 16
      %v3149 = vpop.permute.xlu0 %3148
      %3150 = vrot.lane.b32.xlu0 %v3073, 16
      %v3151 = vpop.permute.xlu0 %3150
      %3152 = vrot.lane.b32.xlu0 %v3076, 16
      %v3153 = vpop.permute.xlu0 %3152
      %3154 = vrot.lane.b32.xlu0 %v3078, 16
      %v3155 = vpop.permute.xlu0 %3154
      %3156 = vrot.lane.b32.xlu0 %v3081, 16
      %v3157 = vpop.permute.xlu0 %3156
      %3158 = vrot.lane.b32.xlu0 %v3083, 16
      %v3159 = vpop.permute.xlu0 %3158
      %3160 = vrot.lane.b32.xlu0 %v3086, 16
      %v3161 = vpop.permute.xlu0 %3160
      %3162 = vrot.lane.b32.xlu0 %v3088, 16
      %v3163 = vpop.permute.xlu0 %3162
      %3164 = vrot.lane.b32.xlu0 %v3091, 16
      %v3165 = vpop.permute.xlu0 %3164
      %3166 = vrot.lane.b32.xlu0 %v3093, 16
      %v3167 = vpop.permute.xlu0 %3166
      %3168 = vrot.lane.b32.xlu0 %v3096, 16
      %v3169 = vpop.permute.xlu0 %3168
      %3170 = vrot.lane.b32.xlu0 %v3098, 16
      %v3171 = vpop.permute.xlu0 %3170
      %3172 = vrot.lane.b32.xlu0 %v3101, 16
      %v3173 = vpop.permute.xlu0 %3172
      %3174 = vrot.lane.b32.xlu0 %v3103, 16
      %v3175 = vpop.permute.xlu0 %3174
      %v3212 = vrot.slane %v2906, 2
      %v3213 = vrot.slane %v2907, 2
      %v3214 = vsel %vm653, %v3212, %v3213
      %v3215 = vrot.slane %v2908, 2
      %v3216 = vsel %vm653, %v3213, %v3215
      %v3217 = vrot.slane %v2909, 2
      %v3218 = vrot.slane %v2910, 2
      %v3219 = vsel %vm653, %v3217, %v3218
      %v3220 = vrot.slane %v2911, 2
      %v3221 = vsel %vm653, %v3218, %v3220
      %v3222 = vrot.slane %v2912, 2
      %v3223 = vrot.slane %v2913, 2
      %v3224 = vsel %vm653, %v3222, %v3223
      %v3225 = vrot.slane %v2914, 2
      %v3226 = vsel %vm653, %v3223, %v3225
      %v3227 = vrot.slane %v2915, 2
      %v3228 = vrot.slane %v2916, 2
      %v3229 = vsel %vm653, %v3227, %v3228
      %v3230 = vrot.slane %v2917, 2
      %v3231 = vsel %vm653, %v3228, %v3230
      %v3232 = vrot.slane %v2918, 2
      %v3233 = vrot.slane %v2919, 2
      %v3234 = vsel %vm653, %v3232, %v3233
      %v3235 = vrot.slane %v2920, 2
      %v3236 = vsel %vm653, %v3233, %v3235
      %v3237 = vrot.slane %v2921, 2
      %v3238 = vrot.slane %v2922, 2
      %v3239 = vsel %vm653, %v3237, %v3238
      %v3240 = vrot.slane %v2923, 2
      %v3241 = vsel %vm653, %v3238, %v3240
      %v3242 = vrot.slane %v2924, 2
      %v3243 = vrot.slane %v2925, 2
      %v3244 = vsel %vm653, %v3242, %v3243
      %v3245 = vrot.slane %v2926, 2
      %v3246 = vsel %vm653, %v3243, %v3245
      %v3247 = vrot.slane %v2927, 2
      %v3248 = vrot.slane %v2928, 2
      %v3249 = vsel %vm653, %v3247, %v3248
      %v3250 = vrot.slane %v2929, 2
      %v3251 = vsel %vm653, %v3248, %v3250
      %v3252 = vrot.slane %v2930, 2
      %v3253 = vrot.slane %v2931, 2
      %v3254 = vsel %vm653, %v3252, %v3253
      %v3255 = vrot.slane %v2932, 2
      %v3256 = vsel %vm653, %v3253, %v3255
      %v3257 = vrot.slane %v2933, 2
      %v3258 = vrot.slane %v2934, 2
      %v3259 = vsel %vm653, %v3257, %v3258
      %v3260 = vrot.slane %v2935, 2
      %v3261 = vsel %vm653, %v3258, %v3260
      %v3262 = vrot.slane %v2936, 2
      %v3263 = vrot.slane %v2937, 2
      %v3264 = vsel %vm653, %v3262, %v3263
      %v3265 = vrot.slane %v2938, 2
      %v3266 = vsel %vm653, %v3263, %v3265
      %v3267 = vrot.slane %v2939, 2
      %v3268 = vrot.slane %v2940, 2
      %v3269 = vsel %vm653, %v3267, %v3268
      %v3270 = vrot.slane %v2941, 2
      %v3271 = vsel %vm653, %v3268, %v3270
      %v3272 = vrot.slane %v2942, 2
      %v3273 = vrot.slane %v2943, 2
      %v3274 = vsel %vm653, %v3272, %v3273
      %v3275 = vrot.slane %v2944, 2
      %v3276 = vsel %vm653, %v3273, %v3275
      %v3277 = vrot.slane %v2945, 2
      %v3278 = vrot.slane %v2946, 2
      %v3279 = vsel %vm653, %v3277, %v3278
      %v3280 = vrot.slane %v2947, 2
      %v3281 = vsel %vm653, %v3278, %v3280
      %v3282 = vrot.slane %v2948, 2
      %v3283 = vrot.slane %v2949, 2
      %v3284 = vsel %vm653, %v3282, %v3283
      %v3285 = vrot.slane %v2950, 2
      %v3286 = vsel %vm653, %v3283, %v3285
      %v3287 = vrot.slane %v2951, 2
      %v3288 = vrot.slane %v2952, 2
      %v3289 = vsel %vm653, %v3287, %v3288
      %v3290 = vrot.slane %v2953, 2
      %v3291 = vsel %vm653, %v3288, %v3290
      %v3292 = vrot.slane %v2954, 2
      %v3293 = vrot.slane %v2955, 2
      %v3294 = vsel %vm653, %v3292, %v3293
      %v3295 = vrot.slane %v2956, 2
      %v3296 = vsel %vm653, %v3293, %v3295
      %v3297 = vrot.slane %v2957, 2
      %v3298 = vrot.slane %v2958, 2
      %v3299 = vsel %vm653, %v3297, %v3298
      %v3300 = vrot.slane %v2959, 2
      %v3301 = vsel %vm653, %v3298, %v3300
      %3302 = vrot.lane.b32.xlu0 %v3214, 32
      %v3303 = vpop.permute.xlu0 %3302
      %3304 = vrot.lane.b32.xlu0 %v3216, 32
      %v3305 = vpop.permute.xlu0 %3304
      %3306 = vrot.lane.b32.xlu0 %v3219, 32
      %v3307 = vpop.permute.xlu0 %3306
      %3308 = vrot.lane.b32.xlu0 %v3221, 32
      %v3309 = vpop.permute.xlu0 %3308
      %3310 = vrot.lane.b32.xlu0 %v3224, 32
      %v3311 = vpop.permute.xlu0 %3310
      %3312 = vrot.lane.b32.xlu0 %v3226, 32
      %v3313 = vpop.permute.xlu0 %3312
      %3314 = vrot.lane.b32.xlu0 %v3229, 32
      %v3315 = vpop.permute.xlu0 %3314
      %3316 = vrot.lane.b32.xlu0 %v3231, 32
      %v3317 = vpop.permute.xlu0 %3316
      %3318 = vrot.lane.b32.xlu0 %v3234, 32
      %v3319 = vpop.permute.xlu0 %3318
      %3320 = vrot.lane.b32.xlu0 %v3236, 32
      %v3321 = vpop.permute.xlu0 %3320
      %3322 = vrot.lane.b32.xlu0 %v3239, 32
      %v3323 = vpop.permute.xlu0 %3322
      %3324 = vrot.lane.b32.xlu0 %v3241, 32
      %v3325 = vpop.permute.xlu0 %3324
      %3326 = vrot.lane.b32.xlu0 %v3244, 32
      %v3327 = vpop.permute.xlu0 %3326
      %3328 = vrot.lane.b32.xlu0 %v3246, 32
      %v3329 = vpop.permute.xlu0 %3328
      %3330 = vrot.lane.b32.xlu0 %v3249, 32
      %v3331 = vpop.permute.xlu0 %3330
      %3332 = vrot.lane.b32.xlu0 %v3251, 32
      %v3333 = vpop.permute.xlu0 %3332
      %3334 = vrot.lane.b32.xlu0 %v3254, 32
      %v3335 = vpop.permute.xlu0 %3334
      %3336 = vrot.lane.b32.xlu0 %v3256, 32
      %v3337 = vpop.permute.xlu0 %3336
      %3338 = vrot.lane.b32.xlu0 %v3259, 32
      %v3339 = vpop.permute.xlu0 %3338
      %3340 = vrot.lane.b32.xlu0 %v3261, 32
      %v3341 = vpop.permute.xlu0 %3340
      %3342 = vrot.lane.b32.xlu0 %v3264, 32
      %v3343 = vpop.permute.xlu0 %3342
      %3344 = vrot.lane.b32.xlu0 %v3266, 32
      %v3345 = vpop.permute.xlu0 %3344
      %3346 = vrot.lane.b32.xlu0 %v3269, 32
      %v3347 = vpop.permute.xlu0 %3346
      %3348 = vrot.lane.b32.xlu0 %v3271, 32
      %v3349 = vpop.permute.xlu0 %3348
      %3350 = vrot.lane.b32.xlu0 %v3274, 32
      %v3351 = vpop.permute.xlu0 %3350
      %3352 = vrot.lane.b32.xlu0 %v3276, 32
      %v3353 = vpop.permute.xlu0 %3352
      %3354 = vrot.lane.b32.xlu0 %v3279, 32
      %v3355 = vpop.permute.xlu0 %3354
      %3356 = vrot.lane.b32.xlu0 %v3281, 32
      %v3357 = vpop.permute.xlu0 %3356
      %3358 = vrot.lane.b32.xlu0 %v3284, 32
      %v3359 = vpop.permute.xlu0 %3358
      %3360 = vrot.lane.b32.xlu0 %v3286, 32
      %v3361 = vpop.permute.xlu0 %3360
      %3362 = vrot.lane.b32.xlu0 %v3289, 32
      %v3363 = vpop.permute.xlu0 %3362
      %3364 = vrot.lane.b32.xlu0 %v3291, 32
      %v3365 = vpop.permute.xlu0 %3364
      %3366 = vrot.lane.b32.xlu0 %v3294, 32
      %v3367 = vpop.permute.xlu0 %3366
      %3368 = vrot.lane.b32.xlu0 %v3296, 32
      %v3369 = vpop.permute.xlu0 %3368
      %3370 = vrot.lane.b32.xlu0 %v3299, 32
      %v3371 = vpop.permute.xlu0 %3370
      %3372 = vrot.lane.b32.xlu0 %v3301, 32
      %v3373 = vpop.permute.xlu0 %3372
      %v3410 = vsel %vm171, %v2906, %v3105
      %v3411 = vsel %vm171, %v2907, %v3107
      %v3412 = vsel %vm171, %v2909, %v3109
      %v3413 = vsel %vm171, %v2910, %v3111
      %v3414 = vsel %vm171, %v2912, %v3113
      %v3415 = vsel %vm171, %v2913, %v3115
      %v3416 = vsel %vm171, %v2915, %v3117
      %v3417 = vsel %vm171, %v2916, %v3119
      %v3418 = vsel %vm171, %v2918, %v3121
      %v3419 = vsel %vm171, %v2919, %v3123
      %v3420 = vsel %vm171, %v2921, %v3125
      %v3421 = vsel %vm171, %v2922, %v3127
      %v3422 = vsel %vm171, %v2924, %v3129
      %v3423 = vsel %vm171, %v2925, %v3131
      %v3424 = vsel %vm171, %v2927, %v3133
      %v3425 = vsel %vm171, %v2928, %v3135
      %v3426 = vsel %vm171, %v2930, %v3137
      %v3427 = vsel %vm171, %v2931, %v3139
      %v3428 = vsel %vm171, %v2933, %v3141
      %v3429 = vsel %vm171, %v2934, %v3143
      %v3430 = vsel %vm171, %v2936, %v3145
      %v3431 = vsel %vm171, %v2937, %v3147
      %v3432 = vsel %vm171, %v2939, %v3149
      %v3433 = vsel %vm171, %v2940, %v3151
      %v3434 = vsel %vm171, %v2942, %v3153
      %v3435 = vsel %vm171, %v2943, %v3155
      %v3436 = vsel %vm171, %v2945, %v3157
      %v3437 = vsel %vm171, %v2946, %v3159
      %v3438 = vsel %vm171, %v2948, %v3161
      %v3439 = vsel %vm171, %v2949, %v3163
      %v3440 = vsel %vm171, %v2951, %v3165
      %v3441 = vsel %vm171, %v2952, %v3167
      %v3442 = vsel %vm171, %v2954, %v3169
      %v3443 = vsel %vm171, %v2955, %v3171
      %v3444 = vsel %vm171, %v2957, %v3173
      %v3445 = vsel %vm171, %v2958, %v3175
      %v3446 = vsel %vm888, %v3410, %v3303
      %v3447 = vsel %vm888, %v3411, %v3305
      %v3448 = vsel %vm888, %v3412, %v3307
      %v3449 = vsel %vm888, %v3413, %v3309
      %v3450 = vsel %vm888, %v3414, %v3311
      %v3451 = vsel %vm888, %v3415, %v3313
      %v3452 = vsel %vm888, %v3416, %v3315
      %v3453 = vsel %vm888, %v3417, %v3317
      %v3454 = vsel %vm888, %v3418, %v3319
      %v3455 = vsel %vm888, %v3419, %v3321
      %v3456 = vsel %vm888, %v3420, %v3323
      %v3457 = vsel %vm888, %v3421, %v3325
      %v3458 = vsel %vm888, %v3422, %v3327
      %v3459 = vsel %vm888, %v3423, %v3329
      %v3460 = vsel %vm888, %v3424, %v3331
      %v3461 = vsel %vm888, %v3425, %v3333
      %v3462 = vsel %vm888, %v3426, %v3335
      %v3463 = vsel %vm888, %v3427, %v3337
      %v3464 = vsel %vm888, %v3428, %v3339
      %v3465 = vsel %vm888, %v3429, %v3341
      %v3466 = vsel %vm888, %v3430, %v3343
      %v3467 = vsel %vm888, %v3431, %v3345
      %v3468 = vsel %vm888, %v3432, %v3347
      %v3469 = vsel %vm888, %v3433, %v3349
      %v3470 = vsel %vm888, %v3434, %v3351
      %v3471 = vsel %vm888, %v3435, %v3353
      %v3472 = vsel %vm888, %v3436, %v3355
      %v3473 = vsel %vm888, %v3437, %v3357
      %v3474 = vsel %vm888, %v3438, %v3359
      %v3475 = vsel %vm888, %v3439, %v3361
      %v3476 = vsel %vm888, %v3440, %v3363
      %v3477 = vsel %vm888, %v3441, %v3365
      %v3478 = vsel %vm888, %v3442, %v3367
      %v3479 = vsel %vm888, %v3443, %v3369
      %v3480 = vsel %vm888, %v3444, %v3371
      %v3481 = vsel %vm888, %v3445, %v3373
      %3514 = vrot.lane.b32.xlu0 %v3448, 48
      %v3515 = vpop.permute.xlu0 %3514
      %3516 = vrot.lane.b32.xlu0 %v3449, 48
      %v3517 = vpop.permute.xlu0 %3516
      %3518 = vrot.lane.b32.xlu0 %v3450, 48
      %v3519 = vpop.permute.xlu0 %3518
      %3520 = vrot.lane.b32.xlu0 %v3451, 48
      %v3521 = vpop.permute.xlu0 %3520
      %3522 = vrot.lane.b32.xlu0 %v3452, 48
      %v3523 = vpop.permute.xlu0 %3522
      %3524 = vrot.lane.b32.xlu0 %v3453, 48
      %v3525 = vpop.permute.xlu0 %3524
      %3526 = vrot.lane.b32.xlu0 %v3454, 48
      %v3527 = vpop.permute.xlu0 %3526
      %3528 = vrot.lane.b32.xlu0 %v3455, 48
      %v3529 = vpop.permute.xlu0 %3528
      %3530 = vrot.lane.b32.xlu0 %v3456, 48
      %v3531 = vpop.permute.xlu0 %3530
      %3532 = vrot.lane.b32.xlu0 %v3457, 48
      %v3533 = vpop.permute.xlu0 %3532
      %3534 = vrot.lane.b32.xlu0 %v3458, 48
      %v3535 = vpop.permute.xlu0 %3534
      %3536 = vrot.lane.b32.xlu0 %v3459, 48
      %v3537 = vpop.permute.xlu0 %3536
      %3538 = vrot.lane.b32.xlu0 %v3460, 48
      %v3539 = vpop.permute.xlu0 %3538
      %3540 = vrot.lane.b32.xlu0 %v3461, 48
      %v3541 = vpop.permute.xlu0 %3540
      %3542 = vrot.lane.b32.xlu0 %v3462, 48
      %v3543 = vpop.permute.xlu0 %3542
      %3544 = vrot.lane.b32.xlu0 %v3463, 48
      %v3545 = vpop.permute.xlu0 %3544
      %3546 = vrot.lane.b32.xlu0 %v3464, 48
      %v3547 = vpop.permute.xlu0 %3546
      %3548 = vrot.lane.b32.xlu0 %v3465, 48
      %v3549 = vpop.permute.xlu0 %3548
      %3550 = vrot.lane.b32.xlu0 %v3466, 48
      %v3551 = vpop.permute.xlu0 %3550
      %3552 = vrot.lane.b32.xlu0 %v3467, 48
      %v3553 = vpop.permute.xlu0 %3552
      %3554 = vrot.lane.b32.xlu0 %v3468, 48
      %v3555 = vpop.permute.xlu0 %3554
      %3556 = vrot.lane.b32.xlu0 %v3469, 48
      %v3557 = vpop.permute.xlu0 %3556
      %3558 = vrot.lane.b32.xlu0 %v3470, 48
      %v3559 = vpop.permute.xlu0 %3558
      %3560 = vrot.lane.b32.xlu0 %v3471, 48
      %v3561 = vpop.permute.xlu0 %3560
      %3562 = vrot.lane.b32.xlu0 %v3472, 48
      %v3563 = vpop.permute.xlu0 %3562
      %3564 = vrot.lane.b32.xlu0 %v3473, 48
      %v3565 = vpop.permute.xlu0 %3564
      %3566 = vrot.lane.b32.xlu0 %v3474, 48
      %v3567 = vpop.permute.xlu0 %3566
      %3568 = vrot.lane.b32.xlu0 %v3475, 48
      %v3569 = vpop.permute.xlu0 %3568
      %3570 = vrot.lane.b32.xlu0 %v3476, 48
      %v3571 = vpop.permute.xlu0 %3570
      %3572 = vrot.lane.b32.xlu0 %v3477, 48
      %v3573 = vpop.permute.xlu0 %3572
      %3574 = vrot.lane.b32.xlu0 %v3478, 48
      %v3575 = vpop.permute.xlu0 %3574
      %3576 = vrot.lane.b32.xlu0 %v3479, 48
      %v3577 = vpop.permute.xlu0 %3576
      %3612 = vrot.lane.b32.xlu0 %v3450, 96
      %v3613 = vpop.permute.xlu0 %3612
      %3614 = vrot.lane.b32.xlu0 %v3451, 96
      %v3615 = vpop.permute.xlu0 %3614
      %3616 = vrot.lane.b32.xlu0 %v3452, 96
      %v3617 = vpop.permute.xlu0 %3616
      %3618 = vrot.lane.b32.xlu0 %v3453, 96
      %v3619 = vpop.permute.xlu0 %3618
      %3620 = vrot.lane.b32.xlu0 %v3454, 96
      %v3621 = vpop.permute.xlu0 %3620
      %3622 = vrot.lane.b32.xlu0 %v3455, 96
      %v3623 = vpop.permute.xlu0 %3622
      %3624 = vrot.lane.b32.xlu0 %v3456, 96
      %v3625 = vpop.permute.xlu0 %3624
      %3626 = vrot.lane.b32.xlu0 %v3457, 96
      %v3627 = vpop.permute.xlu0 %3626
      %3628 = vrot.lane.b32.xlu0 %v3458, 96
      %v3629 = vpop.permute.xlu0 %3628
      %3630 = vrot.lane.b32.xlu0 %v3459, 96
      %v3631 = vpop.permute.xlu0 %3630
      %3632 = vrot.lane.b32.xlu0 %v3460, 96
      %v3633 = vpop.permute.xlu0 %3632
      %3634 = vrot.lane.b32.xlu0 %v3461, 96
      %v3635 = vpop.permute.xlu0 %3634
      %3636 = vrot.lane.b32.xlu0 %v3462, 96
      %v3637 = vpop.permute.xlu0 %3636
      %3638 = vrot.lane.b32.xlu0 %v3463, 96
      %v3639 = vpop.permute.xlu0 %3638
      %3640 = vrot.lane.b32.xlu0 %v3464, 96
      %v3641 = vpop.permute.xlu0 %3640
      %3642 = vrot.lane.b32.xlu0 %v3465, 96
      %v3643 = vpop.permute.xlu0 %3642
      %3644 = vrot.lane.b32.xlu0 %v3466, 96
      %v3645 = vpop.permute.xlu0 %3644
      %3646 = vrot.lane.b32.xlu0 %v3467, 96
      %v3647 = vpop.permute.xlu0 %3646
      %3648 = vrot.lane.b32.xlu0 %v3468, 96
      %v3649 = vpop.permute.xlu0 %3648
      %3650 = vrot.lane.b32.xlu0 %v3469, 96
      %v3651 = vpop.permute.xlu0 %3650
      %3652 = vrot.lane.b32.xlu0 %v3470, 96
      %v3653 = vpop.permute.xlu0 %3652
      %3654 = vrot.lane.b32.xlu0 %v3471, 96
      %v3655 = vpop.permute.xlu0 %3654
      %3656 = vrot.lane.b32.xlu0 %v3472, 96
      %v3657 = vpop.permute.xlu0 %3656
      %3658 = vrot.lane.b32.xlu0 %v3473, 96
      %v3659 = vpop.permute.xlu0 %3658
      %3660 = vrot.lane.b32.xlu0 %v3474, 96
      %v3661 = vpop.permute.xlu0 %3660
      %3662 = vrot.lane.b32.xlu0 %v3475, 96
      %v3663 = vpop.permute.xlu0 %3662
      %3664 = vrot.lane.b32.xlu0 %v3476, 96
      %v3665 = vpop.permute.xlu0 %3664
      %3666 = vrot.lane.b32.xlu0 %v3477, 96
      %v3667 = vpop.permute.xlu0 %3666
      %3668 = vrot.lane.b32.xlu0 %v3478, 96
      %v3669 = vpop.permute.xlu0 %3668
      %3670 = vrot.lane.b32.xlu0 %v3479, 96
      %v3671 = vpop.permute.xlu0 %3670
      %3672 = vrot.lane.b32.xlu0 %v3480, 96
      %v3673 = vpop.permute.xlu0 %3672
      %3674 = vrot.lane.b32.xlu0 %v3481, 96
      %v3675 = vpop.permute.xlu0 %3674
      %v3708 = vsel %vm1151, %v3446, %v3515
      %v3709 = vsel %vm1151, %v3447, %v3517
      %v3710 = vsel %vm1151, %v3448, %v3519
      %v3711 = vsel %vm1151, %v3449, %v3521
      %v3712 = vsel %vm1151, %v3450, %v3523
      %v3713 = vsel %vm1151, %v3451, %v3525
      %v3714 = vsel %vm1151, %v3452, %v3527
      %v3715 = vsel %vm1151, %v3453, %v3529
      %v3716 = vsel %vm1151, %v3454, %v3531
      %v3717 = vsel %vm1151, %v3455, %v3533
      %v3718 = vsel %vm1151, %v3456, %v3535
      %v3719 = vsel %vm1151, %v3457, %v3537
      %v3720 = vsel %vm1151, %v3458, %v3539
      %v3721 = vsel %vm1151, %v3459, %v3541
      %v3722 = vsel %vm1151, %v3460, %v3543
      %v3723 = vsel %vm1151, %v3461, %v3545
      %v3724 = vsel %vm1151, %v3462, %v3547
      %v3725 = vsel %vm1151, %v3463, %v3549
      %v3726 = vsel %vm1151, %v3464, %v3551
      %v3727 = vsel %vm1151, %v3465, %v3553
      %v3728 = vsel %vm1151, %v3466, %v3555
      %v3729 = vsel %vm1151, %v3467, %v3557
      %v3730 = vsel %vm1151, %v3468, %v3559
      %v3731 = vsel %vm1151, %v3469, %v3561
      %v3732 = vsel %vm1151, %v3470, %v3563
      %v3733 = vsel %vm1151, %v3471, %v3565
      %v3734 = vsel %vm1151, %v3472, %v3567
      %v3735 = vsel %vm1151, %v3473, %v3569
      %v3736 = vsel %vm1151, %v3474, %v3571
      %v3737 = vsel %vm1151, %v3475, %v3573
      %v3738 = vsel %vm1151, %v3476, %v3575
      %v3739 = vsel %vm1151, %v3477, %v3577
      %v3740 = vsel %vm1184, %v3708, %v3613
      %v3741 = vsel %vm1184, %v3709, %v3615
      %v3742 = vsel %vm1184, %v3710, %v3617
      %v3743 = vsel %vm1184, %v3711, %v3619
      %v3744 = vsel %vm1184, %v3712, %v3621
      %v3745 = vsel %vm1184, %v3713, %v3623
      %v3746 = vsel %vm1184, %v3714, %v3625
      %v3747 = vsel %vm1184, %v3715, %v3627
      %v3748 = vsel %vm1184, %v3716, %v3629
      %v3749 = vsel %vm1184, %v3717, %v3631
      %v3750 = vsel %vm1184, %v3718, %v3633
      %v3751 = vsel %vm1184, %v3719, %v3635
      %v3752 = vsel %vm1184, %v3720, %v3637
      %v3753 = vsel %vm1184, %v3721, %v3639
      %v3754 = vsel %vm1184, %v3722, %v3641
      %v3755 = vsel %vm1184, %v3723, %v3643
      %v3756 = vsel %vm1184, %v3724, %v3645
      %v3757 = vsel %vm1184, %v3725, %v3647
      %v3758 = vsel %vm1184, %v3726, %v3649
      %v3759 = vsel %vm1184, %v3727, %v3651
      %v3760 = vsel %vm1184, %v3728, %v3653
      %v3761 = vsel %vm1184, %v3729, %v3655
      %v3762 = vsel %vm1184, %v3730, %v3657
      %v3763 = vsel %vm1184, %v3731, %v3659
      %v3764 = vsel %vm1184, %v3732, %v3661
      %v3765 = vsel %vm1184, %v3733, %v3663
      %v3766 = vsel %vm1184, %v3734, %v3665
      %v3767 = vsel %vm1184, %v3735, %v3667
      %v3768 = vsel %vm1184, %v3736, %v3669
      %v3769 = vsel %vm1184, %v3737, %v3671
      %v3770 = vsel %vm1184, %v3738, %v3673
      %v3771 = vsel %vm1184, %v3739, %v3675
      %s3772 = scalar_lea.vmem %s1, 288
      %v3773 = vld [vmem:[%s3772] sm:$0xff]
      %v3774 = vld [vmem:[%s3772 + $0x8] sm:$0xff]
      %v3775 = vld [vmem:[%s3772 + $0x10] sm:$0xff]
      %v3776 = vld [vmem:[%s3772 + $0x18] sm:$0xff]
      %v3777 = vld [vmem:[%s3772 + $0x20] sm:$0xff]
      %v3778 = vld [vmem:[%s3772 + $0x28] sm:$0xff]
      %v3779 = vld [vmem:[%s3772 + $0x30] sm:$0xff]
      %v3780 = vld [vmem:[%s3772 + $0x38] sm:$0xff]
      %v3781 = vld [vmem:[%s3772 + $0x40] sm:$0xff]
      %v3782 = vld [vmem:[%s3772 + $0x48] sm:$0xff]
      %v3783 = vld [vmem:[%s3772 + $0x50] sm:$0xff]
      %v3784 = vld [vmem:[%s3772 + $0x58] sm:$0xff]
      %v3785 = vld [vmem:[%s3772 + $0x60] sm:$0xff]
      %v3786 = vld [vmem:[%s3772 + $0x68] sm:$0xff]
      %v3787 = vld [vmem:[%s3772 + $0x70] sm:$0xff]
      %v3788 = vld [vmem:[%s3772 + $0x78] sm:$0xff]
      %v3789 = vld [vmem:[%s3772 + $0x80] sm:$0xff]
      %v3790 = vld [vmem:[%s3772 + $0x88] sm:$0xff]
      %s3791 = scalar_lea.vmem %s2, 2
      %v3792 = vld [vmem:[%s3791] sm:$0x1]
      %v3794 = vlaneseq
      %v3795 = vshrl.u32 %v3794, 7
      %v3796 = vsub.s32 0, %v3795
      %v3797 = vrot.slane %v3792, %v3796
      %v3799 = vsel %vm171, %v3613, 0
      %v3801 = vsel %vm171, %v3615, 0
      %v3803 = vsel %vm171, %v3617, 0
      %v3805 = vsel %vm171, %v3619, 0
      %v3807 = vsel %vm171, %v3621, 0
      %v3809 = vsel %vm171, %v3623, 0
      %v3811 = vsel %vm171, %v3625, 0
      %v3813 = vsel %vm171, %v3627, 0
      %v3815 = vsel %vm171, %v3629, 0
      %v3817 = vsel %vm171, %v3631, 0
      %v3819 = vsel %vm171, %v3633, 0
      %v3821 = vsel %vm171, %v3635, 0
      %v3823 = vsel %vm171, %v3637, 0
      %v3825 = vsel %vm171, %v3639, 0
      %v3827 = vsel %vm171, %v3641, 0
      %v3829 = vsel %vm171, %v3643, 0
      %v3831 = vsel %vm171, %v3645, 0
      %v3833 = vsel %vm171, %v3647, 0
      %v3835 = vsel %vm171, %v3649, 0
      %v3837 = vsel %vm171, %v3651, 0
      %v3839 = vsel %vm171, %v3653, 0
      %v3841 = vsel %vm171, %v3655, 0
      %v3843 = vsel %vm171, %v3657, 0
      %v3845 = vsel %vm171, %v3659, 0
      %v3847 = vsel %vm171, %v3661, 0
      %v3849 = vsel %vm171, %v3663, 0
      %v3851 = vsel %vm171, %v3665, 0
      %v3853 = vsel %vm171, %v3667, 0
      %v3855 = vsel %vm171, %v3669, 0
      %v3857 = vsel %vm171, %v3671, 0
      %v3859 = vsel %vm171, %v3673, 0
      %v3861 = vsel %vm171, %v3675, 0
      %3863 = vmatprep.subr.mxu0 0.0
      %3864 = vmatpush1.msra.mxu0 %v3788
      %3865 = vmatprep.subr.mxu0 0.0
      %3866 = vmatpush1.msra.mxu0 %v3787
      %3867 = vmatprep.subr.mxu0 0.0
      %3868 = vmatpush1.msra.mxu0 %v3786
      %3869 = vmatprep.subr.mxu0 0.0
      %3870 = vmatpush1.msra.mxu0 %v3785
      %3871 = vmatprep.subr.mxu0 0.0
      %3872 = vmatpush1.msra.mxu0 %v3784
      %3873 = vmatprep.subr.mxu0 0.0
      %3874 = vmatpush1.msra.mxu0 %v3783
      %3875 = vmatprep.subr.mxu0 0.0
      %3876 = vmatpush1.msra.mxu0 %v3782
      %3877 = vmatprep.subr.mxu0 0.0
      %3878 = vmatpush1.msra.mxu0 %v3781
      %3879 = vmatprep.subr.mxu0 0.0
      %3880 = vmatpush1.msra.mxu0 %v3780
      %3881 = vmatprep.subr.mxu0 0.0
      %3882 = vmatpush1.msra.mxu0 %v3779
      %3883 = vmatprep.subr.mxu0 0.0
      %3884 = vmatpush1.msra.mxu0 %v3778
      %3885 = vmatprep.subr.mxu0 0.0
      %3886 = vmatpush1.msra.mxu0 %v3777
      %3887 = vmatprep.subr.mxu0 0.0
      %3888 = vmatpush1.msra.mxu0 %v3776
      %3889 = vmatprep.subr.mxu0 0.0
      %3890 = vmatpush1.msra.mxu0 %v3775
      %3891 = vmatprep.subr.mxu0 0.0
      %3892 = vmatpush1.msra.mxu0 %v3774
      %3893 = vmatprep.subr.mxu0 0.0
      %3894 = vmatpush1.msra.mxu0 %v3773
      %3895 = vmatprep.subr.mxu0 0.0
      %3896 = vmatpush2.msra.mxu0 0.0
      %3897 = vmatprep.subr.mxu0 0.0
      %3898 = vmatpush2.msra.mxu0 0.0
      %3899 = vmatprep.subr.mxu0 0.0
      %3900 = vmatpush2.msra.mxu0 0.0
      %3901 = vmatprep.subr.mxu0 0.0
      %3902 = vmatpush2.msra.mxu0 0.0
      %3903 = vmatprep.subr.mxu0 0.0
      %3904 = vmatpush2.msra.mxu0 0.0
      %3905 = vmatprep.subr.mxu0 0.0
      %3906 = vmatpush2.msra.mxu0 0.0
      %3907 = vmatprep.subr.mxu0 0.0
      %3908 = vmatpush2.msra.mxu0 0.0
      %3909 = vmatprep.subr.mxu0 0.0
      %3910 = vmatpush2.msra.mxu0 0.0
      %3911 = vmatprep.subr.mxu0 0.0
      %3912 = vmatpush2.msra.mxu0 0.0
      %3913 = vmatprep.subr.mxu0 0.0
      %3914 = vmatpush2.msra.mxu0 0.0
      %3915 = vmatprep.subr.mxu0 0.0
      %3916 = vmatpush2.msra.mxu0 0.0
      %3917 = vmatprep.subr.mxu0 0.0
      %3918 = vmatpush2.msra.mxu0 0.0
      %3919 = vmatprep.subr.mxu0 0.0
      %3920 = vmatpush2.msra.mxu0 0.0
      %3921 = vmatprep.subr.mxu0 0.0
      %3922 = vmatpush2.msra.mxu0 0.0
      %3923 = vmatprep.subr.mxu0 0.0
      %3924 = vmatpush2.msra.mxu0 %v3790
      %3925 = vmatprep.subr.mxu0 0.0
      %3926 = vmatpush2.msra.mxu0 %v3789
      %3927 = vmatprep.mubr.f32.mxu0 %v3799
      %3928 = vmatmul.mubr.f32.gmra.mxu0 %v3740
      %v3929 = vpop.f32.mrf.mxu0
      %v3930 = vadd.f32 %v3797, %v3929
      %v3931 = vpop.f32.mrf.mxu0
      %3932 = vmatprep.mubr.f32.mxu0 %v3801
      %3933 = vmatmul.mubr.f32.gmra.mxu0 %v3741
      %v3934 = vpop.f32.mrf.mxu0
      %v3935 = vadd.f32 %v3797, %v3934
      %v3936 = vpop.f32.mrf.mxu0
      %3937 = vmatprep.mubr.f32.mxu0 %v3803
      %3938 = vmatmul.mubr.f32.gmra.mxu0 %v3742
      %v3939 = vpop.f32.mrf.mxu0
      %v3940 = vadd.f32 %v3797, %v3939
      %v3941 = vpop.f32.mrf.mxu0
      %3942 = vmatprep.mubr.f32.mxu0 %v3805
      %3943 = vmatmul.mubr.f32.gmra.mxu0 %v3743
      %v3944 = vpop.f32.mrf.mxu0
      %v3945 = vadd.f32 %v3797, %v3944
      %v3946 = vpop.f32.mrf.mxu0
      %3947 = vmatprep.mubr.f32.mxu0 %v3807
      %3948 = vmatmul.mubr.f32.gmra.mxu0 %v3744
      %v3949 = vpop.f32.mrf.mxu0
      %v3950 = vadd.f32 %v3797, %v3949
      %v3951 = vpop.f32.mrf.mxu0
      %3952 = vmatprep.mubr.f32.mxu0 %v3809
      %3953 = vmatmul.mubr.f32.gmra.mxu0 %v3745
      %v3954 = vpop.f32.mrf.mxu0
      %v3955 = vadd.f32 %v3797, %v3954
      %v3956 = vpop.f32.mrf.mxu0
      %3957 = vmatprep.mubr.f32.mxu0 %v3811
      %3958 = vmatmul.mubr.f32.gmra.mxu0 %v3746
      %v3959 = vpop.f32.mrf.mxu0
      %v3960 = vadd.f32 %v3797, %v3959
      %v3961 = vpop.f32.mrf.mxu0
      %3962 = vmatprep.mubr.f32.mxu0 %v3813
      %3963 = vmatmul.mubr.f32.gmra.mxu0 %v3747
      %v3964 = vpop.f32.mrf.mxu0
      %v3965 = vadd.f32 %v3797, %v3964
      %v3966 = vpop.f32.mrf.mxu0
      %3967 = vmatprep.mubr.f32.mxu0 %v3815
      %3968 = vmatmul.mubr.f32.gmra.mxu0 %v3748
      %v3969 = vpop.f32.mrf.mxu0
      %v3970 = vadd.f32 %v3797, %v3969
      %v3971 = vpop.f32.mrf.mxu0
      %3972 = vmatprep.mubr.f32.mxu0 %v3817
      %3973 = vmatmul.mubr.f32.gmra.mxu0 %v3749
      %v3974 = vpop.f32.mrf.mxu0
      %v3975 = vadd.f32 %v3797, %v3974
      %v3976 = vpop.f32.mrf.mxu0
      %3977 = vmatprep.mubr.f32.mxu0 %v3819
      %3978 = vmatmul.mubr.f32.gmra.mxu0 %v3750
      %v3979 = vpop.f32.mrf.mxu0
      %v3980 = vadd.f32 %v3797, %v3979
      %v3981 = vpop.f32.mrf.mxu0
      %3982 = vmatprep.mubr.f32.mxu0 %v3821
      %3983 = vmatmul.mubr.f32.gmra.mxu0 %v3751
      %v3984 = vpop.f32.mrf.mxu0
      %v3985 = vadd.f32 %v3797, %v3984
      %v3986 = vpop.f32.mrf.mxu0
      %3987 = vmatprep.mubr.f32.mxu0 %v3823
      %3988 = vmatmul.mubr.f32.gmra.mxu0 %v3752
      %v3989 = vpop.f32.mrf.mxu0
      %v3990 = vadd.f32 %v3797, %v3989
      %v3991 = vpop.f32.mrf.mxu0
      %3992 = vmatprep.mubr.f32.mxu0 %v3825
      %3993 = vmatmul.mubr.f32.gmra.mxu0 %v3753
      %v3994 = vpop.f32.mrf.mxu0
      %v3995 = vadd.f32 %v3797, %v3994
      %v3996 = vpop.f32.mrf.mxu0
      %3997 = vmatprep.mubr.f32.mxu0 %v3827
      %3998 = vmatmul.mubr.f32.gmra.mxu0 %v3754
      %v3999 = vpop.f32.mrf.mxu0
      %v4000 = vadd.f32 %v3797, %v3999
      %v4001 = vpop.f32.mrf.mxu0
      %4002 = vmatprep.mubr.f32.mxu0 %v3829
      %4003 = vmatmul.mubr.f32.gmra.mxu0 %v3755
      %v4004 = vpop.f32.mrf.mxu0
      %v4005 = vadd.f32 %v3797, %v4004
      %v4006 = vpop.f32.mrf.mxu0
      %4007 = vmatprep.mubr.f32.mxu0 %v3831
      %4008 = vmatmul.mubr.f32.gmra.mxu0 %v3756
      %v4009 = vpop.f32.mrf.mxu0
      %v4010 = vadd.f32 %v3797, %v4009
      %v4011 = vpop.f32.mrf.mxu0
      %4012 = vmatprep.mubr.f32.mxu0 %v3833
      %4013 = vmatmul.mubr.f32.gmra.mxu0 %v3757
      %v4014 = vpop.f32.mrf.mxu0
      %v4015 = vadd.f32 %v3797, %v4014
      %v4016 = vpop.f32.mrf.mxu0
      %4017 = vmatprep.mubr.f32.mxu0 %v3835
      %4018 = vmatmul.mubr.f32.gmra.mxu0 %v3758
      %v4019 = vpop.f32.mrf.mxu0
      %v4020 = vadd.f32 %v3797, %v4019
      %v4021 = vpop.f32.mrf.mxu0
      %4022 = vmatprep.mubr.f32.mxu0 %v3837
      %4023 = vmatmul.mubr.f32.gmra.mxu0 %v3759
      %v4024 = vpop.f32.mrf.mxu0
      %v4025 = vadd.f32 %v3797, %v4024
      %v4026 = vpop.f32.mrf.mxu0
      %4027 = vmatprep.mubr.f32.mxu0 %v3839
      %4028 = vmatmul.mubr.f32.gmra.mxu0 %v3760
      %v4029 = vpop.f32.mrf.mxu0
      %v4030 = vadd.f32 %v3797, %v4029
      %v4031 = vpop.f32.mrf.mxu0
      %4032 = vmatprep.mubr.f32.mxu0 %v3841
      %4033 = vmatmul.mubr.f32.gmra.mxu0 %v3761
      %v4034 = vpop.f32.mrf.mxu0
      %v4035 = vadd.f32 %v3797, %v4034
      %v4036 = vpop.f32.mrf.mxu0
      %4037 = vmatprep.mubr.f32.mxu0 %v3843
      %4038 = vmatmul.mubr.f32.gmra.mxu0 %v3762
      %v4039 = vpop.f32.mrf.mxu0
      %v4040 = vadd.f32 %v3797, %v4039
      %v4041 = vpop.f32.mrf.mxu0
      %4042 = vmatprep.mubr.f32.mxu0 %v3845
      %4043 = vmatmul.mubr.f32.gmra.mxu0 %v3763
      %v4044 = vpop.f32.mrf.mxu0
      %v4045 = vadd.f32 %v3797, %v4044
      %v4046 = vpop.f32.mrf.mxu0
      %4047 = vmatprep.mubr.f32.mxu0 %v3847
      %4048 = vmatmul.mubr.f32.gmra.mxu0 %v3764
      %v4049 = vpop.f32.mrf.mxu0
      %v4050 = vadd.f32 %v3797, %v4049
      %v4051 = vpop.f32.mrf.mxu0
      %4052 = vmatprep.mubr.f32.mxu0 %v3849
      %4053 = vmatmul.mubr.f32.gmra.mxu0 %v3765
      %v4054 = vpop.f32.mrf.mxu0
      %v4055 = vadd.f32 %v3797, %v4054
      %v4056 = vpop.f32.mrf.mxu0
      %4057 = vmatprep.mubr.f32.mxu0 %v3851
      %4058 = vmatmul.mubr.f32.gmra.mxu0 %v3766
      %v4059 = vpop.f32.mrf.mxu0
      %v4060 = vadd.f32 %v3797, %v4059
      %v4061 = vpop.f32.mrf.mxu0
      %4062 = vmatprep.mubr.f32.mxu0 %v3853
      %4063 = vmatmul.mubr.f32.gmra.mxu0 %v3767
      %v4064 = vpop.f32.mrf.mxu0
      %v4065 = vadd.f32 %v3797, %v4064
      %v4066 = vpop.f32.mrf.mxu0
      %4067 = vmatprep.mubr.f32.mxu0 %v3855
      %4068 = vmatmul.mubr.f32.gmra.mxu0 %v3768
      %v4069 = vpop.f32.mrf.mxu0
      %v4070 = vadd.f32 %v3797, %v4069
      %v4071 = vpop.f32.mrf.mxu0
      %4072 = vmatprep.mubr.f32.mxu0 %v3857
      %4073 = vmatmul.mubr.f32.gmra.mxu0 %v3769
      %v4074 = vpop.f32.mrf.mxu0
      %v4075 = vadd.f32 %v3797, %v4074
      %v4076 = vpop.f32.mrf.mxu0
      %4077 = vmatprep.mubr.f32.mxu0 %v3859
      %4078 = vmatmul.mubr.f32.gmra.mxu0 %v3770
      %v4079 = vpop.f32.mrf.mxu0
      %v4080 = vadd.f32 %v3797, %v4079
      %v4081 = vpop.f32.mrf.mxu0
      %4082 = vmatprep.mubr.f32.mxu0 %v3861
      %4083 = vmatmul.mubr.f32.gmra.mxu0 %v3771
      %v4084 = vpop.f32.mrf.mxu0
      %v4085 = vadd.f32 %v3797, %v4084
      %v4086 = vpop.f32.mrf.mxu0
      %4087 = vdwg.mxu0
      %v4088 = vld [vmem:[%s313 + $0x1] sm:$0xff]
      %v4089 = vld [vmem:[%s313 + $0x9] sm:$0xff]
      %v4090 = vld [vmem:[%s313 + $0x19] sm:$0xff]
      %v4091 = vld [vmem:[%s313 + $0x21] sm:$0xff]
      %v4092 = vld [vmem:[%s313 + $0x31] sm:$0xff]
      %v4093 = vld [vmem:[%s313 + $0x39] sm:$0xff]
      %v4094 = vld [vmem:[%s313 + $0x49] sm:$0xff]
      %v4095 = vld [vmem:[%s313 + $0x51] sm:$0xff]
      %v4096 = vld [vmem:[%s313 + $0x61] sm:$0xff]
      %v4097 = vld [vmem:[%s313 + $0x69] sm:$0xff]
      %v4098 = vld [vmem:[%s313 + $0x79] sm:$0xff]
      %v4099 = vld [vmem:[%s313 + $0x81] sm:$0xff]
      %v4100 = vld [vmem:[%s313 + $0x91] sm:$0xff]
      %v4101 = vld [vmem:[%s313 + $0x99] sm:$0xff]
      %v4102 = vld [vmem:[%s313 + $0xa9] sm:$0xff]
      %v4103 = vld [vmem:[%s313 + $0xb1] sm:$0xff]
      %v4104 = vld [vmem:[%s313 + $0xc1] sm:$0xff]
      %v4105 = vld [vmem:[%s313 + $0xc9] sm:$0xff]
      %v4106 = vld [vmem:[%s313 + $0xd9] sm:$0xff]
      %v4107 = vld [vmem:[%s313 + $0xe1] sm:$0xff]
      %v4108 = vld [vmem:[%s313 + $0xf1] sm:$0xff]
      %v4109 = vld [vmem:[%s313 + $0xf9] sm:$0xff]
      %v4110 = vld [vmem:[%s313 + $0x109] sm:$0xff]
      %v4111 = vld [vmem:[%s313 + $0x111] sm:$0xff]
      %v4112 = vld [vmem:[%s313 + $0x121] sm:$0xff]
      %v4113 = vld [vmem:[%s313 + $0x129] sm:$0xff]
      %v4114 = vld [vmem:[%s313 + $0x139] sm:$0xff]
      %v4115 = vld [vmem:[%s313 + $0x141] sm:$0xff]
      %v4116 = vld [vmem:[%s313 + $0x151] sm:$0xff]
      %v4117 = vld [vmem:[%s313 + $0x159] sm:$0xff]
      %v4118 = vld [vmem:[%s313 + $0x169] sm:$0xff]
      %v4119 = vld [vmem:[%s313 + $0x171] sm:$0xff]
      %v4120 = vadd.f32 %v4088, %v3930
      %v4121 = vadd.f32 %v4089, %v3935
      %v4122 = vadd.f32 %v4090, %v3940
      %v4123 = vadd.f32 %v4091, %v3945
      %v4124 = vadd.f32 %v4092, %v3950
      %v4125 = vadd.f32 %v4093, %v3955
      %v4126 = vadd.f32 %v4094, %v3960
      %v4127 = vadd.f32 %v4095, %v3965
      %v4128 = vadd.f32 %v4096, %v3970
      %v4129 = vadd.f32 %v4097, %v3975
      %v4130 = vadd.f32 %v4098, %v3980
      %v4131 = vadd.f32 %v4099, %v3985
      %v4132 = vadd.f32 %v4100, %v3990
      %v4133 = vadd.f32 %v4101, %v3995
      %v4134 = vadd.f32 %v4102, %v4000
      %v4135 = vadd.f32 %v4103, %v4005
      %v4136 = vadd.f32 %v4104, %v4010
      %v4137 = vadd.f32 %v4105, %v4015
      %v4138 = vadd.f32 %v4106, %v4020
      %v4139 = vadd.f32 %v4107, %v4025
      %v4140 = vadd.f32 %v4108, %v4030
      %v4141 = vadd.f32 %v4109, %v4035
      %v4142 = vadd.f32 %v4110, %v4040
      %v4143 = vadd.f32 %v4111, %v4045
      %v4144 = vadd.f32 %v4112, %v4050
      %v4145 = vadd.f32 %v4113, %v4055
      %v4146 = vadd.f32 %v4114, %v4060
      %v4147 = vadd.f32 %v4115, %v4065
      %v4148 = vadd.f32 %v4116, %v4070
      %v4149 = vadd.f32 %v4117, %v4075
      %v4150 = vadd.f32 %v4118, %v4080
      %v4151 = vadd.f32 %v4119, %v4085
      %4152 = vst.msk [vmem:[%s313 + $0x1] sm:$0xff] %vm171, %v4120
      %4153 = vst.msk [vmem:[%s313 + $0x9] sm:$0xff] %vm171, %v4121
      %4154 = vst.msk [vmem:[%s313 + $0x19] sm:$0xff] %vm171, %v4122
      %4155 = vst.msk [vmem:[%s313 + $0x21] sm:$0xff] %vm171, %v4123
      %4156 = vst.msk [vmem:[%s313 + $0x31] sm:$0xff] %vm171, %v4124
      %4157 = vst.msk [vmem:[%s313 + $0x39] sm:$0xff] %vm171, %v4125
      %4158 = vst.msk [vmem:[%s313 + $0x49] sm:$0xff] %vm171, %v4126
      %4159 = vst.msk [vmem:[%s313 + $0x51] sm:$0xff] %vm171, %v4127
      %4160 = vst.msk [vmem:[%s313 + $0x61] sm:$0xff] %vm171, %v4128
      %4161 = vst.msk [vmem:[%s313 + $0x69] sm:$0xff] %vm171, %v4129
      %4162 = vst.msk [vmem:[%s313 + $0x79] sm:$0xff] %vm171, %v4130
      %4163 = vst.msk [vmem:[%s313 + $0x81] sm:$0xff] %vm171, %v4131
      %4164 = vst.msk [vmem:[%s313 + $0x91] sm:$0xff] %vm171, %v4132
      %4165 = vst.msk [vmem:[%s313 + $0x99] sm:$0xff] %vm171, %v4133
      %4166 = vst.msk [vmem:[%s313 + $0xa9] sm:$0xff] %vm171, %v4134
      %4167 = vst.msk [vmem:[%s313 + $0xb1] sm:$0xff] %vm171, %v4135
      %4168 = vst.msk [vmem:[%s313 + $0xc1] sm:$0xff] %vm171, %v4136
      %4169 = vst.msk [vmem:[%s313 + $0xc9] sm:$0xff] %vm171, %v4137
      %4170 = vst.msk [vmem:[%s313 + $0xd9] sm:$0xff] %vm171, %v4138
      %4171 = vst.msk [vmem:[%s313 + $0xe1] sm:$0xff] %vm171, %v4139
      %4172 = vst.msk [vmem:[%s313 + $0xf1] sm:$0xff] %vm171, %v4140
      %4173 = vst.msk [vmem:[%s313 + $0xf9] sm:$0xff] %vm171, %v4141
      %4174 = vst.msk [vmem:[%s313 + $0x109] sm:$0xff] %vm171, %v4142
      %4175 = vst.msk [vmem:[%s313 + $0x111] sm:$0xff] %vm171, %v4143
      %4176 = vst.msk [vmem:[%s313 + $0x121] sm:$0xff] %vm171, %v4144
      %4177 = vst.msk [vmem:[%s313 + $0x129] sm:$0xff] %vm171, %v4145
      %4178 = vst.msk [vmem:[%s313 + $0x139] sm:$0xff] %vm171, %v4146
      %4179 = vst.msk [vmem:[%s313 + $0x141] sm:$0xff] %vm171, %v4147
      %4180 = vst.msk [vmem:[%s313 + $0x151] sm:$0xff] %vm171, %v4148
      %4181 = vst.msk [vmem:[%s313 + $0x159] sm:$0xff] %vm171, %v4149
      %4182 = vst.msk [vmem:[%s313 + $0x169] sm:$0xff] %vm171, %v4150
      %4183 = vst.msk [vmem:[%s313 + $0x171] sm:$0xff] %vm171, %v4151
      %v4184 = vld [vmem:[#allocation2] sm:$0xff]
      %v4185 = vld [vmem:[#allocation2 + $0x8] sm:$0xff]
      %v4186 = vld [vmem:[#allocation2 + $0x10] sm:$0x3]
      %v4187 = vld [vmem:[#allocation2 + $0x18] sm:$0xff]
      %v4188 = vld [vmem:[#allocation2 + $0x20] sm:$0xff]
      %v4189 = vld [vmem:[#allocation2 + $0x28] sm:$0x3]
      %v4190 = vld [vmem:[#allocation2 + $0x30] sm:$0xff]
      %v4191 = vld [vmem:[#allocation2 + $0x38] sm:$0xff]
      %v4192 = vld [vmem:[#allocation2 + $0x40] sm:$0x3]
      %v4193 = vld [vmem:[#allocation2 + $0x48] sm:$0xff]
      %v4194 = vld [vmem:[#allocation2 + $0x50] sm:$0xff]
      %v4195 = vld [vmem:[#allocation2 + $0x58] sm:$0x3]
      %v4196 = vld [vmem:[#allocation2 + $0x60] sm:$0xff]
      %v4197 = vld [vmem:[#allocation2 + $0x68] sm:$0xff]
      %v4198 = vld [vmem:[#allocation2 + $0x70] sm:$0x3]
      %v4199 = vld [vmem:[#allocation2 + $0x78] sm:$0xff]
      %v4200 = vld [vmem:[#allocation2 + $0x80] sm:$0xff]
      %v4201 = vld [vmem:[#allocation2 + $0x88] sm:$0x3]
      %v4202 = vld [vmem:[#allocation2 + $0x90] sm:$0xff]
      %v4203 = vld [vmem:[#allocation2 + $0x98] sm:$0xff]
      %v4204 = vld [vmem:[#allocation2 + $0xa0] sm:$0x3]
      %v4205 = vld [vmem:[#allocation2 + $0xa8] sm:$0xff]
      %v4206 = vld [vmem:[#allocation2 + $0xb0] sm:$0xff]
      %v4207 = vld [vmem:[#allocation2 + $0xb8] sm:$0x3]
      %v4208 = vld [vmem:[#allocation2 + $0xc0] sm:$0xff]
      %v4209 = vld [vmem:[#allocation2 + $0xc8] sm:$0xff]
      %v4210 = vld [vmem:[#allocation2 + $0xd0] sm:$0x3]
      %v4211 = vld [vmem:[#allocation2 + $0xd8] sm:$0xff]
      %v4212 = vld [vmem:[#allocation2 + $0xe0] sm:$0xff]
      %v4213 = vld [vmem:[#allocation2 + $0xe8] sm:$0x3]
      %v4214 = vld [vmem:[#allocation2 + $0xf0] sm:$0xff]
      %v4215 = vld [vmem:[#allocation2 + $0xf8] sm:$0xff]
      %v4216 = vld [vmem:[#allocation2 + $0x100] sm:$0x3]
      %v4217 = vld [vmem:[#allocation2 + $0x108] sm:$0xff]
      %v4218 = vld [vmem:[#allocation2 + $0x110] sm:$0xff]
      %v4219 = vld [vmem:[#allocation2 + $0x118] sm:$0x3]
      %v4220 = vld [vmem:[#allocation2 + $0x120] sm:$0xff]
      %v4221 = vld [vmem:[#allocation2 + $0x128] sm:$0xff]
      %v4222 = vld [vmem:[#allocation2 + $0x130] sm:$0x3]
      %v4223 = vld [vmem:[#allocation2 + $0x138] sm:$0xff]
      %v4224 = vld [vmem:[#allocation2 + $0x140] sm:$0xff]
      %v4225 = vld [vmem:[#allocation2 + $0x148] sm:$0x3]
      %v4226 = vld [vmem:[#allocation2 + $0x150] sm:$0xff]
      %v4227 = vld [vmem:[#allocation2 + $0x158] sm:$0xff]
      %v4228 = vld [vmem:[#allocation2 + $0x160] sm:$0x3]
      %v4229 = vld [vmem:[#allocation2 + $0x168] sm:$0xff]
      %v4230 = vld [vmem:[#allocation2 + $0x170] sm:$0xff]
      %v4231 = vld [vmem:[#allocation2 + $0x178] sm:$0x3]
      %v4232 = vld [vmem:[#allocation2 + $0x180] sm:$0xff]
      %v4233 = vld [vmem:[#allocation2 + $0x188] sm:$0xff]
      %v4234 = vld [vmem:[#allocation2 + $0x190] sm:$0x3]
      %v4235 = vld [vmem:[#allocation2 + $0x198] sm:$0xff]
      %v4236 = vld [vmem:[#allocation2 + $0x1a0] sm:$0xff]
      %v4237 = vld [vmem:[#allocation2 + $0x1a8] sm:$0x3]
      %v4292 = vrot.slane %v4184, 1
      %v4293 = vrot.slane %v4185, 1
      %v4294 = vsel %vm454, %v4292, %v4293
      %v4295 = vrot.slane %v4186, 1
      %v4296 = vsel %vm454, %v4293, %v4295
      %v4297 = vrot.slane %v4187, 1
      %v4298 = vrot.slane %v4188, 1
      %v4299 = vsel %vm454, %v4297, %v4298
      %v4300 = vrot.slane %v4189, 1
      %v4301 = vsel %vm454, %v4298, %v4300
      %v4302 = vrot.slane %v4190, 1
      %v4303 = vrot.slane %v4191, 1
      %v4304 = vsel %vm454, %v4302, %v4303
      %v4305 = vrot.slane %v4192, 1
      %v4306 = vsel %vm454, %v4303, %v4305
      %v4307 = vrot.slane %v4193, 1
      %v4308 = vrot.slane %v4194, 1
      %v4309 = vsel %vm454, %v4307, %v4308
      %v4310 = vrot.slane %v4195, 1
      %v4311 = vsel %vm454, %v4308, %v4310
      %v4312 = vrot.slane %v4196, 1
      %v4313 = vrot.slane %v4197, 1
      %v4314 = vsel %vm454, %v4312, %v4313
      %v4315 = vrot.slane %v4198, 1
      %v4316 = vsel %vm454, %v4313, %v4315
      %v4317 = vrot.slane %v4199, 1
      %v4318 = vrot.slane %v4200, 1
      %v4319 = vsel %vm454, %v4317, %v4318
      %v4320 = vrot.slane %v4201, 1
      %v4321 = vsel %vm454, %v4318, %v4320
      %v4322 = vrot.slane %v4202, 1
      %v4323 = vrot.slane %v4203, 1
      %v4324 = vsel %vm454, %v4322, %v4323
      %v4325 = vrot.slane %v4204, 1
      %v4326 = vsel %vm454, %v4323, %v4325
      %v4327 = vrot.slane %v4205, 1
      %v4328 = vrot.slane %v4206, 1
      %v4329 = vsel %vm454, %v4327, %v4328
      %v4330 = vrot.slane %v4207, 1
      %v4331 = vsel %vm454, %v4328, %v4330
      %v4332 = vrot.slane %v4208, 1
      %v4333 = vrot.slane %v4209, 1
      %v4334 = vsel %vm454, %v4332, %v4333
      %v4335 = vrot.slane %v4210, 1
      %v4336 = vsel %vm454, %v4333, %v4335
      %v4337 = vrot.slane %v4211, 1
      %v4338 = vrot.slane %v4212, 1
      %v4339 = vsel %vm454, %v4337, %v4338
      %v4340 = vrot.slane %v4213, 1
      %v4341 = vsel %vm454, %v4338, %v4340
      %v4342 = vrot.slane %v4214, 1
      %v4343 = vrot.slane %v4215, 1
      %v4344 = vsel %vm454, %v4342, %v4343
      %v4345 = vrot.slane %v4216, 1
      %v4346 = vsel %vm454, %v4343, %v4345
      %v4347 = vrot.slane %v4217, 1
      %v4348 = vrot.slane %v4218, 1
      %v4349 = vsel %vm454, %v4347, %v4348
      %v4350 = vrot.slane %v4219, 1
      %v4351 = vsel %vm454, %v4348, %v4350
      %v4352 = vrot.slane %v4220, 1
      %v4353 = vrot.slane %v4221, 1
      %v4354 = vsel %vm454, %v4352, %v4353
      %v4355 = vrot.slane %v4222, 1
      %v4356 = vsel %vm454, %v4353, %v4355
      %v4357 = vrot.slane %v4223, 1
      %v4358 = vrot.slane %v4224, 1
      %v4359 = vsel %vm454, %v4357, %v4358
      %v4360 = vrot.slane %v4225, 1
      %v4361 = vsel %vm454, %v4358, %v4360
      %v4362 = vrot.slane %v4226, 1
      %v4363 = vrot.slane %v4227, 1
      %v4364 = vsel %vm454, %v4362, %v4363
      %v4365 = vrot.slane %v4228, 1
      %v4366 = vsel %vm454, %v4363, %v4365
      %v4367 = vrot.slane %v4229, 1
      %v4368 = vrot.slane %v4230, 1
      %v4369 = vsel %vm454, %v4367, %v4368
      %v4370 = vrot.slane %v4231, 1
      %v4371 = vsel %vm454, %v4368, %v4370
      %v4372 = vrot.slane %v4232, 1
      %v4373 = vrot.slane %v4233, 1
      %v4374 = vsel %vm454, %v4372, %v4373
      %v4375 = vrot.slane %v4234, 1
      %v4376 = vsel %vm454, %v4373, %v4375
      %v4377 = vrot.slane %v4235, 1
      %v4378 = vrot.slane %v4236, 1
      %v4379 = vsel %vm454, %v4377, %v4378
      %v4380 = vrot.slane %v4237, 1
      %v4381 = vsel %vm454, %v4378, %v4380
      %4382 = vrot.lane.b32.xlu0 %v4294, 16
      %v4383 = vpop.permute.xlu0 %4382
      %4384 = vrot.lane.b32.xlu0 %v4296, 16
      %v4385 = vpop.permute.xlu0 %4384
      %4386 = vrot.lane.b32.xlu0 %v4299, 16
      %v4387 = vpop.permute.xlu0 %4386
      %4388 = vrot.lane.b32.xlu0 %v4301, 16
      %v4389 = vpop.permute.xlu0 %4388
      %4390 = vrot.lane.b32.xlu0 %v4304, 16
      %v4391 = vpop.permute.xlu0 %4390
      %4392 = vrot.lane.b32.xlu0 %v4306, 16
      %v4393 = vpop.permute.xlu0 %4392
      %4394 = vrot.lane.b32.xlu0 %v4309, 16
      %v4395 = vpop.permute.xlu0 %4394
      %4396 = vrot.lane.b32.xlu0 %v4311, 16
      %v4397 = vpop.permute.xlu0 %4396
      %4398 = vrot.lane.b32.xlu0 %v4314, 16
      %v4399 = vpop.permute.xlu0 %4398
      %4400 = vrot.lane.b32.xlu0 %v4316, 16
      %v4401 = vpop.permute.xlu0 %4400
      %4402 = vrot.lane.b32.xlu0 %v4319, 16
      %v4403 = vpop.permute.xlu0 %4402
      %4404 = vrot.lane.b32.xlu0 %v4321, 16
      %v4405 = vpop.permute.xlu0 %4404
      %4406 = vrot.lane.b32.xlu0 %v4324, 16
      %v4407 = vpop.permute.xlu0 %4406
      %4408 = vrot.lane.b32.xlu0 %v4326, 16
      %v4409 = vpop.permute.xlu0 %4408
      %4410 = vrot.lane.b32.xlu0 %v4329, 16
      %v4411 = vpop.permute.xlu0 %4410
      %4412 = vrot.lane.b32.xlu0 %v4331, 16
      %v4413 = vpop.permute.xlu0 %4412
      %4414 = vrot.lane.b32.xlu0 %v4334, 16
      %v4415 = vpop.permute.xlu0 %4414
      %4416 = vrot.lane.b32.xlu0 %v4336, 16
      %v4417 = vpop.permute.xlu0 %4416
      %4418 = vrot.lane.b32.xlu0 %v4339, 16
      %v4419 = vpop.permute.xlu0 %4418
      %4420 = vrot.lane.b32.xlu0 %v4341, 16
      %v4421 = vpop.permute.xlu0 %4420
      %4422 = vrot.lane.b32.xlu0 %v4344, 16
      %v4423 = vpop.permute.xlu0 %4422
      %4424 = vrot.lane.b32.xlu0 %v4346, 16
      %v4425 = vpop.permute.xlu0 %4424
      %4426 = vrot.lane.b32.xlu0 %v4349, 16
      %v4427 = vpop.permute.xlu0 %4426
      %4428 = vrot.lane.b32.xlu0 %v4351, 16
      %v4429 = vpop.permute.xlu0 %4428
      %4430 = vrot.lane.b32.xlu0 %v4354, 16
      %v4431 = vpop.permute.xlu0 %4430
      %4432 = vrot.lane.b32.xlu0 %v4356, 16
      %v4433 = vpop.permute.xlu0 %4432
      %4434 = vrot.lane.b32.xlu0 %v4359, 16
      %v4435 = vpop.permute.xlu0 %4434
      %4436 = vrot.lane.b32.xlu0 %v4361, 16
      %v4437 = vpop.permute.xlu0 %4436
      %4438 = vrot.lane.b32.xlu0 %v4364, 16
      %v4439 = vpop.permute.xlu0 %4438
      %4440 = vrot.lane.b32.xlu0 %v4366, 16
      %v4441 = vpop.permute.xlu0 %4440
      %4442 = vrot.lane.b32.xlu0 %v4369, 16
      %v4443 = vpop.permute.xlu0 %4442
      %4444 = vrot.lane.b32.xlu0 %v4371, 16
      %v4445 = vpop.permute.xlu0 %4444
      %4446 = vrot.lane.b32.xlu0 %v4374, 16
      %v4447 = vpop.permute.xlu0 %4446
      %4448 = vrot.lane.b32.xlu0 %v4376, 16
      %v4449 = vpop.permute.xlu0 %4448
      %4450 = vrot.lane.b32.xlu0 %v4379, 16
      %v4451 = vpop.permute.xlu0 %4450
      %4452 = vrot.lane.b32.xlu0 %v4381, 16
      %v4453 = vpop.permute.xlu0 %4452
      %v4490 = vrot.slane %v4184, 2
      %v4491 = vrot.slane %v4185, 2
      %v4492 = vsel %vm653, %v4490, %v4491
      %v4493 = vrot.slane %v4186, 2
      %v4494 = vsel %vm653, %v4491, %v4493
      %v4495 = vrot.slane %v4187, 2
      %v4496 = vrot.slane %v4188, 2
      %v4497 = vsel %vm653, %v4495, %v4496
      %v4498 = vrot.slane %v4189, 2
      %v4499 = vsel %vm653, %v4496, %v4498
      %v4500 = vrot.slane %v4190, 2
      %v4501 = vrot.slane %v4191, 2
      %v4502 = vsel %vm653, %v4500, %v4501
      %v4503 = vrot.slane %v4192, 2
      %v4504 = vsel %vm653, %v4501, %v4503
      %v4505 = vrot.slane %v4193, 2
      %v4506 = vrot.slane %v4194, 2
      %v4507 = vsel %vm653, %v4505, %v4506
      %v4508 = vrot.slane %v4195, 2
      %v4509 = vsel %vm653, %v4506, %v4508
      %v4510 = vrot.slane %v4196, 2
      %v4511 = vrot.slane %v4197, 2
      %v4512 = vsel %vm653, %v4510, %v4511
      %v4513 = vrot.slane %v4198, 2
      %v4514 = vsel %vm653, %v4511, %v4513
      %v4515 = vrot.slane %v4199, 2
      %v4516 = vrot.slane %v4200, 2
      %v4517 = vsel %vm653, %v4515, %v4516
      %v4518 = vrot.slane %v4201, 2
      %v4519 = vsel %vm653, %v4516, %v4518
      %v4520 = vrot.slane %v4202, 2
      %v4521 = vrot.slane %v4203, 2
      %v4522 = vsel %vm653, %v4520, %v4521
      %v4523 = vrot.slane %v4204, 2
      %v4524 = vsel %vm653, %v4521, %v4523
      %v4525 = vrot.slane %v4205, 2
      %v4526 = vrot.slane %v4206, 2
      %v4527 = vsel %vm653, %v4525, %v4526
      %v4528 = vrot.slane %v4207, 2
      %v4529 = vsel %vm653, %v4526, %v4528
      %v4530 = vrot.slane %v4208, 2
      %v4531 = vrot.slane %v4209, 2
      %v4532 = vsel %vm653, %v4530, %v4531
      %v4533 = vrot.slane %v4210, 2
      %v4534 = vsel %vm653, %v4531, %v4533
      %v4535 = vrot.slane %v4211, 2
      %v4536 = vrot.slane %v4212, 2
      %v4537 = vsel %vm653, %v4535, %v4536
      %v4538 = vrot.slane %v4213, 2
      %v4539 = vsel %vm653, %v4536, %v4538
      %v4540 = vrot.slane %v4214, 2
      %v4541 = vrot.slane %v4215, 2
      %v4542 = vsel %vm653, %v4540, %v4541
      %v4543 = vrot.slane %v4216, 2
      %v4544 = vsel %vm653, %v4541, %v4543
      %v4545 = vrot.slane %v4217, 2
      %v4546 = vrot.slane %v4218, 2
      %v4547 = vsel %vm653, %v4545, %v4546
      %v4548 = vrot.slane %v4219, 2
      %v4549 = vsel %vm653, %v4546, %v4548
      %v4550 = vrot.slane %v4220, 2
      %v4551 = vrot.slane %v4221, 2
      %v4552 = vsel %vm653, %v4550, %v4551
      %v4553 = vrot.slane %v4222, 2
      %v4554 = vsel %vm653, %v4551, %v4553
      %v4555 = vrot.slane %v4223, 2
      %v4556 = vrot.slane %v4224, 2
      %v4557 = vsel %vm653, %v4555, %v4556
      %v4558 = vrot.slane %v4225, 2
      %v4559 = vsel %vm653, %v4556, %v4558
      %v4560 = vrot.slane %v4226, 2
      %v4561 = vrot.slane %v4227, 2
      %v4562 = vsel %vm653, %v4560, %v4561
      %v4563 = vrot.slane %v4228, 2
      %v4564 = vsel %vm653, %v4561, %v4563
      %v4565 = vrot.slane %v4229, 2
      %v4566 = vrot.slane %v4230, 2
      %v4567 = vsel %vm653, %v4565, %v4566
      %v4568 = vrot.slane %v4231, 2
      %v4569 = vsel %vm653, %v4566, %v4568
      %v4570 = vrot.slane %v4232, 2
      %v4571 = vrot.slane %v4233, 2
      %v4572 = vsel %vm653, %v4570, %v4571
      %v4573 = vrot.slane %v4234, 2
      %v4574 = vsel %vm653, %v4571, %v4573
      %v4575 = vrot.slane %v4235, 2
      %v4576 = vrot.slane %v4236, 2
      %v4577 = vsel %vm653, %v4575, %v4576
      %v4578 = vrot.slane %v4237, 2
      %v4579 = vsel %vm653, %v4576, %v4578
      %4580 = vrot.lane.b32.xlu0 %v4492, 32
      %v4581 = vpop.permute.xlu0 %4580
      %4582 = vrot.lane.b32.xlu0 %v4494, 32
      %v4583 = vpop.permute.xlu0 %4582
      %4584 = vrot.lane.b32.xlu0 %v4497, 32
      %v4585 = vpop.permute.xlu0 %4584
      %4586 = vrot.lane.b32.xlu0 %v4499, 32
      %v4587 = vpop.permute.xlu0 %4586
      %4588 = vrot.lane.b32.xlu0 %v4502, 32
      %v4589 = vpop.permute.xlu0 %4588
      %4590 = vrot.lane.b32.xlu0 %v4504, 32
      %v4591 = vpop.permute.xlu0 %4590
      %4592 = vrot.lane.b32.xlu0 %v4507, 32
      %v4593 = vpop.permute.xlu0 %4592
      %4594 = vrot.lane.b32.xlu0 %v4509, 32
      %v4595 = vpop.permute.xlu0 %4594
      %4596 = vrot.lane.b32.xlu0 %v4512, 32
      %v4597 = vpop.permute.xlu0 %4596
      %4598 = vrot.lane.b32.xlu0 %v4514, 32
      %v4599 = vpop.permute.xlu0 %4598
      %4600 = vrot.lane.b32.xlu0 %v4517, 32
      %v4601 = vpop.permute.xlu0 %4600
      %4602 = vrot.lane.b32.xlu0 %v4519, 32
      %v4603 = vpop.permute.xlu0 %4602
      %4604 = vrot.lane.b32.xlu0 %v4522, 32
      %v4605 = vpop.permute.xlu0 %4604
      %4606 = vrot.lane.b32.xlu0 %v4524, 32
      %v4607 = vpop.permute.xlu0 %4606
      %4608 = vrot.lane.b32.xlu0 %v4527, 32
      %v4609 = vpop.permute.xlu0 %4608
      %4610 = vrot.lane.b32.xlu0 %v4529, 32
      %v4611 = vpop.permute.xlu0 %4610
      %4612 = vrot.lane.b32.xlu0 %v4532, 32
      %v4613 = vpop.permute.xlu0 %4612
      %4614 = vrot.lane.b32.xlu0 %v4534, 32
      %v4615 = vpop.permute.xlu0 %4614
      %4616 = vrot.lane.b32.xlu0 %v4537, 32
      %v4617 = vpop.permute.xlu0 %4616
      %4618 = vrot.lane.b32.xlu0 %v4539, 32
      %v4619 = vpop.permute.xlu0 %4618
      %4620 = vrot.lane.b32.xlu0 %v4542, 32
      %v4621 = vpop.permute.xlu0 %4620
      %4622 = vrot.lane.b32.xlu0 %v4544, 32
      %v4623 = vpop.permute.xlu0 %4622
      %4624 = vrot.lane.b32.xlu0 %v4547, 32
      %v4625 = vpop.permute.xlu0 %4624
      %4626 = vrot.lane.b32.xlu0 %v4549, 32
      %v4627 = vpop.permute.xlu0 %4626
      %4628 = vrot.lane.b32.xlu0 %v4552, 32
      %v4629 = vpop.permute.xlu0 %4628
      %4630 = vrot.lane.b32.xlu0 %v4554, 32
      %v4631 = vpop.permute.xlu0 %4630
      %4632 = vrot.lane.b32.xlu0 %v4557, 32
      %v4633 = vpop.permute.xlu0 %4632
      %4634 = vrot.lane.b32.xlu0 %v4559, 32
      %v4635 = vpop.permute.xlu0 %4634
      %4636 = vrot.lane.b32.xlu0 %v4562, 32
      %v4637 = vpop.permute.xlu0 %4636
      %4638 = vrot.lane.b32.xlu0 %v4564, 32
      %v4639 = vpop.permute.xlu0 %4638
      %4640 = vrot.lane.b32.xlu0 %v4567, 32
      %v4641 = vpop.permute.xlu0 %4640
      %4642 = vrot.lane.b32.xlu0 %v4569, 32
      %v4643 = vpop.permute.xlu0 %4642
      %4644 = vrot.lane.b32.xlu0 %v4572, 32
      %v4645 = vpop.permute.xlu0 %4644
      %4646 = vrot.lane.b32.xlu0 %v4574, 32
      %v4647 = vpop.permute.xlu0 %4646
      %4648 = vrot.lane.b32.xlu0 %v4577, 32
      %v4649 = vpop.permute.xlu0 %4648
      %4650 = vrot.lane.b32.xlu0 %v4579, 32
      %v4651 = vpop.permute.xlu0 %4650
      %v4688 = vsel %vm171, %v4184, %v4383
      %v4689 = vsel %vm171, %v4185, %v4385
      %v4690 = vsel %vm171, %v4187, %v4387
      %v4691 = vsel %vm171, %v4188, %v4389
      %v4692 = vsel %vm171, %v4190, %v4391
      %v4693 = vsel %vm171, %v4191, %v4393
      %v4694 = vsel %vm171, %v4193, %v4395
      %v4695 = vsel %vm171, %v4194, %v4397
      %v4696 = vsel %vm171, %v4196, %v4399
      %v4697 = vsel %vm171, %v4197, %v4401
      %v4698 = vsel %vm171, %v4199, %v4403
      %v4699 = vsel %vm171, %v4200, %v4405
      %v4700 = vsel %vm171, %v4202, %v4407
      %v4701 = vsel %vm171, %v4203, %v4409
      %v4702 = vsel %vm171, %v4205, %v4411
      %v4703 = vsel %vm171, %v4206, %v4413
      %v4704 = vsel %vm171, %v4208, %v4415
      %v4705 = vsel %vm171, %v4209, %v4417
      %v4706 = vsel %vm171, %v4211, %v4419
      %v4707 = vsel %vm171, %v4212, %v4421
      %v4708 = vsel %vm171, %v4214, %v4423
      %v4709 = vsel %vm171, %v4215, %v4425
      %v4710 = vsel %vm171, %v4217, %v4427
      %v4711 = vsel %vm171, %v4218, %v4429
      %v4712 = vsel %vm171, %v4220, %v4431
      %v4713 = vsel %vm171, %v4221, %v4433
      %v4714 = vsel %vm171, %v4223, %v4435
      %v4715 = vsel %vm171, %v4224, %v4437
      %v4716 = vsel %vm171, %v4226, %v4439
      %v4717 = vsel %vm171, %v4227, %v4441
      %v4718 = vsel %vm171, %v4229, %v4443
      %v4719 = vsel %vm171, %v4230, %v4445
      %v4720 = vsel %vm171, %v4232, %v4447
      %v4721 = vsel %vm171, %v4233, %v4449
      %v4722 = vsel %vm171, %v4235, %v4451
      %v4723 = vsel %vm171, %v4236, %v4453
      %v4724 = vsel %vm888, %v4688, %v4581
      %v4725 = vsel %vm888, %v4689, %v4583
      %v4726 = vsel %vm888, %v4690, %v4585
      %v4727 = vsel %vm888, %v4691, %v4587
      %v4728 = vsel %vm888, %v4692, %v4589
      %v4729 = vsel %vm888, %v4693, %v4591
      %v4730 = vsel %vm888, %v4694, %v4593
      %v4731 = vsel %vm888, %v4695, %v4595
      %v4732 = vsel %vm888, %v4696, %v4597
      %v4733 = vsel %vm888, %v4697, %v4599
      %v4734 = vsel %vm888, %v4698, %v4601
      %v4735 = vsel %vm888, %v4699, %v4603
      %v4736 = vsel %vm888, %v4700, %v4605
      %v4737 = vsel %vm888, %v4701, %v4607
      %v4738 = vsel %vm888, %v4702, %v4609
      %v4739 = vsel %vm888, %v4703, %v4611
      %v4740 = vsel %vm888, %v4704, %v4613
      %v4741 = vsel %vm888, %v4705, %v4615
      %v4742 = vsel %vm888, %v4706, %v4617
      %v4743 = vsel %vm888, %v4707, %v4619
      %v4744 = vsel %vm888, %v4708, %v4621
      %v4745 = vsel %vm888, %v4709, %v4623
      %v4746 = vsel %vm888, %v4710, %v4625
      %v4747 = vsel %vm888, %v4711, %v4627
      %v4748 = vsel %vm888, %v4712, %v4629
      %v4749 = vsel %vm888, %v4713, %v4631
      %v4750 = vsel %vm888, %v4714, %v4633
      %v4751 = vsel %vm888, %v4715, %v4635
      %v4752 = vsel %vm888, %v4716, %v4637
      %v4753 = vsel %vm888, %v4717, %v4639
      %v4754 = vsel %vm888, %v4718, %v4641
      %v4755 = vsel %vm888, %v4719, %v4643
      %v4756 = vsel %vm888, %v4720, %v4645
      %v4757 = vsel %vm888, %v4721, %v4647
      %v4758 = vsel %vm888, %v4722, %v4649
      %v4759 = vsel %vm888, %v4723, %v4651
      %4792 = vrot.lane.b32.xlu0 %v4726, 48
      %v4793 = vpop.permute.xlu0 %4792
      %4794 = vrot.lane.b32.xlu0 %v4727, 48
      %v4795 = vpop.permute.xlu0 %4794
      %4796 = vrot.lane.b32.xlu0 %v4728, 48
      %v4797 = vpop.permute.xlu0 %4796
      %4798 = vrot.lane.b32.xlu0 %v4729, 48
      %v4799 = vpop.permute.xlu0 %4798
      %4800 = vrot.lane.b32.xlu0 %v4730, 48
      %v4801 = vpop.permute.xlu0 %4800
      %4802 = vrot.lane.b32.xlu0 %v4731, 48
      %v4803 = vpop.permute.xlu0 %4802
      %4804 = vrot.lane.b32.xlu0 %v4732, 48
      %v4805 = vpop.permute.xlu0 %4804
      %4806 = vrot.lane.b32.xlu0 %v4733, 48
      %v4807 = vpop.permute.xlu0 %4806
      %4808 = vrot.lane.b32.xlu0 %v4734, 48
      %v4809 = vpop.permute.xlu0 %4808
      %4810 = vrot.lane.b32.xlu0 %v4735, 48
      %v4811 = vpop.permute.xlu0 %4810
      %4812 = vrot.lane.b32.xlu0 %v4736, 48
      %v4813 = vpop.permute.xlu0 %4812
      %4814 = vrot.lane.b32.xlu0 %v4737, 48
      %v4815 = vpop.permute.xlu0 %4814
      %4816 = vrot.lane.b32.xlu0 %v4738, 48
      %v4817 = vpop.permute.xlu0 %4816
      %4818 = vrot.lane.b32.xlu0 %v4739, 48
      %v4819 = vpop.permute.xlu0 %4818
      %4820 = vrot.lane.b32.xlu0 %v4740, 48
      %v4821 = vpop.permute.xlu0 %4820
      %4822 = vrot.lane.b32.xlu0 %v4741, 48
      %v4823 = vpop.permute.xlu0 %4822
      %4824 = vrot.lane.b32.xlu0 %v4742, 48
      %v4825 = vpop.permute.xlu0 %4824
      %4826 = vrot.lane.b32.xlu0 %v4743, 48
      %v4827 = vpop.permute.xlu0 %4826
      %4828 = vrot.lane.b32.xlu0 %v4744, 48
      %v4829 = vpop.permute.xlu0 %4828
      %4830 = vrot.lane.b32.xlu0 %v4745, 48
      %v4831 = vpop.permute.xlu0 %4830
      %4832 = vrot.lane.b32.xlu0 %v4746, 48
      %v4833 = vpop.permute.xlu0 %4832
      %4834 = vrot.lane.b32.xlu0 %v4747, 48
      %v4835 = vpop.permute.xlu0 %4834
      %4836 = vrot.lane.b32.xlu0 %v4748, 48
      %v4837 = vpop.permute.xlu0 %4836
      %4838 = vrot.lane.b32.xlu0 %v4749, 48
      %v4839 = vpop.permute.xlu0 %4838
      %4840 = vrot.lane.b32.xlu0 %v4750, 48
      %v4841 = vpop.permute.xlu0 %4840
      %4842 = vrot.lane.b32.xlu0 %v4751, 48
      %v4843 = vpop.permute.xlu0 %4842
      %4844 = vrot.lane.b32.xlu0 %v4752, 48
      %v4845 = vpop.permute.xlu0 %4844
      %4846 = vrot.lane.b32.xlu0 %v4753, 48
      %v4847 = vpop.permute.xlu0 %4846
      %4848 = vrot.lane.b32.xlu0 %v4754, 48
      %v4849 = vpop.permute.xlu0 %4848
      %4850 = vrot.lane.b32.xlu0 %v4755, 48
      %v4851 = vpop.permute.xlu0 %4850
      %4852 = vrot.lane.b32.xlu0 %v4756, 48
      %v4853 = vpop.permute.xlu0 %4852
      %4854 = vrot.lane.b32.xlu0 %v4757, 48
      %v4855 = vpop.permute.xlu0 %4854
      %4890 = vrot.lane.b32.xlu0 %v4728, 96
      %v4891 = vpop.permute.xlu0 %4890
      %4892 = vrot.lane.b32.xlu0 %v4729, 96
      %v4893 = vpop.permute.xlu0 %4892
      %4894 = vrot.lane.b32.xlu0 %v4730, 96
      %v4895 = vpop.permute.xlu0 %4894
      %4896 = vrot.lane.b32.xlu0 %v4731, 96
      %v4897 = vpop.permute.xlu0 %4896
      %4898 = vrot.lane.b32.xlu0 %v4732, 96
      %v4899 = vpop.permute.xlu0 %4898
      %4900 = vrot.lane.b32.xlu0 %v4733, 96
      %v4901 = vpop.permute.xlu0 %4900
      %4902 = vrot.lane.b32.xlu0 %v4734, 96
      %v4903 = vpop.permute.xlu0 %4902
      %4904 = vrot.lane.b32.xlu0 %v4735, 96
      %v4905 = vpop.permute.xlu0 %4904
      %4906 = vrot.lane.b32.xlu0 %v4736, 96
      %v4907 = vpop.permute.xlu0 %4906
      %4908 = vrot.lane.b32.xlu0 %v4737, 96
      %v4909 = vpop.permute.xlu0 %4908
      %4910 = vrot.lane.b32.xlu0 %v4738, 96
      %v4911 = vpop.permute.xlu0 %4910
      %4912 = vrot.lane.b32.xlu0 %v4739, 96
      %v4913 = vpop.permute.xlu0 %4912
      %4914 = vrot.lane.b32.xlu0 %v4740, 96
      %v4915 = vpop.permute.xlu0 %4914
      %4916 = vrot.lane.b32.xlu0 %v4741, 96
      %v4917 = vpop.permute.xlu0 %4916
      %4918 = vrot.lane.b32.xlu0 %v4742, 96
      %v4919 = vpop.permute.xlu0 %4918
      %4920 = vrot.lane.b32.xlu0 %v4743, 96
      %v4921 = vpop.permute.xlu0 %4920
      %4922 = vrot.lane.b32.xlu0 %v4744, 96
      %v4923 = vpop.permute.xlu0 %4922
      %4924 = vrot.lane.b32.xlu0 %v4745, 96
      %v4925 = vpop.permute.xlu0 %4924
      %4926 = vrot.lane.b32.xlu0 %v4746, 96
      %v4927 = vpop.permute.xlu0 %4926
      %4928 = vrot.lane.b32.xlu0 %v4747, 96
      %v4929 = vpop.permute.xlu0 %4928
      %4930 = vrot.lane.b32.xlu0 %v4748, 96
      %v4931 = vpop.permute.xlu0 %4930
      %4932 = vrot.lane.b32.xlu0 %v4749, 96
      %v4933 = vpop.permute.xlu0 %4932
      %4934 = vrot.lane.b32.xlu0 %v4750, 96
      %v4935 = vpop.permute.xlu0 %4934
      %4936 = vrot.lane.b32.xlu0 %v4751, 96
      %v4937 = vpop.permute.xlu0 %4936
      %4938 = vrot.lane.b32.xlu0 %v4752, 96
      %v4939 = vpop.permute.xlu0 %4938
      %4940 = vrot.lane.b32.xlu0 %v4753, 96
      %v4941 = vpop.permute.xlu0 %4940
      %4942 = vrot.lane.b32.xlu0 %v4754, 96
      %v4943 = vpop.permute.xlu0 %4942
      %4944 = vrot.lane.b32.xlu0 %v4755, 96
      %v4945 = vpop.permute.xlu0 %4944
      %4946 = vrot.lane.b32.xlu0 %v4756, 96
      %v4947 = vpop.permute.xlu0 %4946
      %4948 = vrot.lane.b32.xlu0 %v4757, 96
      %v4949 = vpop.permute.xlu0 %4948
      %4950 = vrot.lane.b32.xlu0 %v4758, 96
      %v4951 = vpop.permute.xlu0 %4950
      %4952 = vrot.lane.b32.xlu0 %v4759, 96
      %v4953 = vpop.permute.xlu0 %4952
      %v4986 = vsel %vm1151, %v4724, %v4793
      %v4987 = vsel %vm1151, %v4725, %v4795
      %v4988 = vsel %vm1151, %v4726, %v4797
      %v4989 = vsel %vm1151, %v4727, %v4799
      %v4990 = vsel %vm1151, %v4728, %v4801
      %v4991 = vsel %vm1151, %v4729, %v4803
      %v4992 = vsel %vm1151, %v4730, %v4805
      %v4993 = vsel %vm1151, %v4731, %v4807
      %v4994 = vsel %vm1151, %v4732, %v4809
      %v4995 = vsel %vm1151, %v4733, %v4811
      %v4996 = vsel %vm1151, %v4734, %v4813
      %v4997 = vsel %vm1151, %v4735, %v4815
      %v4998 = vsel %vm1151, %v4736, %v4817
      %v4999 = vsel %vm1151, %v4737, %v4819
      %v5000 = vsel %vm1151, %v4738, %v4821
      %v5001 = vsel %vm1151, %v4739, %v4823
      %v5002 = vsel %vm1151, %v4740, %v4825
      %v5003 = vsel %vm1151, %v4741, %v4827
      %v5004 = vsel %vm1151, %v4742, %v4829
      %v5005 = vsel %vm1151, %v4743, %v4831
      %v5006 = vsel %vm1151, %v4744, %v4833
      %v5007 = vsel %vm1151, %v4745, %v4835
      %v5008 = vsel %vm1151, %v4746, %v4837
      %v5009 = vsel %vm1151, %v4747, %v4839
      %v5010 = vsel %vm1151, %v4748, %v4841
      %v5011 = vsel %vm1151, %v4749, %v4843
      %v5012 = vsel %vm1151, %v4750, %v4845
      %v5013 = vsel %vm1151, %v4751, %v4847
      %v5014 = vsel %vm1151, %v4752, %v4849
      %v5015 = vsel %vm1151, %v4753, %v4851
      %v5016 = vsel %vm1151, %v4754, %v4853
      %v5017 = vsel %vm1151, %v4755, %v4855
      %v5018 = vsel %vm1184, %v4986, %v4891
      %v5019 = vsel %vm1184, %v4987, %v4893
      %v5020 = vsel %vm1184, %v4988, %v4895
      %v5021 = vsel %vm1184, %v4989, %v4897
      %v5022 = vsel %vm1184, %v4990, %v4899
      %v5023 = vsel %vm1184, %v4991, %v4901
      %v5024 = vsel %vm1184, %v4992, %v4903
      %v5025 = vsel %vm1184, %v4993, %v4905
      %v5026 = vsel %vm1184, %v4994, %v4907
      %v5027 = vsel %vm1184, %v4995, %v4909
      %v5028 = vsel %vm1184, %v4996, %v4911
      %v5029 = vsel %vm1184, %v4997, %v4913
      %v5030 = vsel %vm1184, %v4998, %v4915
      %v5031 = vsel %vm1184, %v4999, %v4917
      %v5032 = vsel %vm1184, %v5000, %v4919
      %v5033 = vsel %vm1184, %v5001, %v4921
      %v5034 = vsel %vm1184, %v5002, %v4923
      %v5035 = vsel %vm1184, %v5003, %v4925
      %v5036 = vsel %vm1184, %v5004, %v4927
      %v5037 = vsel %vm1184, %v5005, %v4929
      %v5038 = vsel %vm1184, %v5006, %v4931
      %v5039 = vsel %vm1184, %v5007, %v4933
      %v5040 = vsel %vm1184, %v5008, %v4935
      %v5041 = vsel %vm1184, %v5009, %v4937
      %v5042 = vsel %vm1184, %v5010, %v4939
      %v5043 = vsel %vm1184, %v5011, %v4941
      %v5044 = vsel %vm1184, %v5012, %v4943
      %v5045 = vsel %vm1184, %v5013, %v4945
      %v5046 = vsel %vm1184, %v5014, %v4947
      %v5047 = vsel %vm1184, %v5015, %v4949
      %v5048 = vsel %vm1184, %v5016, %v4951
      %v5049 = vsel %vm1184, %v5017, %v4953
      %s5050 = scalar_lea.vmem %s1, 432
      %v5051 = vld [vmem:[%s5050] sm:$0xff]
      %v5052 = vld [vmem:[%s5050 + $0x8] sm:$0xff]
      %v5053 = vld [vmem:[%s5050 + $0x10] sm:$0xff]
      %v5054 = vld [vmem:[%s5050 + $0x18] sm:$0xff]
      %v5055 = vld [vmem:[%s5050 + $0x20] sm:$0xff]
      %v5056 = vld [vmem:[%s5050 + $0x28] sm:$0xff]
      %v5057 = vld [vmem:[%s5050 + $0x30] sm:$0xff]
      %v5058 = vld [vmem:[%s5050 + $0x38] sm:$0xff]
      %v5059 = vld [vmem:[%s5050 + $0x40] sm:$0xff]
      %v5060 = vld [vmem:[%s5050 + $0x48] sm:$0xff]
      %v5061 = vld [vmem:[%s5050 + $0x50] sm:$0xff]
      %v5062 = vld [vmem:[%s5050 + $0x58] sm:$0xff]
      %v5063 = vld [vmem:[%s5050 + $0x60] sm:$0xff]
      %v5064 = vld [vmem:[%s5050 + $0x68] sm:$0xff]
      %v5065 = vld [vmem:[%s5050 + $0x70] sm:$0xff]
      %v5066 = vld [vmem:[%s5050 + $0x78] sm:$0xff]
      %v5067 = vld [vmem:[%s5050 + $0x80] sm:$0xff]
      %v5068 = vld [vmem:[%s5050 + $0x88] sm:$0xff]
      %s5069 = scalar_lea.vmem %s2, 3
      %v5070 = vld [vmem:[%s5069] sm:$0x1]
      %v5072 = vlaneseq
      %v5073 = vshrl.u32 %v5072, 7
      %v5074 = vsub.s32 0, %v5073
      %v5075 = vrot.slane %v5070, %v5074
      %v5077 = vsel %vm171, %v4891, 0
      %v5079 = vsel %vm171, %v4893, 0
      %v5081 = vsel %vm171, %v4895, 0
      %v5083 = vsel %vm171, %v4897, 0
      %v5085 = vsel %vm171, %v4899, 0
      %v5087 = vsel %vm171, %v4901, 0
      %v5089 = vsel %vm171, %v4903, 0
      %v5091 = vsel %vm171, %v4905, 0
      %v5093 = vsel %vm171, %v4907, 0
      %v5095 = vsel %vm171, %v4909, 0
      %v5097 = vsel %vm171, %v4911, 0
      %v5099 = vsel %vm171, %v4913, 0
      %v5101 = vsel %vm171, %v4915, 0
      %v5103 = vsel %vm171, %v4917, 0
      %v5105 = vsel %vm171, %v4919, 0
      %v5107 = vsel %vm171, %v4921, 0
      %v5109 = vsel %vm171, %v4923, 0
      %v5111 = vsel %vm171, %v4925, 0
      %v5113 = vsel %vm171, %v4927, 0
      %v5115 = vsel %vm171, %v4929, 0
      %v5117 = vsel %vm171, %v4931, 0
      %v5119 = vsel %vm171, %v4933, 0
      %v5121 = vsel %vm171, %v4935, 0
      %v5123 = vsel %vm171, %v4937, 0
      %v5125 = vsel %vm171, %v4939, 0
      %v5127 = vsel %vm171, %v4941, 0
      %v5129 = vsel %vm171, %v4943, 0
      %v5131 = vsel %vm171, %v4945, 0
      %v5133 = vsel %vm171, %v4947, 0
      %v5135 = vsel %vm171, %v4949, 0
      %v5137 = vsel %vm171, %v4951, 0
      %v5139 = vsel %vm171, %v4953, 0
      %5141 = vmatprep.subr.mxu0 0.0
      %5142 = vmatpush1.msra.mxu0 %v5066
      %5143 = vmatprep.subr.mxu0 0.0
      %5144 = vmatpush1.msra.mxu0 %v5065
      %5145 = vmatprep.subr.mxu0 0.0
      %5146 = vmatpush1.msra.mxu0 %v5064
      %5147 = vmatprep.subr.mxu0 0.0
      %5148 = vmatpush1.msra.mxu0 %v5063
      %5149 = vmatprep.subr.mxu0 0.0
      %5150 = vmatpush1.msra.mxu0 %v5062
      %5151 = vmatprep.subr.mxu0 0.0
      %5152 = vmatpush1.msra.mxu0 %v5061
      %5153 = vmatprep.subr.mxu0 0.0
      %5154 = vmatpush1.msra.mxu0 %v5060
      %5155 = vmatprep.subr.mxu0 0.0
      %5156 = vmatpush1.msra.mxu0 %v5059
      %5157 = vmatprep.subr.mxu0 0.0
      %5158 = vmatpush1.msra.mxu0 %v5058
      %5159 = vmatprep.subr.mxu0 0.0
      %5160 = vmatpush1.msra.mxu0 %v5057
      %5161 = vmatprep.subr.mxu0 0.0
      %5162 = vmatpush1.msra.mxu0 %v5056
      %5163 = vmatprep.subr.mxu0 0.0
      %5164 = vmatpush1.msra.mxu0 %v5055
      %5165 = vmatprep.subr.mxu0 0.0
      %5166 = vmatpush1.msra.mxu0 %v5054
      %5167 = vmatprep.subr.mxu0 0.0
      %5168 = vmatpush1.msra.mxu0 %v5053
      %5169 = vmatprep.subr.mxu0 0.0
      %5170 = vmatpush1.msra.mxu0 %v5052
      %5171 = vmatprep.subr.mxu0 0.0
      %5172 = vmatpush1.msra.mxu0 %v5051
      %5173 = vmatprep.subr.mxu0 0.0
      %5174 = vmatpush2.msra.mxu0 0.0
      %5175 = vmatprep.subr.mxu0 0.0
      %5176 = vmatpush2.msra.mxu0 0.0
      %5177 = vmatprep.subr.mxu0 0.0
      %5178 = vmatpush2.msra.mxu0 0.0
      %5179 = vmatprep.subr.mxu0 0.0
      %5180 = vmatpush2.msra.mxu0 0.0
      %5181 = vmatprep.subr.mxu0 0.0
      %5182 = vmatpush2.msra.mxu0 0.0
      %5183 = vmatprep.subr.mxu0 0.0
      %5184 = vmatpush2.msra.mxu0 0.0
      %5185 = vmatprep.subr.mxu0 0.0
      %5186 = vmatpush2.msra.mxu0 0.0
      %5187 = vmatprep.subr.mxu0 0.0
      %5188 = vmatpush2.msra.mxu0 0.0
      %5189 = vmatprep.subr.mxu0 0.0
      %5190 = vmatpush2.msra.mxu0 0.0
      %5191 = vmatprep.subr.mxu0 0.0
      %5192 = vmatpush2.msra.mxu0 0.0
      %5193 = vmatprep.subr.mxu0 0.0
      %5194 = vmatpush2.msra.mxu0 0.0
      %5195 = vmatprep.subr.mxu0 0.0
      %5196 = vmatpush2.msra.mxu0 0.0
      %5197 = vmatprep.subr.mxu0 0.0
      %5198 = vmatpush2.msra.mxu0 0.0
      %5199 = vmatprep.subr.mxu0 0.0
      %5200 = vmatpush2.msra.mxu0 0.0
      %5201 = vmatprep.subr.mxu0 0.0
      %5202 = vmatpush2.msra.mxu0 %v5068
      %5203 = vmatprep.subr.mxu0 0.0
      %5204 = vmatpush2.msra.mxu0 %v5067
      %5205 = vmatprep.mubr.f32.mxu0 %v5077
      %5206 = vmatmul.mubr.f32.gmra.mxu0 %v5018
      %v5207 = vpop.f32.mrf.mxu0
      %v5208 = vadd.f32 %v5075, %v5207
      %v5209 = vpop.f32.mrf.mxu0
      %5210 = vmatprep.mubr.f32.mxu0 %v5079
      %5211 = vmatmul.mubr.f32.gmra.mxu0 %v5019
      %v5212 = vpop.f32.mrf.mxu0
      %v5213 = vadd.f32 %v5075, %v5212
      %v5214 = vpop.f32.mrf.mxu0
      %5215 = vmatprep.mubr.f32.mxu0 %v5081
      %5216 = vmatmul.mubr.f32.gmra.mxu0 %v5020
      %v5217 = vpop.f32.mrf.mxu0
      %v5218 = vadd.f32 %v5075, %v5217
      %v5219 = vpop.f32.mrf.mxu0
      %5220 = vmatprep.mubr.f32.mxu0 %v5083
      %5221 = vmatmul.mubr.f32.gmra.mxu0 %v5021
      %v5222 = vpop.f32.mrf.mxu0
      %v5223 = vadd.f32 %v5075, %v5222
      %v5224 = vpop.f32.mrf.mxu0
      %5225 = vmatprep.mubr.f32.mxu0 %v5085
      %5226 = vmatmul.mubr.f32.gmra.mxu0 %v5022
      %v5227 = vpop.f32.mrf.mxu0
      %v5228 = vadd.f32 %v5075, %v5227
      %v5229 = vpop.f32.mrf.mxu0
      %5230 = vmatprep.mubr.f32.mxu0 %v5087
      %5231 = vmatmul.mubr.f32.gmra.mxu0 %v5023
      %v5232 = vpop.f32.mrf.mxu0
      %v5233 = vadd.f32 %v5075, %v5232
      %v5234 = vpop.f32.mrf.mxu0
      %5235 = vmatprep.mubr.f32.mxu0 %v5089
      %5236 = vmatmul.mubr.f32.gmra.mxu0 %v5024
      %v5237 = vpop.f32.mrf.mxu0
      %v5238 = vadd.f32 %v5075, %v5237
      %v5239 = vpop.f32.mrf.mxu0
      %5240 = vmatprep.mubr.f32.mxu0 %v5091
      %5241 = vmatmul.mubr.f32.gmra.mxu0 %v5025
      %v5242 = vpop.f32.mrf.mxu0
      %v5243 = vadd.f32 %v5075, %v5242
      %v5244 = vpop.f32.mrf.mxu0
      %5245 = vmatprep.mubr.f32.mxu0 %v5093
      %5246 = vmatmul.mubr.f32.gmra.mxu0 %v5026
      %v5247 = vpop.f32.mrf.mxu0
      %v5248 = vadd.f32 %v5075, %v5247
      %v5249 = vpop.f32.mrf.mxu0
      %5250 = vmatprep.mubr.f32.mxu0 %v5095
      %5251 = vmatmul.mubr.f32.gmra.mxu0 %v5027
      %v5252 = vpop.f32.mrf.mxu0
      %v5253 = vadd.f32 %v5075, %v5252
      %v5254 = vpop.f32.mrf.mxu0
      %5255 = vmatprep.mubr.f32.mxu0 %v5097
      %5256 = vmatmul.mubr.f32.gmra.mxu0 %v5028
      %v5257 = vpop.f32.mrf.mxu0
      %v5258 = vadd.f32 %v5075, %v5257
      %v5259 = vpop.f32.mrf.mxu0
      %5260 = vmatprep.mubr.f32.mxu0 %v5099
      %5261 = vmatmul.mubr.f32.gmra.mxu0 %v5029
      %v5262 = vpop.f32.mrf.mxu0
      %v5263 = vadd.f32 %v5075, %v5262
      %v5264 = vpop.f32.mrf.mxu0
      %5265 = vmatprep.mubr.f32.mxu0 %v5101
      %5266 = vmatmul.mubr.f32.gmra.mxu0 %v5030
      %v5267 = vpop.f32.mrf.mxu0
      %v5268 = vadd.f32 %v5075, %v5267
      %v5269 = vpop.f32.mrf.mxu0
      %5270 = vmatprep.mubr.f32.mxu0 %v5103
      %5271 = vmatmul.mubr.f32.gmra.mxu0 %v5031
      %v5272 = vpop.f32.mrf.mxu0
      %v5273 = vadd.f32 %v5075, %v5272
      %v5274 = vpop.f32.mrf.mxu0
      %5275 = vmatprep.mubr.f32.mxu0 %v5105
      %5276 = vmatmul.mubr.f32.gmra.mxu0 %v5032
      %v5277 = vpop.f32.mrf.mxu0
      %v5278 = vadd.f32 %v5075, %v5277
      %v5279 = vpop.f32.mrf.mxu0
      %5280 = vmatprep.mubr.f32.mxu0 %v5107
      %5281 = vmatmul.mubr.f32.gmra.mxu0 %v5033
      %v5282 = vpop.f32.mrf.mxu0
      %v5283 = vadd.f32 %v5075, %v5282
      %v5284 = vpop.f32.mrf.mxu0
      %5285 = vmatprep.mubr.f32.mxu0 %v5109
      %5286 = vmatmul.mubr.f32.gmra.mxu0 %v5034
      %v5287 = vpop.f32.mrf.mxu0
      %v5288 = vadd.f32 %v5075, %v5287
      %v5289 = vpop.f32.mrf.mxu0
      %5290 = vmatprep.mubr.f32.mxu0 %v5111
      %5291 = vmatmul.mubr.f32.gmra.mxu0 %v5035
      %v5292 = vpop.f32.mrf.mxu0
      %v5293 = vadd.f32 %v5075, %v5292
      %v5294 = vpop.f32.mrf.mxu0
      %5295 = vmatprep.mubr.f32.mxu0 %v5113
      %5296 = vmatmul.mubr.f32.gmra.mxu0 %v5036
      %v5297 = vpop.f32.mrf.mxu0
      %v5298 = vadd.f32 %v5075, %v5297
      %v5299 = vpop.f32.mrf.mxu0
      %5300 = vmatprep.mubr.f32.mxu0 %v5115
      %5301 = vmatmul.mubr.f32.gmra.mxu0 %v5037
      %v5302 = vpop.f32.mrf.mxu0
      %v5303 = vadd.f32 %v5075, %v5302
      %v5304 = vpop.f32.mrf.mxu0
      %5305 = vmatprep.mubr.f32.mxu0 %v5117
      %5306 = vmatmul.mubr.f32.gmra.mxu0 %v5038
      %v5307 = vpop.f32.mrf.mxu0
      %v5308 = vadd.f32 %v5075, %v5307
      %v5309 = vpop.f32.mrf.mxu0
      %5310 = vmatprep.mubr.f32.mxu0 %v5119
      %5311 = vmatmul.mubr.f32.gmra.mxu0 %v5039
      %v5312 = vpop.f32.mrf.mxu0
      %v5313 = vadd.f32 %v5075, %v5312
      %v5314 = vpop.f32.mrf.mxu0
      %5315 = vmatprep.mubr.f32.mxu0 %v5121
      %5316 = vmatmul.mubr.f32.gmra.mxu0 %v5040
      %v5317 = vpop.f32.mrf.mxu0
      %v5318 = vadd.f32 %v5075, %v5317
      %v5319 = vpop.f32.mrf.mxu0
      %5320 = vmatprep.mubr.f32.mxu0 %v5123
      %5321 = vmatmul.mubr.f32.gmra.mxu0 %v5041
      %v5322 = vpop.f32.mrf.mxu0
      %v5323 = vadd.f32 %v5075, %v5322
      %v5324 = vpop.f32.mrf.mxu0
      %5325 = vmatprep.mubr.f32.mxu0 %v5125
      %5326 = vmatmul.mubr.f32.gmra.mxu0 %v5042
      %v5327 = vpop.f32.mrf.mxu0
      %v5328 = vadd.f32 %v5075, %v5327
      %v5329 = vpop.f32.mrf.mxu0
      %5330 = vmatprep.mubr.f32.mxu0 %v5127
      %5331 = vmatmul.mubr.f32.gmra.mxu0 %v5043
      %v5332 = vpop.f32.mrf.mxu0
      %v5333 = vadd.f32 %v5075, %v5332
      %v5334 = vpop.f32.mrf.mxu0
      %5335 = vmatprep.mubr.f32.mxu0 %v5129
      %5336 = vmatmul.mubr.f32.gmra.mxu0 %v5044
      %v5337 = vpop.f32.mrf.mxu0
      %v5338 = vadd.f32 %v5075, %v5337
      %v5339 = vpop.f32.mrf.mxu0
      %5340 = vmatprep.mubr.f32.mxu0 %v5131
      %5341 = vmatmul.mubr.f32.gmra.mxu0 %v5045
      %v5342 = vpop.f32.mrf.mxu0
      %v5343 = vadd.f32 %v5075, %v5342
      %v5344 = vpop.f32.mrf.mxu0
      %5345 = vmatprep.mubr.f32.mxu0 %v5133
      %5346 = vmatmul.mubr.f32.gmra.mxu0 %v5046
      %v5347 = vpop.f32.mrf.mxu0
      %v5348 = vadd.f32 %v5075, %v5347
      %v5349 = vpop.f32.mrf.mxu0
      %5350 = vmatprep.mubr.f32.mxu0 %v5135
      %5351 = vmatmul.mubr.f32.gmra.mxu0 %v5047
      %v5352 = vpop.f32.mrf.mxu0
      %v5353 = vadd.f32 %v5075, %v5352
      %v5354 = vpop.f32.mrf.mxu0
      %5355 = vmatprep.mubr.f32.mxu0 %v5137
      %5356 = vmatmul.mubr.f32.gmra.mxu0 %v5048
      %v5357 = vpop.f32.mrf.mxu0
      %v5358 = vadd.f32 %v5075, %v5357
      %v5359 = vpop.f32.mrf.mxu0
      %5360 = vmatprep.mubr.f32.mxu0 %v5139
      %5361 = vmatmul.mubr.f32.gmra.mxu0 %v5049
      %v5362 = vpop.f32.mrf.mxu0
      %v5363 = vadd.f32 %v5075, %v5362
      %v5364 = vpop.f32.mrf.mxu0
      %5365 = vdwg.mxu0
      %v5366 = vmax.f32 %v5208, 0.0
      %v5367 = vmax.f32 %v5213, 0.0
      %v5368 = vmax.f32 %v5218, 0.0
      %v5369 = vmax.f32 %v5223, 0.0
      %v5370 = vmax.f32 %v5228, 0.0
      %v5371 = vmax.f32 %v5233, 0.0
      %v5372 = vmax.f32 %v5238, 0.0
      %v5373 = vmax.f32 %v5243, 0.0
      %v5374 = vmax.f32 %v5248, 0.0
      %v5375 = vmax.f32 %v5253, 0.0
      %v5376 = vmax.f32 %v5258, 0.0
      %v5377 = vmax.f32 %v5263, 0.0
      %v5378 = vmax.f32 %v5268, 0.0
      %v5379 = vmax.f32 %v5273, 0.0
      %v5380 = vmax.f32 %v5278, 0.0
      %v5381 = vmax.f32 %v5283, 0.0
      %v5382 = vmax.f32 %v5288, 0.0
      %v5383 = vmax.f32 %v5293, 0.0
      %v5384 = vmax.f32 %v5298, 0.0
      %v5385 = vmax.f32 %v5303, 0.0
      %v5386 = vmax.f32 %v5308, 0.0
      %v5387 = vmax.f32 %v5313, 0.0
      %v5388 = vmax.f32 %v5318, 0.0
      %v5389 = vmax.f32 %v5323, 0.0
      %v5390 = vmax.f32 %v5328, 0.0
      %v5391 = vmax.f32 %v5333, 0.0
      %v5392 = vmax.f32 %v5338, 0.0
      %v5393 = vmax.f32 %v5343, 0.0
      %v5394 = vmax.f32 %v5348, 0.0
      %v5395 = vmax.f32 %v5353, 0.0
      %v5396 = vmax.f32 %v5358, 0.0
      %v5397 = vmax.f32 %v5363, 0.0
      %5398 = vst.msk [vmem:[%s2873 + $0x1] sm:$0xff] %vm171, %v5366
      %5399 = vst.msk [vmem:[%s2873 + $0x9] sm:$0xff] %vm171, %v5367
      %5400 = vst.msk [vmem:[%s2873 + $0x19] sm:$0xff] %vm171, %v5368
      %5401 = vst.msk [vmem:[%s2873 + $0x21] sm:$0xff] %vm171, %v5369
      %5402 = vst.msk [vmem:[%s2873 + $0x31] sm:$0xff] %vm171, %v5370
      %5403 = vst.msk [vmem:[%s2873 + $0x39] sm:$0xff] %vm171, %v5371
      %5404 = vst.msk [vmem:[%s2873 + $0x49] sm:$0xff] %vm171, %v5372
      %5405 = vst.msk [vmem:[%s2873 + $0x51] sm:$0xff] %vm171, %v5373
      %5406 = vst.msk [vmem:[%s2873 + $0x61] sm:$0xff] %vm171, %v5374
      %5407 = vst.msk [vmem:[%s2873 + $0x69] sm:$0xff] %vm171, %v5375
      %5408 = vst.msk [vmem:[%s2873 + $0x79] sm:$0xff] %vm171, %v5376
      %5409 = vst.msk [vmem:[%s2873 + $0x81] sm:$0xff] %vm171, %v5377
      %5410 = vst.msk [vmem:[%s2873 + $0x91] sm:$0xff] %vm171, %v5378
      %5411 = vst.msk [vmem:[%s2873 + $0x99] sm:$0xff] %vm171, %v5379
      %5412 = vst.msk [vmem:[%s2873 + $0xa9] sm:$0xff] %vm171, %v5380
      %5413 = vst.msk [vmem:[%s2873 + $0xb1] sm:$0xff] %vm171, %v5381
      %5414 = vst.msk [vmem:[%s2873 + $0xc1] sm:$0xff] %vm171, %v5382
      %5415 = vst.msk [vmem:[%s2873 + $0xc9] sm:$0xff] %vm171, %v5383
      %5416 = vst.msk [vmem:[%s2873 + $0xd9] sm:$0xff] %vm171, %v5384
      %5417 = vst.msk [vmem:[%s2873 + $0xe1] sm:$0xff] %vm171, %v5385
      %5418 = vst.msk [vmem:[%s2873 + $0xf1] sm:$0xff] %vm171, %v5386
      %5419 = vst.msk [vmem:[%s2873 + $0xf9] sm:$0xff] %vm171, %v5387
      %5420 = vst.msk [vmem:[%s2873 + $0x109] sm:$0xff] %vm171, %v5388
      %5421 = vst.msk [vmem:[%s2873 + $0x111] sm:$0xff] %vm171, %v5389
      %5422 = vst.msk [vmem:[%s2873 + $0x121] sm:$0xff] %vm171, %v5390
      %5423 = vst.msk [vmem:[%s2873 + $0x129] sm:$0xff] %vm171, %v5391
      %5424 = vst.msk [vmem:[%s2873 + $0x139] sm:$0xff] %vm171, %v5392
      %5425 = vst.msk [vmem:[%s2873 + $0x141] sm:$0xff] %vm171, %v5393
      %5426 = vst.msk [vmem:[%s2873 + $0x151] sm:$0xff] %vm171, %v5394
      %5427 = vst.msk [vmem:[%s2873 + $0x159] sm:$0xff] %vm171, %v5395
      %5428 = vst.msk [vmem:[%s2873 + $0x169] sm:$0xff] %vm171, %v5396
      %5429 = vst.msk [vmem:[%s2873 + $0x171] sm:$0xff] %vm171, %v5397
      %v5430 = vld [vmem:[#allocation3] sm:$0xff]
      %v5431 = vld [vmem:[#allocation3 + $0x8] sm:$0xff]
      %v5432 = vld [vmem:[#allocation3 + $0x10] sm:$0x3]
      %v5433 = vld [vmem:[#allocation3 + $0x18] sm:$0xff]
      %v5434 = vld [vmem:[#allocation3 + $0x20] sm:$0xff]
      %v5435 = vld [vmem:[#allocation3 + $0x28] sm:$0x3]
      %v5436 = vld [vmem:[#allocation3 + $0x30] sm:$0xff]
      %v5437 = vld [vmem:[#allocation3 + $0x38] sm:$0xff]
      %v5438 = vld [vmem:[#allocation3 + $0x40] sm:$0x3]
      %v5439 = vld [vmem:[#allocation3 + $0x48] sm:$0xff]
      %v5440 = vld [vmem:[#allocation3 + $0x50] sm:$0xff]
      %v5441 = vld [vmem:[#allocation3 + $0x58] sm:$0x3]
      %v5442 = vld [vmem:[#allocation3 + $0x60] sm:$0xff]
      %v5443 = vld [vmem:[#allocation3 + $0x68] sm:$0xff]
      %v5444 = vld [vmem:[#allocation3 + $0x70] sm:$0x3]
      %v5445 = vld [vmem:[#allocation3 + $0x78] sm:$0xff]
      %v5446 = vld [vmem:[#allocation3 + $0x80] sm:$0xff]
      %v5447 = vld [vmem:[#allocation3 + $0x88] sm:$0x3]
      %v5448 = vld [vmem:[#allocation3 + $0x90] sm:$0xff]
      %v5449 = vld [vmem:[#allocation3 + $0x98] sm:$0xff]
      %v5450 = vld [vmem:[#allocation3 + $0xa0] sm:$0x3]
      %v5451 = vld [vmem:[#allocation3 + $0xa8] sm:$0xff]
      %v5452 = vld [vmem:[#allocation3 + $0xb0] sm:$0xff]
      %v5453 = vld [vmem:[#allocation3 + $0xb8] sm:$0x3]
      %v5454 = vld [vmem:[#allocation3 + $0xc0] sm:$0xff]
      %v5455 = vld [vmem:[#allocation3 + $0xc8] sm:$0xff]
      %v5456 = vld [vmem:[#allocation3 + $0xd0] sm:$0x3]
      %v5457 = vld [vmem:[#allocation3 + $0xd8] sm:$0xff]
      %v5458 = vld [vmem:[#allocation3 + $0xe0] sm:$0xff]
      %v5459 = vld [vmem:[#allocation3 + $0xe8] sm:$0x3]
      %v5460 = vld [vmem:[#allocation3 + $0xf0] sm:$0xff]
      %v5461 = vld [vmem:[#allocation3 + $0xf8] sm:$0xff]
      %v5462 = vld [vmem:[#allocation3 + $0x100] sm:$0x3]
      %v5463 = vld [vmem:[#allocation3 + $0x108] sm:$0xff]
      %v5464 = vld [vmem:[#allocation3 + $0x110] sm:$0xff]
      %v5465 = vld [vmem:[#allocation3 + $0x118] sm:$0x3]
      %v5466 = vld [vmem:[#allocation3 + $0x120] sm:$0xff]
      %v5467 = vld [vmem:[#allocation3 + $0x128] sm:$0xff]
      %v5468 = vld [vmem:[#allocation3 + $0x130] sm:$0x3]
      %v5469 = vld [vmem:[#allocation3 + $0x138] sm:$0xff]
      %v5470 = vld [vmem:[#allocation3 + $0x140] sm:$0xff]
      %v5471 = vld [vmem:[#allocation3 + $0x148] sm:$0x3]
      %v5472 = vld [vmem:[#allocation3 + $0x150] sm:$0xff]
      %v5473 = vld [vmem:[#allocation3 + $0x158] sm:$0xff]
      %v5474 = vld [vmem:[#allocation3 + $0x160] sm:$0x3]
      %v5475 = vld [vmem:[#allocation3 + $0x168] sm:$0xff]
      %v5476 = vld [vmem:[#allocation3 + $0x170] sm:$0xff]
      %v5477 = vld [vmem:[#allocation3 + $0x178] sm:$0x3]
      %v5478 = vld [vmem:[#allocation3 + $0x180] sm:$0xff]
      %v5479 = vld [vmem:[#allocation3 + $0x188] sm:$0xff]
      %v5480 = vld [vmem:[#allocation3 + $0x190] sm:$0x3]
      %v5481 = vld [vmem:[#allocation3 + $0x198] sm:$0xff]
      %v5482 = vld [vmem:[#allocation3 + $0x1a0] sm:$0xff]
      %v5483 = vld [vmem:[#allocation3 + $0x1a8] sm:$0x3]
      %v5538 = vrot.slane %v5430, 1
      %v5539 = vrot.slane %v5431, 1
      %v5540 = vsel %vm454, %v5538, %v5539
      %v5541 = vrot.slane %v5432, 1
      %v5542 = vsel %vm454, %v5539, %v5541
      %v5543 = vrot.slane %v5433, 1
      %v5544 = vrot.slane %v5434, 1
      %v5545 = vsel %vm454, %v5543, %v5544
      %v5546 = vrot.slane %v5435, 1
      %v5547 = vsel %vm454, %v5544, %v5546
      %v5548 = vrot.slane %v5436, 1
      %v5549 = vrot.slane %v5437, 1
      %v5550 = vsel %vm454, %v5548, %v5549
      %v5551 = vrot.slane %v5438, 1
      %v5552 = vsel %vm454, %v5549, %v5551
      %v5553 = vrot.slane %v5439, 1
      %v5554 = vrot.slane %v5440, 1
      %v5555 = vsel %vm454, %v5553, %v5554
      %v5556 = vrot.slane %v5441, 1
      %v5557 = vsel %vm454, %v5554, %v5556
      %v5558 = vrot.slane %v5442, 1
      %v5559 = vrot.slane %v5443, 1
      %v5560 = vsel %vm454, %v5558, %v5559
      %v5561 = vrot.slane %v5444, 1
      %v5562 = vsel %vm454, %v5559, %v5561
      %v5563 = vrot.slane %v5445, 1
      %v5564 = vrot.slane %v5446, 1
      %v5565 = vsel %vm454, %v5563, %v5564
      %v5566 = vrot.slane %v5447, 1
      %v5567 = vsel %vm454, %v5564, %v5566
      %v5568 = vrot.slane %v5448, 1
      %v5569 = vrot.slane %v5449, 1
      %v5570 = vsel %vm454, %v5568, %v5569
      %v5571 = vrot.slane %v5450, 1
      %v5572 = vsel %vm454, %v5569, %v5571
      %v5573 = vrot.slane %v5451, 1
      %v5574 = vrot.slane %v5452, 1
      %v5575 = vsel %vm454, %v5573, %v5574
      %v5576 = vrot.slane %v5453, 1
      %v5577 = vsel %vm454, %v5574, %v5576
      %v5578 = vrot.slane %v5454, 1
      %v5579 = vrot.slane %v5455, 1
      %v5580 = vsel %vm454, %v5578, %v5579
      %v5581 = vrot.slane %v5456, 1
      %v5582 = vsel %vm454, %v5579, %v5581
      %v5583 = vrot.slane %v5457, 1
      %v5584 = vrot.slane %v5458, 1
      %v5585 = vsel %vm454, %v5583, %v5584
      %v5586 = vrot.slane %v5459, 1
      %v5587 = vsel %vm454, %v5584, %v5586
      %v5588 = vrot.slane %v5460, 1
      %v5589 = vrot.slane %v5461, 1
      %v5590 = vsel %vm454, %v5588, %v5589
      %v5591 = vrot.slane %v5462, 1
      %v5592 = vsel %vm454, %v5589, %v5591
      %v5593 = vrot.slane %v5463, 1
      %v5594 = vrot.slane %v5464, 1
      %v5595 = vsel %vm454, %v5593, %v5594
      %v5596 = vrot.slane %v5465, 1
      %v5597 = vsel %vm454, %v5594, %v5596
      %v5598 = vrot.slane %v5466, 1
      %v5599 = vrot.slane %v5467, 1
      %v5600 = vsel %vm454, %v5598, %v5599
      %v5601 = vrot.slane %v5468, 1
      %v5602 = vsel %vm454, %v5599, %v5601
      %v5603 = vrot.slane %v5469, 1
      %v5604 = vrot.slane %v5470, 1
      %v5605 = vsel %vm454, %v5603, %v5604
      %v5606 = vrot.slane %v5471, 1
      %v5607 = vsel %vm454, %v5604, %v5606
      %v5608 = vrot.slane %v5472, 1
      %v5609 = vrot.slane %v5473, 1
      %v5610 = vsel %vm454, %v5608, %v5609
      %v5611 = vrot.slane %v5474, 1
      %v5612 = vsel %vm454, %v5609, %v5611
      %v5613 = vrot.slane %v5475, 1
      %v5614 = vrot.slane %v5476, 1
      %v5615 = vsel %vm454, %v5613, %v5614
      %v5616 = vrot.slane %v5477, 1
      %v5617 = vsel %vm454, %v5614, %v5616
      %v5618 = vrot.slane %v5478, 1
      %v5619 = vrot.slane %v5479, 1
      %v5620 = vsel %vm454, %v5618, %v5619
      %v5621 = vrot.slane %v5480, 1
      %v5622 = vsel %vm454, %v5619, %v5621
      %v5623 = vrot.slane %v5481, 1
      %v5624 = vrot.slane %v5482, 1
      %v5625 = vsel %vm454, %v5623, %v5624
      %v5626 = vrot.slane %v5483, 1
      %v5627 = vsel %vm454, %v5624, %v5626
      %5628 = vrot.lane.b32.xlu0 %v5540, 16
      %v5629 = vpop.permute.xlu0 %5628
      %5630 = vrot.lane.b32.xlu0 %v5542, 16
      %v5631 = vpop.permute.xlu0 %5630
      %5632 = vrot.lane.b32.xlu0 %v5545, 16
      %v5633 = vpop.permute.xlu0 %5632
      %5634 = vrot.lane.b32.xlu0 %v5547, 16
      %v5635 = vpop.permute.xlu0 %5634
      %5636 = vrot.lane.b32.xlu0 %v5550, 16
      %v5637 = vpop.permute.xlu0 %5636
      %5638 = vrot.lane.b32.xlu0 %v5552, 16
      %v5639 = vpop.permute.xlu0 %5638
      %5640 = vrot.lane.b32.xlu0 %v5555, 16
      %v5641 = vpop.permute.xlu0 %5640
      %5642 = vrot.lane.b32.xlu0 %v5557, 16
      %v5643 = vpop.permute.xlu0 %5642
      %5644 = vrot.lane.b32.xlu0 %v5560, 16
      %v5645 = vpop.permute.xlu0 %5644
      %5646 = vrot.lane.b32.xlu0 %v5562, 16
      %v5647 = vpop.permute.xlu0 %5646
      %5648 = vrot.lane.b32.xlu0 %v5565, 16
      %v5649 = vpop.permute.xlu0 %5648
      %5650 = vrot.lane.b32.xlu0 %v5567, 16
      %v5651 = vpop.permute.xlu0 %5650
      %5652 = vrot.lane.b32.xlu0 %v5570, 16
      %v5653 = vpop.permute.xlu0 %5652
      %5654 = vrot.lane.b32.xlu0 %v5572, 16
      %v5655 = vpop.permute.xlu0 %5654
      %5656 = vrot.lane.b32.xlu0 %v5575, 16
      %v5657 = vpop.permute.xlu0 %5656
      %5658 = vrot.lane.b32.xlu0 %v5577, 16
      %v5659 = vpop.permute.xlu0 %5658
      %5660 = vrot.lane.b32.xlu0 %v5580, 16
      %v5661 = vpop.permute.xlu0 %5660
      %5662 = vrot.lane.b32.xlu0 %v5582, 16
      %v5663 = vpop.permute.xlu0 %5662
      %5664 = vrot.lane.b32.xlu0 %v5585, 16
      %v5665 = vpop.permute.xlu0 %5664
      %5666 = vrot.lane.b32.xlu0 %v5587, 16
      %v5667 = vpop.permute.xlu0 %5666
      %5668 = vrot.lane.b32.xlu0 %v5590, 16
      %v5669 = vpop.permute.xlu0 %5668
      %5670 = vrot.lane.b32.xlu0 %v5592, 16
      %v5671 = vpop.permute.xlu0 %5670
      %5672 = vrot.lane.b32.xlu0 %v5595, 16
      %v5673 = vpop.permute.xlu0 %5672
      %5674 = vrot.lane.b32.xlu0 %v5597, 16
      %v5675 = vpop.permute.xlu0 %5674
      %5676 = vrot.lane.b32.xlu0 %v5600, 16
      %v5677 = vpop.permute.xlu0 %5676
      %5678 = vrot.lane.b32.xlu0 %v5602, 16
      %v5679 = vpop.permute.xlu0 %5678
      %5680 = vrot.lane.b32.xlu0 %v5605, 16
      %v5681 = vpop.permute.xlu0 %5680
      %5682 = vrot.lane.b32.xlu0 %v5607, 16
      %v5683 = vpop.permute.xlu0 %5682
      %5684 = vrot.lane.b32.xlu0 %v5610, 16
      %v5685 = vpop.permute.xlu0 %5684
      %5686 = vrot.lane.b32.xlu0 %v5612, 16
      %v5687 = vpop.permute.xlu0 %5686
      %5688 = vrot.lane.b32.xlu0 %v5615, 16
      %v5689 = vpop.permute.xlu0 %5688
      %5690 = vrot.lane.b32.xlu0 %v5617, 16
      %v5691 = vpop.permute.xlu0 %5690
      %5692 = vrot.lane.b32.xlu0 %v5620, 16
      %v5693 = vpop.permute.xlu0 %5692
      %5694 = vrot.lane.b32.xlu0 %v5622, 16
      %v5695 = vpop.permute.xlu0 %5694
      %5696 = vrot.lane.b32.xlu0 %v5625, 16
      %v5697 = vpop.permute.xlu0 %5696
      %5698 = vrot.lane.b32.xlu0 %v5627, 16
      %v5699 = vpop.permute.xlu0 %5698
      %v5736 = vrot.slane %v5430, 2
      %v5737 = vrot.slane %v5431, 2
      %v5738 = vsel %vm653, %v5736, %v5737
      %v5739 = vrot.slane %v5432, 2
      %v5740 = vsel %vm653, %v5737, %v5739
      %v5741 = vrot.slane %v5433, 2
      %v5742 = vrot.slane %v5434, 2
      %v5743 = vsel %vm653, %v5741, %v5742
      %v5744 = vrot.slane %v5435, 2
      %v5745 = vsel %vm653, %v5742, %v5744
      %v5746 = vrot.slane %v5436, 2
      %v5747 = vrot.slane %v5437, 2
      %v5748 = vsel %vm653, %v5746, %v5747
      %v5749 = vrot.slane %v5438, 2
      %v5750 = vsel %vm653, %v5747, %v5749
      %v5751 = vrot.slane %v5439, 2
      %v5752 = vrot.slane %v5440, 2
      %v5753 = vsel %vm653, %v5751, %v5752
      %v5754 = vrot.slane %v5441, 2
      %v5755 = vsel %vm653, %v5752, %v5754
      %v5756 = vrot.slane %v5442, 2
      %v5757 = vrot.slane %v5443, 2
      %v5758 = vsel %vm653, %v5756, %v5757
      %v5759 = vrot.slane %v5444, 2
      %v5760 = vsel %vm653, %v5757, %v5759
      %v5761 = vrot.slane %v5445, 2
      %v5762 = vrot.slane %v5446, 2
      %v5763 = vsel %vm653, %v5761, %v5762
      %v5764 = vrot.slane %v5447, 2
      %v5765 = vsel %vm653, %v5762, %v5764
      %v5766 = vrot.slane %v5448, 2
      %v5767 = vrot.slane %v5449, 2
      %v5768 = vsel %vm653, %v5766, %v5767
      %v5769 = vrot.slane %v5450, 2
      %v5770 = vsel %vm653, %v5767, %v5769
      %v5771 = vrot.slane %v5451, 2
      %v5772 = vrot.slane %v5452, 2
      %v5773 = vsel %vm653, %v5771, %v5772
      %v5774 = vrot.slane %v5453, 2
      %v5775 = vsel %vm653, %v5772, %v5774
      %v5776 = vrot.slane %v5454, 2
      %v5777 = vrot.slane %v5455, 2
      %v5778 = vsel %vm653, %v5776, %v5777
      %v5779 = vrot.slane %v5456, 2
      %v5780 = vsel %vm653, %v5777, %v5779
      %v5781 = vrot.slane %v5457, 2
      %v5782 = vrot.slane %v5458, 2
      %v5783 = vsel %vm653, %v5781, %v5782
      %v5784 = vrot.slane %v5459, 2
      %v5785 = vsel %vm653, %v5782, %v5784
      %v5786 = vrot.slane %v5460, 2
      %v5787 = vrot.slane %v5461, 2
      %v5788 = vsel %vm653, %v5786, %v5787
      %v5789 = vrot.slane %v5462, 2
      %v5790 = vsel %vm653, %v5787, %v5789
      %v5791 = vrot.slane %v5463, 2
      %v5792 = vrot.slane %v5464, 2
      %v5793 = vsel %vm653, %v5791, %v5792
      %v5794 = vrot.slane %v5465, 2
      %v5795 = vsel %vm653, %v5792, %v5794
      %v5796 = vrot.slane %v5466, 2
      %v5797 = vrot.slane %v5467, 2
      %v5798 = vsel %vm653, %v5796, %v5797
      %v5799 = vrot.slane %v5468, 2
      %v5800 = vsel %vm653, %v5797, %v5799
      %v5801 = vrot.slane %v5469, 2
      %v5802 = vrot.slane %v5470, 2
      %v5803 = vsel %vm653, %v5801, %v5802
      %v5804 = vrot.slane %v5471, 2
      %v5805 = vsel %vm653, %v5802, %v5804
      %v5806 = vrot.slane %v5472, 2
      %v5807 = vrot.slane %v5473, 2
      %v5808 = vsel %vm653, %v5806, %v5807
      %v5809 = vrot.slane %v5474, 2
      %v5810 = vsel %vm653, %v5807, %v5809
      %v5811 = vrot.slane %v5475, 2
      %v5812 = vrot.slane %v5476, 2
      %v5813 = vsel %vm653, %v5811, %v5812
      %v5814 = vrot.slane %v5477, 2
      %v5815 = vsel %vm653, %v5812, %v5814
      %v5816 = vrot.slane %v5478, 2
      %v5817 = vrot.slane %v5479, 2
      %v5818 = vsel %vm653, %v5816, %v5817
      %v5819 = vrot.slane %v5480, 2
      %v5820 = vsel %vm653, %v5817, %v5819
      %v5821 = vrot.slane %v5481, 2
      %v5822 = vrot.slane %v5482, 2
      %v5823 = vsel %vm653, %v5821, %v5822
      %v5824 = vrot.slane %v5483, 2
      %v5825 = vsel %vm653, %v5822, %v5824
      %5826 = vrot.lane.b32.xlu0 %v5738, 32
      %v5827 = vpop.permute.xlu0 %5826
      %5828 = vrot.lane.b32.xlu0 %v5740, 32
      %v5829 = vpop.permute.xlu0 %5828
      %5830 = vrot.lane.b32.xlu0 %v5743, 32
      %v5831 = vpop.permute.xlu0 %5830
      %5832 = vrot.lane.b32.xlu0 %v5745, 32
      %v5833 = vpop.permute.xlu0 %5832
      %5834 = vrot.lane.b32.xlu0 %v5748, 32
      %v5835 = vpop.permute.xlu0 %5834
      %5836 = vrot.lane.b32.xlu0 %v5750, 32
      %v5837 = vpop.permute.xlu0 %5836
      %5838 = vrot.lane.b32.xlu0 %v5753, 32
      %v5839 = vpop.permute.xlu0 %5838
      %5840 = vrot.lane.b32.xlu0 %v5755, 32
      %v5841 = vpop.permute.xlu0 %5840
      %5842 = vrot.lane.b32.xlu0 %v5758, 32
      %v5843 = vpop.permute.xlu0 %5842
      %5844 = vrot.lane.b32.xlu0 %v5760, 32
      %v5845 = vpop.permute.xlu0 %5844
      %5846 = vrot.lane.b32.xlu0 %v5763, 32
      %v5847 = vpop.permute.xlu0 %5846
      %5848 = vrot.lane.b32.xlu0 %v5765, 32
      %v5849 = vpop.permute.xlu0 %5848
      %5850 = vrot.lane.b32.xlu0 %v5768, 32
      %v5851 = vpop.permute.xlu0 %5850
      %5852 = vrot.lane.b32.xlu0 %v5770, 32
      %v5853 = vpop.permute.xlu0 %5852
      %5854 = vrot.lane.b32.xlu0 %v5773, 32
      %v5855 = vpop.permute.xlu0 %5854
      %5856 = vrot.lane.b32.xlu0 %v5775, 32
      %v5857 = vpop.permute.xlu0 %5856
      %5858 = vrot.lane.b32.xlu0 %v5778, 32
      %v5859 = vpop.permute.xlu0 %5858
      %5860 = vrot.lane.b32.xlu0 %v5780, 32
      %v5861 = vpop.permute.xlu0 %5860
      %5862 = vrot.lane.b32.xlu0 %v5783, 32
      %v5863 = vpop.permute.xlu0 %5862
      %5864 = vrot.lane.b32.xlu0 %v5785, 32
      %v5865 = vpop.permute.xlu0 %5864
      %5866 = vrot.lane.b32.xlu0 %v5788, 32
      %v5867 = vpop.permute.xlu0 %5866
      %5868 = vrot.lane.b32.xlu0 %v5790, 32
      %v5869 = vpop.permute.xlu0 %5868
      %5870 = vrot.lane.b32.xlu0 %v5793, 32
      %v5871 = vpop.permute.xlu0 %5870
      %5872 = vrot.lane.b32.xlu0 %v5795, 32
      %v5873 = vpop.permute.xlu0 %5872
      %5874 = vrot.lane.b32.xlu0 %v5798, 32
      %v5875 = vpop.permute.xlu0 %5874
      %5876 = vrot.lane.b32.xlu0 %v5800, 32
      %v5877 = vpop.permute.xlu0 %5876
      %5878 = vrot.lane.b32.xlu0 %v5803, 32
      %v5879 = vpop.permute.xlu0 %5878
      %5880 = vrot.lane.b32.xlu0 %v5805, 32
      %v5881 = vpop.permute.xlu0 %5880
      %5882 = vrot.lane.b32.xlu0 %v5808, 32
      %v5883 = vpop.permute.xlu0 %5882
      %5884 = vrot.lane.b32.xlu0 %v5810, 32
      %v5885 = vpop.permute.xlu0 %5884
      %5886 = vrot.lane.b32.xlu0 %v5813, 32
      %v5887 = vpop.permute.xlu0 %5886
      %5888 = vrot.lane.b32.xlu0 %v5815, 32
      %v5889 = vpop.permute.xlu0 %5888
      %5890 = vrot.lane.b32.xlu0 %v5818, 32
      %v5891 = vpop.permute.xlu0 %5890
      %5892 = vrot.lane.b32.xlu0 %v5820, 32
      %v5893 = vpop.permute.xlu0 %5892
      %5894 = vrot.lane.b32.xlu0 %v5823, 32
      %v5895 = vpop.permute.xlu0 %5894
      %5896 = vrot.lane.b32.xlu0 %v5825, 32
      %v5897 = vpop.permute.xlu0 %5896
      %v5934 = vsel %vm171, %v5430, %v5629
      %v5935 = vsel %vm171, %v5431, %v5631
      %v5936 = vsel %vm171, %v5433, %v5633
      %v5937 = vsel %vm171, %v5434, %v5635
      %v5938 = vsel %vm171, %v5436, %v5637
      %v5939 = vsel %vm171, %v5437, %v5639
      %v5940 = vsel %vm171, %v5439, %v5641
      %v5941 = vsel %vm171, %v5440, %v5643
      %v5942 = vsel %vm171, %v5442, %v5645
      %v5943 = vsel %vm171, %v5443, %v5647
      %v5944 = vsel %vm171, %v5445, %v5649
      %v5945 = vsel %vm171, %v5446, %v5651
      %v5946 = vsel %vm171, %v5448, %v5653
      %v5947 = vsel %vm171, %v5449, %v5655
      %v5948 = vsel %vm171, %v5451, %v5657
      %v5949 = vsel %vm171, %v5452, %v5659
      %v5950 = vsel %vm171, %v5454, %v5661
      %v5951 = vsel %vm171, %v5455, %v5663
      %v5952 = vsel %vm171, %v5457, %v5665
      %v5953 = vsel %vm171, %v5458, %v5667
      %v5954 = vsel %vm171, %v5460, %v5669
      %v5955 = vsel %vm171, %v5461, %v5671
      %v5956 = vsel %vm171, %v5463, %v5673
      %v5957 = vsel %vm171, %v5464, %v5675
      %v5958 = vsel %vm171, %v5466, %v5677
      %v5959 = vsel %vm171, %v5467, %v5679
      %v5960 = vsel %vm171, %v5469, %v5681
      %v5961 = vsel %vm171, %v5470, %v5683
      %v5962 = vsel %vm171, %v5472, %v5685
      %v5963 = vsel %vm171, %v5473, %v5687
      %v5964 = vsel %vm171, %v5475, %v5689
      %v5965 = vsel %vm171, %v5476, %v5691
      %v5966 = vsel %vm171, %v5478, %v5693
      %v5967 = vsel %vm171, %v5479, %v5695
      %v5968 = vsel %vm171, %v5481, %v5697
      %v5969 = vsel %vm171, %v5482, %v5699
      %v5970 = vsel %vm888, %v5934, %v5827
      %v5971 = vsel %vm888, %v5935, %v5829
      %v5972 = vsel %vm888, %v5936, %v5831
      %v5973 = vsel %vm888, %v5937, %v5833
      %v5974 = vsel %vm888, %v5938, %v5835
      %v5975 = vsel %vm888, %v5939, %v5837
      %v5976 = vsel %vm888, %v5940, %v5839
      %v5977 = vsel %vm888, %v5941, %v5841
      %v5978 = vsel %vm888, %v5942, %v5843
      %v5979 = vsel %vm888, %v5943, %v5845
      %v5980 = vsel %vm888, %v5944, %v5847
      %v5981 = vsel %vm888, %v5945, %v5849
      %v5982 = vsel %vm888, %v5946, %v5851
      %v5983 = vsel %vm888, %v5947, %v5853
      %v5984 = vsel %vm888, %v5948, %v5855
      %v5985 = vsel %vm888, %v5949, %v5857
      %v5986 = vsel %vm888, %v5950, %v5859
      %v5987 = vsel %vm888, %v5951, %v5861
      %v5988 = vsel %vm888, %v5952, %v5863
      %v5989 = vsel %vm888, %v5953, %v5865
      %v5990 = vsel %vm888, %v5954, %v5867
      %v5991 = vsel %vm888, %v5955, %v5869
      %v5992 = vsel %vm888, %v5956, %v5871
      %v5993 = vsel %vm888, %v5957, %v5873
      %v5994 = vsel %vm888, %v5958, %v5875
      %v5995 = vsel %vm888, %v5959, %v5877
      %v5996 = vsel %vm888, %v5960, %v5879
      %v5997 = vsel %vm888, %v5961, %v5881
      %v5998 = vsel %vm888, %v5962, %v5883
      %v5999 = vsel %vm888, %v5963, %v5885
      %v6000 = vsel %vm888, %v5964, %v5887
      %v6001 = vsel %vm888, %v5965, %v5889
      %v6002 = vsel %vm888, %v5966, %v5891
      %v6003 = vsel %vm888, %v5967, %v5893
      %v6004 = vsel %vm888, %v5968, %v5895
      %v6005 = vsel %vm888, %v5969, %v5897
      %6038 = vrot.lane.b32.xlu0 %v5972, 48
      %v6039 = vpop.permute.xlu0 %6038
      %6040 = vrot.lane.b32.xlu0 %v5973, 48
      %v6041 = vpop.permute.xlu0 %6040
      %6042 = vrot.lane.b32.xlu0 %v5974, 48
      %v6043 = vpop.permute.xlu0 %6042
      %6044 = vrot.lane.b32.xlu0 %v5975, 48
      %v6045 = vpop.permute.xlu0 %6044
      %6046 = vrot.lane.b32.xlu0 %v5976, 48
      %v6047 = vpop.permute.xlu0 %6046
      %6048 = vrot.lane.b32.xlu0 %v5977, 48
      %v6049 = vpop.permute.xlu0 %6048
      %6050 = vrot.lane.b32.xlu0 %v5978, 48
      %v6051 = vpop.permute.xlu0 %6050
      %6052 = vrot.lane.b32.xlu0 %v5979, 48
      %v6053 = vpop.permute.xlu0 %6052
      %6054 = vrot.lane.b32.xlu0 %v5980, 48
      %v6055 = vpop.permute.xlu0 %6054
      %6056 = vrot.lane.b32.xlu0 %v5981, 48
      %v6057 = vpop.permute.xlu0 %6056
      %6058 = vrot.lane.b32.xlu0 %v5982, 48
      %v6059 = vpop.permute.xlu0 %6058
      %6060 = vrot.lane.b32.xlu0 %v5983, 48
      %v6061 = vpop.permute.xlu0 %6060
      %6062 = vrot.lane.b32.xlu0 %v5984, 48
      %v6063 = vpop.permute.xlu0 %6062
      %6064 = vrot.lane.b32.xlu0 %v5985, 48
      %v6065 = vpop.permute.xlu0 %6064
      %6066 = vrot.lane.b32.xlu0 %v5986, 48
      %v6067 = vpop.permute.xlu0 %6066
      %6068 = vrot.lane.b32.xlu0 %v5987, 48
      %v6069 = vpop.permute.xlu0 %6068
      %6070 = vrot.lane.b32.xlu0 %v5988, 48
      %v6071 = vpop.permute.xlu0 %6070
      %6072 = vrot.lane.b32.xlu0 %v5989, 48
      %v6073 = vpop.permute.xlu0 %6072
      %6074 = vrot.lane.b32.xlu0 %v5990, 48
      %v6075 = vpop.permute.xlu0 %6074
      %6076 = vrot.lane.b32.xlu0 %v5991, 48
      %v6077 = vpop.permute.xlu0 %6076
      %6078 = vrot.lane.b32.xlu0 %v5992, 48
      %v6079 = vpop.permute.xlu0 %6078
      %6080 = vrot.lane.b32.xlu0 %v5993, 48
      %v6081 = vpop.permute.xlu0 %6080
      %6082 = vrot.lane.b32.xlu0 %v5994, 48
      %v6083 = vpop.permute.xlu0 %6082
      %6084 = vrot.lane.b32.xlu0 %v5995, 48
      %v6085 = vpop.permute.xlu0 %6084
      %6086 = vrot.lane.b32.xlu0 %v5996, 48
      %v6087 = vpop.permute.xlu0 %6086
      %6088 = vrot.lane.b32.xlu0 %v5997, 48
      %v6089 = vpop.permute.xlu0 %6088
      %6090 = vrot.lane.b32.xlu0 %v5998, 48
      %v6091 = vpop.permute.xlu0 %6090
      %6092 = vrot.lane.b32.xlu0 %v5999, 48
      %v6093 = vpop.permute.xlu0 %6092
      %6094 = vrot.lane.b32.xlu0 %v6000, 48
      %v6095 = vpop.permute.xlu0 %6094
      %6096 = vrot.lane.b32.xlu0 %v6001, 48
      %v6097 = vpop.permute.xlu0 %6096
      %6098 = vrot.lane.b32.xlu0 %v6002, 48
      %v6099 = vpop.permute.xlu0 %6098
      %6100 = vrot.lane.b32.xlu0 %v6003, 48
      %v6101 = vpop.permute.xlu0 %6100
      %6136 = vrot.lane.b32.xlu0 %v5974, 96
      %v6137 = vpop.permute.xlu0 %6136
      %6138 = vrot.lane.b32.xlu0 %v5975, 96
      %v6139 = vpop.permute.xlu0 %6138
      %6140 = vrot.lane.b32.xlu0 %v5976, 96
      %v6141 = vpop.permute.xlu0 %6140
      %6142 = vrot.lane.b32.xlu0 %v5977, 96
      %v6143 = vpop.permute.xlu0 %6142
      %6144 = vrot.lane.b32.xlu0 %v5978, 96
      %v6145 = vpop.permute.xlu0 %6144
      %6146 = vrot.lane.b32.xlu0 %v5979, 96
      %v6147 = vpop.permute.xlu0 %6146
      %6148 = vrot.lane.b32.xlu0 %v5980, 96
      %v6149 = vpop.permute.xlu0 %6148
      %6150 = vrot.lane.b32.xlu0 %v5981, 96
      %v6151 = vpop.permute.xlu0 %6150
      %6152 = vrot.lane.b32.xlu0 %v5982, 96
      %v6153 = vpop.permute.xlu0 %6152
      %6154 = vrot.lane.b32.xlu0 %v5983, 96
      %v6155 = vpop.permute.xlu0 %6154
      %6156 = vrot.lane.b32.xlu0 %v5984, 96
      %v6157 = vpop.permute.xlu0 %6156
      %6158 = vrot.lane.b32.xlu0 %v5985, 96
      %v6159 = vpop.permute.xlu0 %6158
      %6160 = vrot.lane.b32.xlu0 %v5986, 96
      %v6161 = vpop.permute.xlu0 %6160
      %6162 = vrot.lane.b32.xlu0 %v5987, 96
      %v6163 = vpop.permute.xlu0 %6162
      %6164 = vrot.lane.b32.xlu0 %v5988, 96
      %v6165 = vpop.permute.xlu0 %6164
      %6166 = vrot.lane.b32.xlu0 %v5989, 96
      %v6167 = vpop.permute.xlu0 %6166
      %6168 = vrot.lane.b32.xlu0 %v5990, 96
      %v6169 = vpop.permute.xlu0 %6168
      %6170 = vrot.lane.b32.xlu0 %v5991, 96
      %v6171 = vpop.permute.xlu0 %6170
      %6172 = vrot.lane.b32.xlu0 %v5992, 96
      %v6173 = vpop.permute.xlu0 %6172
      %6174 = vrot.lane.b32.xlu0 %v5993, 96
      %v6175 = vpop.permute.xlu0 %6174
      %6176 = vrot.lane.b32.xlu0 %v5994, 96
      %v6177 = vpop.permute.xlu0 %6176
      %6178 = vrot.lane.b32.xlu0 %v5995, 96
      %v6179 = vpop.permute.xlu0 %6178
      %6180 = vrot.lane.b32.xlu0 %v5996, 96
      %v6181 = vpop.permute.xlu0 %6180
      %6182 = vrot.lane.b32.xlu0 %v5997, 96
      %v6183 = vpop.permute.xlu0 %6182
      %6184 = vrot.lane.b32.xlu0 %v5998, 96
      %v6185 = vpop.permute.xlu0 %6184
      %6186 = vrot.lane.b32.xlu0 %v5999, 96
      %v6187 = vpop.permute.xlu0 %6186
      %6188 = vrot.lane.b32.xlu0 %v6000, 96
      %v6189 = vpop.permute.xlu0 %6188
      %6190 = vrot.lane.b32.xlu0 %v6001, 96
      %v6191 = vpop.permute.xlu0 %6190
      %6192 = vrot.lane.b32.xlu0 %v6002, 96
      %v6193 = vpop.permute.xlu0 %6192
      %6194 = vrot.lane.b32.xlu0 %v6003, 96
      %v6195 = vpop.permute.xlu0 %6194
      %6196 = vrot.lane.b32.xlu0 %v6004, 96
      %v6197 = vpop.permute.xlu0 %6196
      %6198 = vrot.lane.b32.xlu0 %v6005, 96
      %v6199 = vpop.permute.xlu0 %6198
      %v6232 = vsel %vm1151, %v5970, %v6039
      %v6233 = vsel %vm1151, %v5971, %v6041
      %v6234 = vsel %vm1151, %v5972, %v6043
      %v6235 = vsel %vm1151, %v5973, %v6045
      %v6236 = vsel %vm1151, %v5974, %v6047
      %v6237 = vsel %vm1151, %v5975, %v6049
      %v6238 = vsel %vm1151, %v5976, %v6051
      %v6239 = vsel %vm1151, %v5977, %v6053
      %v6240 = vsel %vm1151, %v5978, %v6055
      %v6241 = vsel %vm1151, %v5979, %v6057
      %v6242 = vsel %vm1151, %v5980, %v6059
      %v6243 = vsel %vm1151, %v5981, %v6061
      %v6244 = vsel %vm1151, %v5982, %v6063
      %v6245 = vsel %vm1151, %v5983, %v6065
      %v6246 = vsel %vm1151, %v5984, %v6067
      %v6247 = vsel %vm1151, %v5985, %v6069
      %v6248 = vsel %vm1151, %v5986, %v6071
      %v6249 = vsel %vm1151, %v5987, %v6073
      %v6250 = vsel %vm1151, %v5988, %v6075
      %v6251 = vsel %vm1151, %v5989, %v6077
      %v6252 = vsel %vm1151, %v5990, %v6079
      %v6253 = vsel %vm1151, %v5991, %v6081
      %v6254 = vsel %vm1151, %v5992, %v6083
      %v6255 = vsel %vm1151, %v5993, %v6085
      %v6256 = vsel %vm1151, %v5994, %v6087
      %v6257 = vsel %vm1151, %v5995, %v6089
      %v6258 = vsel %vm1151, %v5996, %v6091
      %v6259 = vsel %vm1151, %v5997, %v6093
      %v6260 = vsel %vm1151, %v5998, %v6095
      %v6261 = vsel %vm1151, %v5999, %v6097
      %v6262 = vsel %vm1151, %v6000, %v6099
      %v6263 = vsel %vm1151, %v6001, %v6101
      %v6264 = vsel %vm1184, %v6232, %v6137
      %v6265 = vsel %vm1184, %v6233, %v6139
      %v6266 = vsel %vm1184, %v6234, %v6141
      %v6267 = vsel %vm1184, %v6235, %v6143
      %v6268 = vsel %vm1184, %v6236, %v6145
      %v6269 = vsel %vm1184, %v6237, %v6147
      %v6270 = vsel %vm1184, %v6238, %v6149
      %v6271 = vsel %vm1184, %v6239, %v6151
      %v6272 = vsel %vm1184, %v6240, %v6153
      %v6273 = vsel %vm1184, %v6241, %v6155
      %v6274 = vsel %vm1184, %v6242, %v6157
      %v6275 = vsel %vm1184, %v6243, %v6159
      %v6276 = vsel %vm1184, %v6244, %v6161
      %v6277 = vsel %vm1184, %v6245, %v6163
      %v6278 = vsel %vm1184, %v6246, %v6165
      %v6279 = vsel %vm1184, %v6247, %v6167
      %v6280 = vsel %vm1184, %v6248, %v6169
      %v6281 = vsel %vm1184, %v6249, %v6171
      %v6282 = vsel %vm1184, %v6250, %v6173
      %v6283 = vsel %vm1184, %v6251, %v6175
      %v6284 = vsel %vm1184, %v6252, %v6177
      %v6285 = vsel %vm1184, %v6253, %v6179
      %v6286 = vsel %vm1184, %v6254, %v6181
      %v6287 = vsel %vm1184, %v6255, %v6183
      %v6288 = vsel %vm1184, %v6256, %v6185
      %v6289 = vsel %vm1184, %v6257, %v6187
      %v6290 = vsel %vm1184, %v6258, %v6189
      %v6291 = vsel %vm1184, %v6259, %v6191
      %v6292 = vsel %vm1184, %v6260, %v6193
      %v6293 = vsel %vm1184, %v6261, %v6195
      %v6294 = vsel %vm1184, %v6262, %v6197
      %v6295 = vsel %vm1184, %v6263, %v6199
      %s6296 = scalar_lea.vmem %s1, 576
      %v6297 = vld [vmem:[%s6296] sm:$0xff]
      %v6298 = vld [vmem:[%s6296 + $0x8] sm:$0xff]
      %v6299 = vld [vmem:[%s6296 + $0x10] sm:$0xff]
      %v6300 = vld [vmem:[%s6296 + $0x18] sm:$0xff]
      %v6301 = vld [vmem:[%s6296 + $0x20] sm:$0xff]
      %v6302 = vld [vmem:[%s6296 + $0x28] sm:$0xff]
      %v6303 = vld [vmem:[%s6296 + $0x30] sm:$0xff]
      %v6304 = vld [vmem:[%s6296 + $0x38] sm:$0xff]
      %v6305 = vld [vmem:[%s6296 + $0x40] sm:$0xff]
      %v6306 = vld [vmem:[%s6296 + $0x48] sm:$0xff]
      %v6307 = vld [vmem:[%s6296 + $0x50] sm:$0xff]
      %v6308 = vld [vmem:[%s6296 + $0x58] sm:$0xff]
      %v6309 = vld [vmem:[%s6296 + $0x60] sm:$0xff]
      %v6310 = vld [vmem:[%s6296 + $0x68] sm:$0xff]
      %v6311 = vld [vmem:[%s6296 + $0x70] sm:$0xff]
      %v6312 = vld [vmem:[%s6296 + $0x78] sm:$0xff]
      %v6313 = vld [vmem:[%s6296 + $0x80] sm:$0xff]
      %v6314 = vld [vmem:[%s6296 + $0x88] sm:$0xff]
      %s6315 = scalar_lea.vmem %s2, 4
      %v6316 = vld [vmem:[%s6315] sm:$0x1]
      %v6318 = vlaneseq
      %v6319 = vshrl.u32 %v6318, 7
      %v6320 = vsub.s32 0, %v6319
      %v6321 = vrot.slane %v6316, %v6320
      %v6323 = vsel %vm171, %v6137, 0
      %v6325 = vsel %vm171, %v6139, 0
      %v6327 = vsel %vm171, %v6141, 0
      %v6329 = vsel %vm171, %v6143, 0
      %v6331 = vsel %vm171, %v6145, 0
      %v6333 = vsel %vm171, %v6147, 0
      %v6335 = vsel %vm171, %v6149, 0
      %v6337 = vsel %vm171, %v6151, 0
      %v6339 = vsel %vm171, %v6153, 0
      %v6341 = vsel %vm171, %v6155, 0
      %v6343 = vsel %vm171, %v6157, 0
      %v6345 = vsel %vm171, %v6159, 0
      %v6347 = vsel %vm171, %v6161, 0
      %v6349 = vsel %vm171, %v6163, 0
      %v6351 = vsel %vm171, %v6165, 0
      %v6353 = vsel %vm171, %v6167, 0
      %v6355 = vsel %vm171, %v6169, 0
      %v6357 = vsel %vm171, %v6171, 0
      %v6359 = vsel %vm171, %v6173, 0
      %v6361 = vsel %vm171, %v6175, 0
      %v6363 = vsel %vm171, %v6177, 0
      %v6365 = vsel %vm171, %v6179, 0
      %v6367 = vsel %vm171, %v6181, 0
      %v6369 = vsel %vm171, %v6183, 0
      %v6371 = vsel %vm171, %v6185, 0
      %v6373 = vsel %vm171, %v6187, 0
      %v6375 = vsel %vm171, %v6189, 0
      %v6377 = vsel %vm171, %v6191, 0
      %v6379 = vsel %vm171, %v6193, 0
      %v6381 = vsel %vm171, %v6195, 0
      %v6383 = vsel %vm171, %v6197, 0
      %v6385 = vsel %vm171, %v6199, 0
      %6387 = vmatprep.subr.mxu0 0.0
      %6388 = vmatpush1.msra.mxu0 %v6312
      %6389 = vmatprep.subr.mxu0 0.0
      %6390 = vmatpush1.msra.mxu0 %v6311
      %6391 = vmatprep.subr.mxu0 0.0
      %6392 = vmatpush1.msra.mxu0 %v6310
      %6393 = vmatprep.subr.mxu0 0.0
      %6394 = vmatpush1.msra.mxu0 %v6309
      %6395 = vmatprep.subr.mxu0 0.0
      %6396 = vmatpush1.msra.mxu0 %v6308
      %6397 = vmatprep.subr.mxu0 0.0
      %6398 = vmatpush1.msra.mxu0 %v6307
      %6399 = vmatprep.subr.mxu0 0.0
      %6400 = vmatpush1.msra.mxu0 %v6306
      %6401 = vmatprep.subr.mxu0 0.0
      %6402 = vmatpush1.msra.mxu0 %v6305
      %6403 = vmatprep.subr.mxu0 0.0
      %6404 = vmatpush1.msra.mxu0 %v6304
      %6405 = vmatprep.subr.mxu0 0.0
      %6406 = vmatpush1.msra.mxu0 %v6303
      %6407 = vmatprep.subr.mxu0 0.0
      %6408 = vmatpush1.msra.mxu0 %v6302
      %6409 = vmatprep.subr.mxu0 0.0
      %6410 = vmatpush1.msra.mxu0 %v6301
      %6411 = vmatprep.subr.mxu0 0.0
      %6412 = vmatpush1.msra.mxu0 %v6300
      %6413 = vmatprep.subr.mxu0 0.0
      %6414 = vmatpush1.msra.mxu0 %v6299
      %6415 = vmatprep.subr.mxu0 0.0
      %6416 = vmatpush1.msra.mxu0 %v6298
      %6417 = vmatprep.subr.mxu0 0.0
      %6418 = vmatpush1.msra.mxu0 %v6297
      %6419 = vmatprep.subr.mxu0 0.0
      %6420 = vmatpush2.msra.mxu0 0.0
      %6421 = vmatprep.subr.mxu0 0.0
      %6422 = vmatpush2.msra.mxu0 0.0
      %6423 = vmatprep.subr.mxu0 0.0
      %6424 = vmatpush2.msra.mxu0 0.0
      %6425 = vmatprep.subr.mxu0 0.0
      %6426 = vmatpush2.msra.mxu0 0.0
      %6427 = vmatprep.subr.mxu0 0.0
      %6428 = vmatpush2.msra.mxu0 0.0
      %6429 = vmatprep.subr.mxu0 0.0
      %6430 = vmatpush2.msra.mxu0 0.0
      %6431 = vmatprep.subr.mxu0 0.0
      %6432 = vmatpush2.msra.mxu0 0.0
      %6433 = vmatprep.subr.mxu0 0.0
      %6434 = vmatpush2.msra.mxu0 0.0
      %6435 = vmatprep.subr.mxu0 0.0
      %6436 = vmatpush2.msra.mxu0 0.0
      %6437 = vmatprep.subr.mxu0 0.0
      %6438 = vmatpush2.msra.mxu0 0.0
      %6439 = vmatprep.subr.mxu0 0.0
      %6440 = vmatpush2.msra.mxu0 0.0
      %6441 = vmatprep.subr.mxu0 0.0
      %6442 = vmatpush2.msra.mxu0 0.0
      %6443 = vmatprep.subr.mxu0 0.0
      %6444 = vmatpush2.msra.mxu0 0.0
      %6445 = vmatprep.subr.mxu0 0.0
      %6446 = vmatpush2.msra.mxu0 0.0
      %6447 = vmatprep.subr.mxu0 0.0
      %6448 = vmatpush2.msra.mxu0 %v6314
      %6449 = vmatprep.subr.mxu0 0.0
      %6450 = vmatpush2.msra.mxu0 %v6313
      %6451 = vmatprep.mubr.f32.mxu0 %v6323
      %6452 = vmatmul.mubr.f32.gmra.mxu0 %v6264
      %v6453 = vpop.f32.mrf.mxu0
      %v6454 = vadd.f32 %v6321, %v6453
      %v6455 = vpop.f32.mrf.mxu0
      %6456 = vmatprep.mubr.f32.mxu0 %v6325
      %6457 = vmatmul.mubr.f32.gmra.mxu0 %v6265
      %v6458 = vpop.f32.mrf.mxu0
      %v6459 = vadd.f32 %v6321, %v6458
      %v6460 = vpop.f32.mrf.mxu0
      %6461 = vmatprep.mubr.f32.mxu0 %v6327
      %6462 = vmatmul.mubr.f32.gmra.mxu0 %v6266
      %v6463 = vpop.f32.mrf.mxu0
      %v6464 = vadd.f32 %v6321, %v6463
      %v6465 = vpop.f32.mrf.mxu0
      %6466 = vmatprep.mubr.f32.mxu0 %v6329
      %6467 = vmatmul.mubr.f32.gmra.mxu0 %v6267
      %v6468 = vpop.f32.mrf.mxu0
      %v6469 = vadd.f32 %v6321, %v6468
      %v6470 = vpop.f32.mrf.mxu0
      %6471 = vmatprep.mubr.f32.mxu0 %v6331
      %6472 = vmatmul.mubr.f32.gmra.mxu0 %v6268
      %v6473 = vpop.f32.mrf.mxu0
      %v6474 = vadd.f32 %v6321, %v6473
      %v6475 = vpop.f32.mrf.mxu0
      %6476 = vmatprep.mubr.f32.mxu0 %v6333
      %6477 = vmatmul.mubr.f32.gmra.mxu0 %v6269
      %v6478 = vpop.f32.mrf.mxu0
      %v6479 = vadd.f32 %v6321, %v6478
      %v6480 = vpop.f32.mrf.mxu0
      %6481 = vmatprep.mubr.f32.mxu0 %v6335
      %6482 = vmatmul.mubr.f32.gmra.mxu0 %v6270
      %v6483 = vpop.f32.mrf.mxu0
      %v6484 = vadd.f32 %v6321, %v6483
      %v6485 = vpop.f32.mrf.mxu0
      %6486 = vmatprep.mubr.f32.mxu0 %v6337
      %6487 = vmatmul.mubr.f32.gmra.mxu0 %v6271
      %v6488 = vpop.f32.mrf.mxu0
      %v6489 = vadd.f32 %v6321, %v6488
      %v6490 = vpop.f32.mrf.mxu0
      %6491 = vmatprep.mubr.f32.mxu0 %v6339
      %6492 = vmatmul.mubr.f32.gmra.mxu0 %v6272
      %v6493 = vpop.f32.mrf.mxu0
      %v6494 = vadd.f32 %v6321, %v6493
      %v6495 = vpop.f32.mrf.mxu0
      %6496 = vmatprep.mubr.f32.mxu0 %v6341
      %6497 = vmatmul.mubr.f32.gmra.mxu0 %v6273
      %v6498 = vpop.f32.mrf.mxu0
      %v6499 = vadd.f32 %v6321, %v6498
      %v6500 = vpop.f32.mrf.mxu0
      %6501 = vmatprep.mubr.f32.mxu0 %v6343
      %6502 = vmatmul.mubr.f32.gmra.mxu0 %v6274
      %v6503 = vpop.f32.mrf.mxu0
      %v6504 = vadd.f32 %v6321, %v6503
      %v6505 = vpop.f32.mrf.mxu0
      %6506 = vmatprep.mubr.f32.mxu0 %v6345
      %6507 = vmatmul.mubr.f32.gmra.mxu0 %v6275
      %v6508 = vpop.f32.mrf.mxu0
      %v6509 = vadd.f32 %v6321, %v6508
      %v6510 = vpop.f32.mrf.mxu0
      %6511 = vmatprep.mubr.f32.mxu0 %v6347
      %6512 = vmatmul.mubr.f32.gmra.mxu0 %v6276
      %v6513 = vpop.f32.mrf.mxu0
      %v6514 = vadd.f32 %v6321, %v6513
      %v6515 = vpop.f32.mrf.mxu0
      %6516 = vmatprep.mubr.f32.mxu0 %v6349
      %6517 = vmatmul.mubr.f32.gmra.mxu0 %v6277
      %v6518 = vpop.f32.mrf.mxu0
      %v6519 = vadd.f32 %v6321, %v6518
      %v6520 = vpop.f32.mrf.mxu0
      %6521 = vmatprep.mubr.f32.mxu0 %v6351
      %6522 = vmatmul.mubr.f32.gmra.mxu0 %v6278
      %v6523 = vpop.f32.mrf.mxu0
      %v6524 = vadd.f32 %v6321, %v6523
      %v6525 = vpop.f32.mrf.mxu0
      %6526 = vmatprep.mubr.f32.mxu0 %v6353
      %6527 = vmatmul.mubr.f32.gmra.mxu0 %v6279
      %v6528 = vpop.f32.mrf.mxu0
      %v6529 = vadd.f32 %v6321, %v6528
      %v6530 = vpop.f32.mrf.mxu0
      %6531 = vmatprep.mubr.f32.mxu0 %v6355
      %6532 = vmatmul.mubr.f32.gmra.mxu0 %v6280
      %v6533 = vpop.f32.mrf.mxu0
      %v6534 = vadd.f32 %v6321, %v6533
      %v6535 = vpop.f32.mrf.mxu0
      %6536 = vmatprep.mubr.f32.mxu0 %v6357
      %6537 = vmatmul.mubr.f32.gmra.mxu0 %v6281
      %v6538 = vpop.f32.mrf.mxu0
      %v6539 = vadd.f32 %v6321, %v6538
      %v6540 = vpop.f32.mrf.mxu0
      %6541 = vmatprep.mubr.f32.mxu0 %v6359
      %6542 = vmatmul.mubr.f32.gmra.mxu0 %v6282
      %v6543 = vpop.f32.mrf.mxu0
      %v6544 = vadd.f32 %v6321, %v6543
      %v6545 = vpop.f32.mrf.mxu0
      %6546 = vmatprep.mubr.f32.mxu0 %v6361
      %6547 = vmatmul.mubr.f32.gmra.mxu0 %v6283
      %v6548 = vpop.f32.mrf.mxu0
      %v6549 = vadd.f32 %v6321, %v6548
      %v6550 = vpop.f32.mrf.mxu0
      %6551 = vmatprep.mubr.f32.mxu0 %v6363
      %6552 = vmatmul.mubr.f32.gmra.mxu0 %v6284
      %v6553 = vpop.f32.mrf.mxu0
      %v6554 = vadd.f32 %v6321, %v6553
      %v6555 = vpop.f32.mrf.mxu0
      %6556 = vmatprep.mubr.f32.mxu0 %v6365
      %6557 = vmatmul.mubr.f32.gmra.mxu0 %v6285
      %v6558 = vpop.f32.mrf.mxu0
      %v6559 = vadd.f32 %v6321, %v6558
      %v6560 = vpop.f32.mrf.mxu0
      %6561 = vmatprep.mubr.f32.mxu0 %v6367
      %6562 = vmatmul.mubr.f32.gmra.mxu0 %v6286
      %v6563 = vpop.f32.mrf.mxu0
      %v6564 = vadd.f32 %v6321, %v6563
      %v6565 = vpop.f32.mrf.mxu0
      %6566 = vmatprep.mubr.f32.mxu0 %v6369
      %6567 = vmatmul.mubr.f32.gmra.mxu0 %v6287
      %v6568 = vpop.f32.mrf.mxu0
      %v6569 = vadd.f32 %v6321, %v6568
      %v6570 = vpop.f32.mrf.mxu0
      %6571 = vmatprep.mubr.f32.mxu0 %v6371
      %6572 = vmatmul.mubr.f32.gmra.mxu0 %v6288
      %v6573 = vpop.f32.mrf.mxu0
      %v6574 = vadd.f32 %v6321, %v6573
      %v6575 = vpop.f32.mrf.mxu0
      %6576 = vmatprep.mubr.f32.mxu0 %v6373
      %6577 = vmatmul.mubr.f32.gmra.mxu0 %v6289
      %v6578 = vpop.f32.mrf.mxu0
      %v6579 = vadd.f32 %v6321, %v6578
      %v6580 = vpop.f32.mrf.mxu0
      %6581 = vmatprep.mubr.f32.mxu0 %v6375
      %6582 = vmatmul.mubr.f32.gmra.mxu0 %v6290
      %v6583 = vpop.f32.mrf.mxu0
      %v6584 = vadd.f32 %v6321, %v6583
      %v6585 = vpop.f32.mrf.mxu0
      %6586 = vmatprep.mubr.f32.mxu0 %v6377
      %6587 = vmatmul.mubr.f32.gmra.mxu0 %v6291
      %v6588 = vpop.f32.mrf.mxu0
      %v6589 = vadd.f32 %v6321, %v6588
      %v6590 = vpop.f32.mrf.mxu0
      %6591 = vmatprep.mubr.f32.mxu0 %v6379
      %6592 = vmatmul.mubr.f32.gmra.mxu0 %v6292
      %v6593 = vpop.f32.mrf.mxu0
      %v6594 = vadd.f32 %v6321, %v6593
      %v6595 = vpop.f32.mrf.mxu0
      %6596 = vmatprep.mubr.f32.mxu0 %v6381
      %6597 = vmatmul.mubr.f32.gmra.mxu0 %v6293
      %v6598 = vpop.f32.mrf.mxu0
      %v6599 = vadd.f32 %v6321, %v6598
      %v6600 = vpop.f32.mrf.mxu0
      %6601 = vmatprep.mubr.f32.mxu0 %v6383
      %6602 = vmatmul.mubr.f32.gmra.mxu0 %v6294
      %v6603 = vpop.f32.mrf.mxu0
      %v6604 = vadd.f32 %v6321, %v6603
      %v6605 = vpop.f32.mrf.mxu0
      %6606 = vmatprep.mubr.f32.mxu0 %v6385
      %6607 = vmatmul.mubr.f32.gmra.mxu0 %v6295
      %v6608 = vpop.f32.mrf.mxu0
      %v6609 = vadd.f32 %v6321, %v6608
      %v6610 = vpop.f32.mrf.mxu0
      %6611 = vdwg.mxu0
      %v6612 = vld [vmem:[%s313 + $0x1] sm:$0xff]
      %v6613 = vld [vmem:[%s313 + $0x9] sm:$0xff]
      %v6614 = vld [vmem:[%s313 + $0x19] sm:$0xff]
      %v6615 = vld [vmem:[%s313 + $0x21] sm:$0xff]
      %v6616 = vld [vmem:[%s313 + $0x31] sm:$0xff]
      %v6617 = vld [vmem:[%s313 + $0x39] sm:$0xff]
      %v6618 = vld [vmem:[%s313 + $0x49] sm:$0xff]
      %v6619 = vld [vmem:[%s313 + $0x51] sm:$0xff]
      %v6620 = vld [vmem:[%s313 + $0x61] sm:$0xff]
      %v6621 = vld [vmem:[%s313 + $0x69] sm:$0xff]
      %v6622 = vld [vmem:[%s313 + $0x79] sm:$0xff]
      %v6623 = vld [vmem:[%s313 + $0x81] sm:$0xff]
      %v6624 = vld [vmem:[%s313 + $0x91] sm:$0xff]
      %v6625 = vld [vmem:[%s313 + $0x99] sm:$0xff]
      %v6626 = vld [vmem:[%s313 + $0xa9] sm:$0xff]
      %v6627 = vld [vmem:[%s313 + $0xb1] sm:$0xff]
      %v6628 = vld [vmem:[%s313 + $0xc1] sm:$0xff]
      %v6629 = vld [vmem:[%s313 + $0xc9] sm:$0xff]
      %v6630 = vld [vmem:[%s313 + $0xd9] sm:$0xff]
      %v6631 = vld [vmem:[%s313 + $0xe1] sm:$0xff]
      %v6632 = vld [vmem:[%s313 + $0xf1] sm:$0xff]
      %v6633 = vld [vmem:[%s313 + $0xf9] sm:$0xff]
      %v6634 = vld [vmem:[%s313 + $0x109] sm:$0xff]
      %v6635 = vld [vmem:[%s313 + $0x111] sm:$0xff]
      %v6636 = vld [vmem:[%s313 + $0x121] sm:$0xff]
      %v6637 = vld [vmem:[%s313 + $0x129] sm:$0xff]
      %v6638 = vld [vmem:[%s313 + $0x139] sm:$0xff]
      %v6639 = vld [vmem:[%s313 + $0x141] sm:$0xff]
      %v6640 = vld [vmem:[%s313 + $0x151] sm:$0xff]
      %v6641 = vld [vmem:[%s313 + $0x159] sm:$0xff]
      %v6642 = vld [vmem:[%s313 + $0x169] sm:$0xff]
      %v6643 = vld [vmem:[%s313 + $0x171] sm:$0xff]
      %v6644 = vadd.f32 %v6612, %v6454
      %v6645 = vadd.f32 %v6613, %v6459
      %v6646 = vadd.f32 %v6614, %v6464
      %v6647 = vadd.f32 %v6615, %v6469
      %v6648 = vadd.f32 %v6616, %v6474
      %v6649 = vadd.f32 %v6617, %v6479
      %v6650 = vadd.f32 %v6618, %v6484
      %v6651 = vadd.f32 %v6619, %v6489
      %v6652 = vadd.f32 %v6620, %v6494
      %v6653 = vadd.f32 %v6621, %v6499
      %v6654 = vadd.f32 %v6622, %v6504
      %v6655 = vadd.f32 %v6623, %v6509
      %v6656 = vadd.f32 %v6624, %v6514
      %v6657 = vadd.f32 %v6625, %v6519
      %v6658 = vadd.f32 %v6626, %v6524
      %v6659 = vadd.f32 %v6627, %v6529
      %v6660 = vadd.f32 %v6628, %v6534
      %v6661 = vadd.f32 %v6629, %v6539
      %v6662 = vadd.f32 %v6630, %v6544
      %v6663 = vadd.f32 %v6631, %v6549
      %v6664 = vadd.f32 %v6632, %v6554
      %v6665 = vadd.f32 %v6633, %v6559
      %v6666 = vadd.f32 %v6634, %v6564
      %v6667 = vadd.f32 %v6635, %v6569
      %v6668 = vadd.f32 %v6636, %v6574
      %v6669 = vadd.f32 %v6637, %v6579
      %v6670 = vadd.f32 %v6638, %v6584
      %v6671 = vadd.f32 %v6639, %v6589
      %v6672 = vadd.f32 %v6640, %v6594
      %v6673 = vadd.f32 %v6641, %v6599
      %v6674 = vadd.f32 %v6642, %v6604
      %v6675 = vadd.f32 %v6643, %v6609
      %6676 = vst.msk [vmem:[%s313 + $0x1] sm:$0xff] %vm171, %v6644
      %6677 = vst.msk [vmem:[%s313 + $0x9] sm:$0xff] %vm171, %v6645
      %6678 = vst.msk [vmem:[%s313 + $0x19] sm:$0xff] %vm171, %v6646
      %6679 = vst.msk [vmem:[%s313 + $0x21] sm:$0xff] %vm171, %v6647
      %6680 = vst.msk [vmem:[%s313 + $0x31] sm:$0xff] %vm171, %v6648
      %6681 = vst.msk [vmem:[%s313 + $0x39] sm:$0xff] %vm171, %v6649
      %6682 = vst.msk [vmem:[%s313 + $0x49] sm:$0xff] %vm171, %v6650
      %6683 = vst.msk [vmem:[%s313 + $0x51] sm:$0xff] %vm171, %v6651
      %6684 = vst.msk [vmem:[%s313 + $0x61] sm:$0xff] %vm171, %v6652
      %6685 = vst.msk [vmem:[%s313 + $0x69] sm:$0xff] %vm171, %v6653
      %6686 = vst.msk [vmem:[%s313 + $0x79] sm:$0xff] %vm171, %v6654
      %6687 = vst.msk [vmem:[%s313 + $0x81] sm:$0xff] %vm171, %v6655
      %6688 = vst.msk [vmem:[%s313 + $0x91] sm:$0xff] %vm171, %v6656
      %6689 = vst.msk [vmem:[%s313 + $0x99] sm:$0xff] %vm171, %v6657
      %6690 = vst.msk [vmem:[%s313 + $0xa9] sm:$0xff] %vm171, %v6658
      %6691 = vst.msk [vmem:[%s313 + $0xb1] sm:$0xff] %vm171, %v6659
      %6692 = vst.msk [vmem:[%s313 + $0xc1] sm:$0xff] %vm171, %v6660
      %6693 = vst.msk [vmem:[%s313 + $0xc9] sm:$0xff] %vm171, %v6661
      %6694 = vst.msk [vmem:[%s313 + $0xd9] sm:$0xff] %vm171, %v6662
      %6695 = vst.msk [vmem:[%s313 + $0xe1] sm:$0xff] %vm171, %v6663
      %6696 = vst.msk [vmem:[%s313 + $0xf1] sm:$0xff] %vm171, %v6664
      %6697 = vst.msk [vmem:[%s313 + $0xf9] sm:$0xff] %vm171, %v6665
      %6698 = vst.msk [vmem:[%s313 + $0x109] sm:$0xff] %vm171, %v6666
      %6699 = vst.msk [vmem:[%s313 + $0x111] sm:$0xff] %vm171, %v6667
      %6700 = vst.msk [vmem:[%s313 + $0x121] sm:$0xff] %vm171, %v6668
      %6701 = vst.msk [vmem:[%s313 + $0x129] sm:$0xff] %vm171, %v6669
      %6702 = vst.msk [vmem:[%s313 + $0x139] sm:$0xff] %vm171, %v6670
      %6703 = vst.msk [vmem:[%s313 + $0x141] sm:$0xff] %vm171, %v6671
      %6704 = vst.msk [vmem:[%s313 + $0x151] sm:$0xff] %vm171, %v6672
      %6705 = vst.msk [vmem:[%s313 + $0x159] sm:$0xff] %vm171, %v6673
      %6706 = vst.msk [vmem:[%s313 + $0x169] sm:$0xff] %vm171, %v6674
      %6707 = vst.msk [vmem:[%s313 + $0x171] sm:$0xff] %vm171, %v6675
      %v6708 = vld [vmem:[%s313 + $0x1] sm:$0xff]
      %v6709 = vld [vmem:[%s313 + $0x9] sm:$0xff]
      %v6710 = vld [vmem:[%s313 + $0x19] sm:$0xff]
      %v6711 = vld [vmem:[%s313 + $0x21] sm:$0xff]
      %v6712 = vld [vmem:[%s313 + $0x31] sm:$0xff]
      %v6713 = vld [vmem:[%s313 + $0x39] sm:$0xff]
      %v6714 = vld [vmem:[%s313 + $0x49] sm:$0xff]
      %v6715 = vld [vmem:[%s313 + $0x51] sm:$0xff]
      %v6716 = vld [vmem:[%s313 + $0x61] sm:$0xff]
      %v6717 = vld [vmem:[%s313 + $0x69] sm:$0xff]
      %v6718 = vld [vmem:[%s313 + $0x79] sm:$0xff]
      %v6719 = vld [vmem:[%s313 + $0x81] sm:$0xff]
      %v6720 = vld [vmem:[%s313 + $0x91] sm:$0xff]
      %v6721 = vld [vmem:[%s313 + $0x99] sm:$0xff]
      %v6722 = vld [vmem:[%s313 + $0xa9] sm:$0xff]
      %v6723 = vld [vmem:[%s313 + $0xb1] sm:$0xff]
      %v6724 = vld [vmem:[%s313 + $0xc1] sm:$0xff]
      %v6725 = vld [vmem:[%s313 + $0xc9] sm:$0xff]
      %v6726 = vld [vmem:[%s313 + $0xd9] sm:$0xff]
      %v6727 = vld [vmem:[%s313 + $0xe1] sm:$0xff]
      %v6728 = vld [vmem:[%s313 + $0xf1] sm:$0xff]
      %v6729 = vld [vmem:[%s313 + $0xf9] sm:$0xff]
      %v6730 = vld [vmem:[%s313 + $0x109] sm:$0xff]
      %v6731 = vld [vmem:[%s313 + $0x111] sm:$0xff]
      %v6732 = vld [vmem:[%s313 + $0x121] sm:$0xff]
      %v6733 = vld [vmem:[%s313 + $0x129] sm:$0xff]
      %v6734 = vld [vmem:[%s313 + $0x139] sm:$0xff]
      %v6735 = vld [vmem:[%s313 + $0x141] sm:$0xff]
      %v6736 = vld [vmem:[%s313 + $0x151] sm:$0xff]
      %v6737 = vld [vmem:[%s313 + $0x159] sm:$0xff]
      %v6738 = vld [vmem:[%s313 + $0x169] sm:$0xff]
      %v6739 = vld [vmem:[%s313 + $0x171] sm:$0xff]
      %6740 = vst.msk [vmem:[%s170] sm:$0xff] %vm171, %v6708
      %6741 = vst.msk [vmem:[%s170 + $0x8] sm:$0xff] %vm171, %v6709
      %6742 = vst.msk [vmem:[%s170 + $0x10] sm:$0xff] %vm171, %v6710
      %6743 = vst.msk [vmem:[%s170 + $0x18] sm:$0xff] %vm171, %v6711
      %6744 = vst.msk [vmem:[%s170 + $0x20] sm:$0xff] %vm171, %v6712
      %6745 = vst.msk [vmem:[%s170 + $0x28] sm:$0xff] %vm171, %v6713
      %6746 = vst.msk [vmem:[%s170 + $0x30] sm:$0xff] %vm171, %v6714
      %6747 = vst.msk [vmem:[%s170 + $0x38] sm:$0xff] %vm171, %v6715
      %6748 = vst.msk [vmem:[%s170 + $0x40] sm:$0xff] %vm171, %v6716
      %6749 = vst.msk [vmem:[%s170 + $0x48] sm:$0xff] %vm171, %v6717
      %6750 = vst.msk [vmem:[%s170 + $0x50] sm:$0xff] %vm171, %v6718
      %6751 = vst.msk [vmem:[%s170 + $0x58] sm:$0xff] %vm171, %v6719
      %6752 = vst.msk [vmem:[%s170 + $0x60] sm:$0xff] %vm171, %v6720
      %6753 = vst.msk [vmem:[%s170 + $0x68] sm:$0xff] %vm171, %v6721
      %6754 = vst.msk [vmem:[%s170 + $0x70] sm:$0xff] %vm171, %v6722
      %6755 = vst.msk [vmem:[%s170 + $0x78] sm:$0xff] %vm171, %v6723
      %6756 = vst.msk [vmem:[%s170 + $0x80] sm:$0xff] %vm171, %v6724
      %6757 = vst.msk [vmem:[%s170 + $0x88] sm:$0xff] %vm171, %v6725
      %6758 = vst.msk [vmem:[%s170 + $0x90] sm:$0xff] %vm171, %v6726
      %6759 = vst.msk [vmem:[%s170 + $0x98] sm:$0xff] %vm171, %v6727
      %6760 = vst.msk [vmem:[%s170 + $0xa0] sm:$0xff] %vm171, %v6728
      %6761 = vst.msk [vmem:[%s170 + $0xa8] sm:$0xff] %vm171, %v6729
      %6762 = vst.msk [vmem:[%s170 + $0xb0] sm:$0xff] %vm171, %v6730
      %6763 = vst.msk [vmem:[%s170 + $0xb8] sm:$0xff] %vm171, %v6731
      %6764 = vst.msk [vmem:[%s170 + $0xc0] sm:$0xff] %vm171, %v6732
      %6765 = vst.msk [vmem:[%s170 + $0xc8] sm:$0xff] %vm171, %v6733
      %6766 = vst.msk [vmem:[%s170 + $0xd0] sm:$0xff] %vm171, %v6734
      %6767 = vst.msk [vmem:[%s170 + $0xd8] sm:$0xff] %vm171, %v6735
      %6768 = vst.msk [vmem:[%s170 + $0xe0] sm:$0xff] %vm171, %v6736
      %6769 = vst.msk [vmem:[%s170 + $0xe8] sm:$0xff] %vm171, %v6737
      %6770 = vst.msk [vmem:[%s170 + $0xf0] sm:$0xff] %vm171, %v6738
      %6771 = vst.msk [vmem:[%s170 + $0xf8] sm:$0xff] %vm171, %v6739
      %p6772 = scmp.lt.s32.totalorder %s14, 1
      %s6773 = scalar_select %p6772, %s14, 1
      %s6774 = smul.addr %s6773, 32
      %s6775 = smul.addr %s6774, 8
      %s6776 = scalar_lea.vmem %s3, %s6775
      // Predicated region
      $region33: #{conv_residual_blocks.1} parent=31 // pred_check
        %p6777 = pneg %p100
      $region34: #{conv_residual_blocks.1} parent=31 // pred_check_branch
        %6779 = sbr.rel (%p6777) target = $region36
      $region35: #{conv_residual_blocks.1} parent=31 // pred_region
        _
      $region36: #{conv_residual_blocks.1} parent=31 // pred_fallthru
        _
    $region32: #{conv_residual_blocks.1} parent=5 // pred_fallthru
      _
    %p6780 = scmp.le.s32.totalorder 2, %s9
    // Predicated region
    $region37: #{conv_residual_blocks.1} parent=5 // pred_check
      %p6781 = pneg %p6780
    $region38: #{conv_residual_blocks.1} parent=5 // pred_check_branch
      %6783 = sbr.rel (%p6781) target = $region40
    $region39: #{conv_residual_blocks.1} parent=5 // pred_region
      %s6784 = ssub.s32 %s9, 2
      // Predicated region
      $region41: #{conv_residual_blocks.1} parent=39 // pred_check
        %p6785 = pneg %p106
      $region42: #{conv_residual_blocks.1} parent=39 // pred_check_branch
        %6787 = sbr.rel (%p6785) target = $region44
      $region43: #{conv_residual_blocks.1} parent=39 // pred_region
        %p6788 = scmp.lt.s32.totalorder %s15, 1
        %s6789 = scalar_select %p6788, %s15, 1
        %s6790 = smul.addr %s6789, 32
        %s6791 = smul.addr %s6790, 8
        %s6792 = scalar_lea.vmem %s3, %s6791
      $region44: #{conv_residual_blocks.1} parent=39 // pred_fallthru
        _
    $region40: #{conv_residual_blocks.1} parent=5 // pred_fallthru
      _
  $region6: #{conv_residual_blocks.1} parent=0 // loop_footer
    %s13 = sadd.s32 1, %s9
  $region7: #{conv_residual_blocks.1} parent=0 // loop_footer_branch
    %8 = sbr.rel target = $region3
  $region8: #{conv_residual_blocks.1} parent=0 // loop_exit
    _

</llo_original>
